<compile_context>
chip_gen: v5e
topology: v5e:2x2
jax: 0.10.0
libtpu: 0.0.40
codegen_flags: <defaults>
</compile_context>

<pallas_src>
import jax
import jax.numpy as jnp
from jax.experimental import pallas as pl
from jax.experimental.pallas import tpu as pltpu

C_IN = 352      # channels produced by the last MBConv stage of efficientnet_b2
C_HEAD = 1408   # head-conv output channels == classifier in_features
N_CLASSES = 4   # ModeL(4)
N_PAD = 128     # lane-dense padded classifier width


def head_kernel(x_ref, w1_ref, b1_ref, w2_ref, b2_ref, o_ref, acc_ref):
    """Fused head-conv + SiLU + streaming global-avg-pool + Linear + LogSoftmax.

    Grid: (B // B_TILE, hw_tiles). Per step:
      x_ref : (B_T, HW_T, C_IN)  bf16 backbone-feature tile of B_T images
      w1_ref: (C_IN, C_HEAD)     bf16 head 1x1-conv weight (BN folded)
      b1_ref: (1, C_HEAD)        f32  head 1x1-conv bias   (BN folded)
      w2_ref: (C_HEAD, N_PAD)    bf16 classifier weight, pre-scaled by 1/HW,
                                 zero-padded to 128 lanes
      b2_ref: (1, N_PAD)         f32  classifier bias, zero-padded
      o_ref : (1, B_T, N_PAD)    f32  log-probabilities (padded lanes junk)
      acc_ref: (B_T, A, C_HEAD)  f32  VMEM scratch: running SiLU channel sums;
                                 A == 8 sublane-partial rows when HW_T % 8 == 0
                                 (VPU adds in the hot loop), else 1.
    """
    bt, hwt, cin = x_ref.shape
    h = pl.program_id(1)
    n_h = pl.num_programs(1)

    @pl.when(h == 0)
    def _init():
        acc_ref[...] = jnp.zeros_like(acc_ref)

    w1 = w1_ref[...]
    b1 = b1_ref[...]                                  # (1, C_HEAD) f32

    def conv_silu(x2d):
        # 1x1 conv over channels == matmul on the MXU (bf16 in, f32 accumulate).
        y = jnp.dot(x2d, w1, preferred_element_type=jnp.float32) + b1
        # SiLU: y * sigmoid(y); sigmoid(y) = 0.5*(1 + tanh(0.5*y)) -> one EUP
        # push per vreg (vs exp + reciprocal) and no approximate reciprocal.
        return y * (0.5 * jnp.tanh(0.5 * y) + 0.5)

    x = x_ref[...]                                    # (bt, hwt, C_IN) bf16

    if hwt % 8 == 0:
        # Flatten all B_T images into one big-M MXU matmul (layout-trivial
        # reshape since hwt % 8 == 0); keep the pool as 8-sublane-group VPU
        # adds, deferring the single 8->1 XLU reduce to the finalize branch.
        y = conv_silu(x.reshape(bt * hwt, cin))       # (bt*hwt, C_HEAD) f32
        for b in range(bt):                           # static unroll, bt <= 8
            yb = y[b * hwt:(b + 1) * hwt]             # aligned static slice
            acc_ref[b] += jnp.sum(yb.reshape(hwt // 8, 8, C_HEAD), axis=0)
    else:
        # Ragged spatial extent (e.g. HW = 81 for real EfficientNet-B2 @260px):
        # per-image matmul + row reduce. TODO(synk): exercised only when HW is
        # not a multiple of 8 (not hit by the small test shapes below).
        for b in range(bt):
            acc_ref[b] += jnp.sum(conv_silu(x[b]), axis=0, keepdims=True)

    @pl.when(h == n_h - 1)
    def _finalize():
        # Single cross-sublane reduce per image block; 1/HW is folded into w2,
        # so the classifier acts on the channel SUMs.
        pooled = jnp.sum(acc_ref[...], axis=1)        # (bt, C_HEAD) f32
        logits = jnp.dot(pooled.astype(jnp.bfloat16), w2_ref[...],
                         preferred_element_type=jnp.float32)
        logits = logits + b2_ref[...]                 # (bt, N_PAD)

        # Mask padded lanes so they vanish under softmax.
        lane = jax.lax.broadcasted_iota(jnp.int32, logits.shape, 1)
        logits = jnp.where(lane < N_CLASSES, logits, jnp.float32(-1e30))

        # Numerically stable LogSoftmax(dim=1), batched over the image block.
        m = jnp.max(logits, axis=1, keepdims=True)
        z = logits - m
        lse = jnp.log(jnp.sum(jnp.exp(z), axis=1, keepdims=True))
        o_ref[0] = (z - lse).astype(o_ref.dtype)


def _pick_b_tile(batch):
    """Pack up to 8 images per grid step (fills the MXU M dim, amortizes the
    ~0.35us per-step overhead); prefer >= 2 blocks on the parallel batch axis
    when the batch allows it so v7x's two TensorCores both get work."""
    for bt in (8, 4, 2):
        if batch % bt == 0 and batch // bt >= 2:
            return bt
    for bt in (8, 4, 2):
        if batch % bt == 0:
            return bt
    return 1


def _pick_hw_tile(hw, b_tile):
    """Largest multiple-of-8 divisor of hw with b_tile*tile <= 1024 rows
    (bounds the (M, 1408) f32 intermediate to ~5.8 MB), else the full extent
    (a full-extent block is always legal, e.g. HW = 81 for real B2)."""
    if hw % 8 != 0:
        return hw
    cap = max(8, 1024 // b_tile)
    for t in range(min(hw, cap), 7, -8):
        if hw % t == 0:
            return t
    return hw


def model_head(x_feat_nhwc, w1, b1, w2, b2, *, b_tile=None, hw_tile=None):
    """x_feat_nhwc: (B, H, W, C_IN) float32 backbone features -> (B, N_CLASSES)
    log-probabilities (LogSoftmax over classes)."""
    B, H, W, Cin = x_feat_nhwc.shape
    assert Cin == C_IN
    HW = H * W
    if b_tile is None:
        b_tile = _pick_b_tile(B)
    assert B % b_tile == 0
    n_b = B // b_tile
    if hw_tile is None:
        hw_tile = _pick_hw_tile(HW, b_tile)
    assert HW % hw_tile == 0
    n_h = HW // hw_tile
    acc_rows = 8 if hw_tile % 8 == 0 else 1

    # Cast activations/weights to bf16 in the wrapper (halves HBM traffic too).
    x = x_feat_nhwc.reshape(B, HW, Cin).astype(jnp.bfloat16)
    w1_b = w1.astype(jnp.bfloat16)
    b1_f = b1.reshape(1, C_HEAD).astype(jnp.float32)

    # Fold the 1/HW pooling scale into the classifier weight and pad the tiny
    # n_classes output to a lane-dense 128 columns (zeros); bias padded too.
    w2_p = (jnp.zeros((C_HEAD, N_PAD), jnp.float32)
            .at[:, :N_CLASSES].set(w2 / float(HW))).astype(jnp.bfloat16)
    b2_p = (jnp.zeros((1, N_PAD), jnp.float32)
            .at[:, :N_CLASSES].set(b2.reshape(1, -1)))

    cost = pl.CostEstimate(
        flops=int(2 * B * HW * C_IN * C_HEAD + 2 * B * C_HEAD * N_PAD),
        transcendentals=int(B * HW * C_HEAD),
        bytes_accessed=int(x.size * 2 + w1_b.size * 2 + b1_f.size * 4
                           + w2_p.size * 2 + b2_p.size * 4 + B * N_PAD * 4),
    )

    out = pl.pallas_call(
        head_kernel,
        out_shape=jax.ShapeDtypeStruct((n_b, b_tile, N_PAD), jnp.float32),
        grid_spec=pltpu.PrefetchScalarGridSpec(
            num_scalar_prefetch=0,
            grid=(n_b, n_h),
            in_specs=[
                pl.BlockSpec((b_tile, hw_tile, C_IN), lambda b, h: (b, h, 0)),
                pl.BlockSpec((C_IN, C_HEAD), lambda b, h: (0, 0)),
                pl.BlockSpec((1, C_HEAD), lambda b, h: (0, 0)),
                pl.BlockSpec((C_HEAD, N_PAD), lambda b, h: (0, 0)),
                pl.BlockSpec((1, N_PAD), lambda b, h: (0, 0)),
            ],
            out_specs=pl.BlockSpec((1, b_tile, N_PAD), lambda b, h: (b, 0, 0)),
            scratch_shapes=[pltpu.VMEM((b_tile, acc_rows, C_HEAD), jnp.float32)],
        ),
        compiler_params=pltpu.CompilerParams(
            dimension_semantics=("parallel", "arbitrary"),
            vmem_limit_bytes=32 * 1024 * 1024,
        ),
        cost_estimate=cost,
    )(x, w1_b, b1_f, w2_p, b2_p)

    return out.reshape(B, N_PAD)[:, :N_CLASSES]


def reference_head(x_feat_nhwc, w1, b1, w2, b2):
    """Pure-JAX f32 reference for correctness checking."""
    B, H, W, Cin = x_feat_nhwc.shape
    x = x_feat_nhwc.reshape(B * H * W, Cin)
    y = x @ w1 + b1
    y = y * jax.nn.sigmoid(y)
    pooled = jnp.mean(y.reshape(B, H * W, -1), axis=1)
    logits = pooled @ w2 + b2
    return jax.nn.log_softmax(logits, axis=1)


if __name__ == "__main__":
    key = jax.random.PRNGKey(0)
    k_x, k_w1, k_b1, k_w2, k_b2 = jax.random.split(key, 5)

    # Small synthetic backbone-feature input (stand-in for efficientnet_b2
    # features of an image batch).
    B, H, W = 2, 4, 4
    x_feat = jax.random.normal(k_x, (B, H, W, C_IN), dtype=jnp.float32)

    # Deterministic synthetic parameters (not a checkpoint).
    w1 = jax.random.normal(k_w1, (C_IN, C_HEAD), dtype=jnp.float32) * 0.05
    b1 = jax.random.normal(k_b1, (1, C_HEAD), dtype=jnp.float32) * 0.01
    w2 = jax.random.normal(k_w2, (C_HEAD, N_CLASSES), dtype=jnp.float32) * 0.05
    b2 = jax.random.normal(k_b2, (1, N_CLASSES), dtype=jnp.float32) * 0.01

    ref = jax.block_until_ready(reference_head(x_feat, w1, b1, w2, b2))

    # Exercise: auto config (multi-image block, single hw step), multi-image
    # block with streamed hw accumulation, and the single-image path.
    outs = [
        jax.block_until_ready(model_head(x_feat, w1, b1, w2, b2)),
        jax.block_until_ready(model_head(x_feat, w1, b1, w2, b2,
                                         b_tile=2, hw_tile=8)),
        jax.block_until_ready(model_head(x_feat, w1, b1, w2, b2,
                                         b_tile=1, hw_tile=8)),
    ]

    for out in outs:
        assert out.shape == (B, N_CLASSES)
        # bf16 MXU inputs -> loosened tolerance vs the f32 reference.
        assert jnp.allclose(out, ref, atol=5e-2, rtol=5e-2), "mismatch vs reference"
        # log-softmax rows must exponentiate-sum to ~1
        assert jnp.allclose(jnp.sum(jnp.exp(out), axis=1), 1.0, atol=1e-3)

    print("KERNEL_OK")
</pallas_src>

<mosaic_0001>
module attributes {stable_mosaic.version = 11 : i64} {
  func.func @head_kernel(%arg0: i32, %arg1: i32, %arg2: memref<2x16x352xbf16, #tpu.memory_space<vmem>>, %arg3: memref<352x1408xbf16, #tpu.memory_space<vmem>>, %arg4: memref<1x1408xf32, #tpu.memory_space<vmem>>, %arg5: memref<1408x128xbf16, #tpu.memory_space<vmem>>, %arg6: memref<1x128xf32, #tpu.memory_space<vmem>>, %arg7: memref<1x2x128xf32, #tpu.memory_space<vmem>>, %arg8: memref<2x8x1408xf32, #tpu.memory_space<vmem>>) attributes {dimension_semantics = [#tpu.dimension_semantics<parallel>, #tpu.dimension_semantics<arbitrary>], iteration_bounds = array<i64: 1, 1>, scalar_prefetch = 0 : i64, scratch_operands = 1 : i64, tpu.core_type = #tpu.core_type<tc>, window_params = [{transform_indices = @transform_0, window_bounds = array<i64: 2, 16, 352>}, {pipeline_mode = #tpu.pipeline_mode<synchronous>, transform_indices = @transform_1, window_bounds = array<i64: 352, 1408>}, {pipeline_mode = #tpu.pipeline_mode<synchronous>, transform_indices = @transform_2, window_bounds = array<i64: 1, 1408>}, {pipeline_mode = #tpu.pipeline_mode<synchronous>, transform_indices = @transform_3, window_bounds = array<i64: 1408, 128>}, {pipeline_mode = #tpu.pipeline_mode<synchronous>, transform_indices = @transform_4, window_bounds = array<i64: 1, 128>}, {transform_indices = @transform_5, window_bounds = array<i64: 1, 2, 128>}]} {
    %c0_i32 = arith.constant 0 : i32
    %0 = arith.cmpi eq, %arg1, %c0_i32 : i32
    %1 = arith.extui %0 : i1 to i32
    %c0_i32_0 = arith.constant 0 : i32
    %2 = arith.cmpi ne, %1, %c0_i32_0 : i32
    scf.if %2 {
      %cst_25 = arith.constant 0.000000e+00 : f32
      %39 = vector.broadcast %cst_25 : f32 to vector<2x8x1408xf32>
      %c0_26 = arith.constant 0 : index
      %c0_27 = arith.constant 0 : index
      %c0_28 = arith.constant 0 : index
      %40 = vector.load %arg8[%c0_26, %c0_27, %c0_28] : memref<2x8x1408xf32, #tpu.memory_space<vmem>>, vector<2x8x1408xf32>
      tpu.vector_store %arg8[%c0_26, %c0_27, %c0_28], %39 {strides = array<i32>} : memref<2x8x1408xf32, #tpu.memory_space<vmem>>, vector<2x8x1408xf32>,
    } else {
    }
    %c0 = arith.constant 0 : index
    %c0_1 = arith.constant 0 : index
    %3 = vector.load %arg3[%c0, %c0_1] : memref<352x1408xbf16, #tpu.memory_space<vmem>>, vector<352x1408xbf16>
    %c0_2 = arith.constant 0 : index
    %c0_3 = arith.constant 0 : index
    %4 = vector.load %arg4[%c0_2, %c0_3] : memref<1x1408xf32, #tpu.memory_space<vmem>>, vector<1x1408xf32>
    %c0_4 = arith.constant 0 : index
    %c0_5 = arith.constant 0 : index
    %c0_6 = arith.constant 0 : index
    %5 = vector.load %arg2[%c0_4, %c0_5, %c0_6] : memref<2x16x352xbf16, #tpu.memory_space<vmem>>, vector<2x16x352xbf16>
    %6 = vector.shape_cast %5 : vector<2x16x352xbf16> to vector<32x352xbf16>
    %cst = arith.constant dense<0.000000e+00> : vector<32x1408xf32>
    %7 = tpu.matmul %6, %3, %cst {dimension_numbers = #tpu.dot_dimension_numbers<[1], [0], [0], [1], [0, 0, 1, 1], [], []>} : vector<32x352xbf16>, vector<352x1408xbf16>, vector<32x1408xf32> -> vector<32x1408xf32>
    %8 = vector.broadcast %4 : vector<1x1408xf32> to vector<32x1408xf32>
    %9 = arith.addf %7, %8 : vector<32x1408xf32>
    %cst_7 = arith.constant 5.000000e-01 : f32
    %10 = vector.broadcast %cst_7 : f32 to vector<32x1408xf32>
    %11 = arith.mulf %10, %9 : vector<32x1408xf32>
    %12 = math.tanh %11 : vector<32x1408xf32>
    %cst_8 = arith.constant 5.000000e-01 : f32
    %13 = vector.broadcast %cst_8 : f32 to vector<32x1408xf32>
    %14 = arith.mulf %13, %12 : vector<32x1408xf32>
    %cst_9 = arith.constant 5.000000e-01 : f32
    %15 = vector.broadcast %cst_9 : f32 to vector<32x1408xf32>
    %16 = arith.addf %14, %15 : vector<32x1408xf32>
    %17 = arith.mulf %9, %16 : vector<32x1408xf32>
    %18 = vector.extract_strided_slice %17 {offsets = [0, 0], sizes = [16, 1408], strides = [1, 1]} : vector<32x1408xf32> to vector<16x1408xf32>
    %c0_10 = arith.constant 0 : index
    %c0_11 = arith.constant 0 : index
    %c0_12 = arith.constant 0 : index
    %19 = vector.load %arg8[%c0_10, %c0_11, %c0_12] : memref<2x8x1408xf32, #tpu.memory_space<vmem>>, vector<1x8x1408xf32>
    %20 = vector.shape_cast %19 : vector<1x8x1408xf32> to vector<8x1408xf32>
    %21 = vector.shape_cast %18 : vector<16x1408xf32> to vector<2x8x1408xf32>
    %cst_13 = arith.constant dense<0.000000e+00> : vector<8x1408xf32>
    %22 = vector.multi_reduction <add>, %21, %cst_13 [0] : vector<2x8x1408xf32> to vector<8x1408xf32>
    %23 = arith.addf %20, %22 : vector<8x1408xf32>
    %c0_14 = arith.constant 0 : index
    %c0_15 = arith.constant 0 : index
    %c0_16 = arith.constant 0 : index
    %24 = vector.load %arg8[%c0_14, %c0_15, %c0_16] : memref<2x8x1408xf32, #tpu.memory_space<vmem>>, vector<1x8x1408xf32>
    %25 = vector.shape_cast %24 : vector<1x8x1408xf32> to vector<8x1408xf32>
    %26 = vector.shape_cast %23 : vector<8x1408xf32> to vector<1x8x1408xf32>
    tpu.vector_store %arg8[%c0_14, %c0_15, %c0_16], %26 {strides = array<i32>} : memref<2x8x1408xf32, #tpu.memory_space<vmem>>, vector<1x8x1408xf32>,
    %27 = vector.extract_strided_slice %17 {offsets = [16, 0], sizes = [16, 1408], strides = [1, 1]} : vector<32x1408xf32> to vector<16x1408xf32>
    %c1 = arith.constant 1 : index
    %c0_17 = arith.constant 0 : index
    %c0_18 = arith.constant 0 : index
    %28 = vector.load %arg8[%c1, %c0_17, %c0_18] : memref<2x8x1408xf32, #tpu.memory_space<vmem>>, vector<1x8x1408xf32>
    %29 = vector.shape_cast %28 : vector<1x8x1408xf32> to vector<8x1408xf32>
    %30 = vector.shape_cast %27 : vector<16x1408xf32> to vector<2x8x1408xf32>
    %cst_19 = arith.constant dense<0.000000e+00> : vector<8x1408xf32>
    %31 = vector.multi_reduction <add>, %30, %cst_19 [0] : vector<2x8x1408xf32> to vector<8x1408xf32>
    %32 = arith.addf %29, %31 : vector<8x1408xf32>
    %c1_20 = arith.constant 1 : index
    %c0_21 = arith.constant 0 : index
    %c0_22 = arith.constant 0 : index
    %33 = vector.load %arg8[%c1_20, %c0_21, %c0_22] : memref<2x8x1408xf32, #tpu.memory_space<vmem>>, vector<1x8x1408xf32>
    %34 = vector.shape_cast %33 : vector<1x8x1408xf32> to vector<8x1408xf32>
    %35 = vector.shape_cast %32 : vector<8x1408xf32> to vector<1x8x1408xf32>
    tpu.vector_store %arg8[%c1_20, %c0_21, %c0_22], %35 {strides = array<i32>} : memref<2x8x1408xf32, #tpu.memory_space<vmem>>, vector<1x8x1408xf32>,
    %c0_i32_23 = arith.constant 0 : i32
    %36 = arith.cmpi eq, %arg1, %c0_i32_23 : i32
    %37 = arith.extui %36 : i1 to i32
    %c0_i32_24 = arith.constant 0 : i32
    %38 = arith.cmpi ne, %37, %c0_i32_24 : i32
    scf.if %38 {
      %c0_25 = arith.constant 0 : index
      %c0_26 = arith.constant 0 : index
      %c0_27 = arith.constant 0 : index
      %39 = vector.load %arg8[%c0_25, %c0_26, %c0_27] : memref<2x8x1408xf32, #tpu.memory_space<vmem>>, vector<2x8x1408xf32>
      %cst_28 = arith.constant dense<0.000000e+00> : vector<2x1408xf32>
      %40 = vector.multi_reduction <add>, %39, %cst_28 [1] : vector<2x8x1408xf32> to vector<2x1408xf32>
      %41 = arith.truncf %40 : vector<2x1408xf32> to vector<2x1408xbf16>
      %c0_29 = arith.constant 0 : index
      %c0_30 = arith.constant 0 : index
      %42 = vector.load %arg5[%c0_29, %c0_30] : memref<1408x128xbf16, #tpu.memory_space<vmem>>, vector<1408x128xbf16>
      %cst_31 = arith.constant dense<0.000000e+00> : vector<2x128xf32>
      %43 = tpu.matmul %41, %42, %cst_31 {dimension_numbers = #tpu.dot_dimension_numbers<[1], [0], [0], [1], [0, 0, 1, 1], [], []>} : vector<2x1408xbf16>, vector<1408x128xbf16>, vector<2x128xf32> -> vector<2x128xf32>
      %c0_32 = arith.constant 0 : index
      %c0_33 = arith.constant 0 : index
      %44 = vector.load %arg6[%c0_32, %c0_33] : memref<1x128xf32, #tpu.memory_space<vmem>>, vector<1x128xf32>
      %45 = vector.broadcast %44 : vector<1x128xf32> to vector<2x128xf32>
      %46 = arith.addf %43, %45 : vector<2x128xf32>
      %47 = tpu.iota {dimensions = array<i32: 1>} : vector<2x128xi32>
      %c4_i32 = arith.constant 4 : i32
      %48 = vector.broadcast %c4_i32 : i32 to vector<2x128xi32>
      %49 = arith.cmpi slt, %47, %48 : vector<2x128xi32>
      %cst_34 = arith.constant -1.000000e+30 : f32
      %50 = vector.broadcast %cst_34 : f32 to vector<2x128xf32>
      %51 = arith.select %49, %46, %50 : vector<2x128xi1>, vector<2x128xf32>
      %cst_35 = arith.constant dense<0xFF800000> : vector<2xf32>
      %52 = vector.multi_reduction <maximumf>, %51, %cst_35 [1] : vector<2x128xf32> to vector<2xf32>
      %53 = vector.shape_cast %52 : vector<2xf32> to vector<2x1xf32>
      %54 = vector.broadcast %53 : vector<2x1xf32> to vector<2x128xf32>
      %55 = arith.subf %51, %54 : vector<2x128xf32>
      %56 = math.exp %55 : vector<2x128xf32>
      %cst_36 = arith.constant dense<0.000000e+00> : vector<2xf32>
      %57 = vector.multi_reduction <add>, %56, %cst_36 [1] : vector<2x128xf32> to vector<2xf32>
      %58 = vector.shape_cast %57 : vector<2xf32> to vector<2x1xf32>
      %59 = math.log %58 : vector<2x1xf32>
      %60 = vector.broadcast %59 : vector<2x1xf32> to vector<2x128xf32>
      %61 = arith.subf %55, %60 : vector<2x128xf32>
      %c0_37 = arith.constant 0 : index
      %c0_38 = arith.constant 0 : index
      %c0_39 = arith.constant 0 : index
      %62 = vector.load %arg7[%c0_37, %c0_38, %c0_39] : memref<1x2x128xf32, #tpu.memory_space<vmem>>, vector<1x2x128xf32>
      %63 = vector.shape_cast %62 : vector<1x2x128xf32> to vector<2x128xf32>
      %64 = vector.shape_cast %61 : vector<2x128xf32> to vector<1x2x128xf32>
      tpu.vector_store %arg7[%c0_37, %c0_38, %c0_39], %64 {strides = array<i32>} : memref<1x2x128xf32, #tpu.memory_space<vmem>>, vector<1x2x128xf32>,
    } else {
    }
    return
  }
  func.func @transform_0(%arg0: i32, %arg1: i32) -> (i32, i32, i32) {
    %c0_i32 = arith.constant 0 : i32
    %c0_i32_0 = arith.constant 0 : i32
    return %arg0, %arg1, %c0_i32 : i32, i32, i32
  }
  func.func @transform_1(%arg0: i32, %arg1: i32) -> (i32, i32) {
    %c0_i32 = arith.constant 0 : i32
    %c0_i32_0 = arith.constant 0 : i32
    %c0_i32_1 = arith.constant 0 : i32
    return %c0_i32, %c0_i32_0 : i32, i32
  }
  func.func @transform_2(%arg0: i32, %arg1: i32) -> (i32, i32) {
    %c0_i32 = arith.constant 0 : i32
    %c0_i32_0 = arith.constant 0 : i32
    %c0_i32_1 = arith.constant 0 : i32
    return %c0_i32, %c0_i32_0 : i32, i32
  }
  func.func @transform_3(%arg0: i32, %arg1: i32) -> (i32, i32) {
    %c0_i32 = arith.constant 0 : i32
    %c0_i32_0 = arith.constant 0 : i32
    %c0_i32_1 = arith.constant 0 : i32
    return %c0_i32, %c0_i32_0 : i32, i32
  }
  func.func @transform_4(%arg0: i32, %arg1: i32) -> (i32, i32) {
    %c0_i32 = arith.constant 0 : i32
    %c0_i32_0 = arith.constant 0 : i32
    %c0_i32_1 = arith.constant 0 : i32
    return %c0_i32, %c0_i32_0 : i32, i32
  }
  func.func @transform_5(%arg0: i32, %arg1: i32) -> (i32, i32, i32) {
    %c0_i32 = arith.constant 0 : i32
    %c0_i32_0 = arith.constant 0 : i32
    %c0_i32_1 = arith.constant 0 : i32
    return %arg0, %c0_i32, %c0_i32_0 : i32, i32, i32
  }
}

</mosaic_0001>

<llo_original>
// kernel: tpu_custom_call.1
$region0: #{tpu_custom_call.1}
  #allocation0 [shape = 'u32[]', space=smem, size = 0x4, offset = 0x4, fixed_abs, tag = 'smem constant byte address 0x4 - core index']
  #allocation1 [shape = 'u32[72,128]{1,0:T(1,128)}', space=vmem, size = 0x9000, scoped, tag = 'internal scratch']
  #allocation2 [shape = 'f32[2,8,1408]{2,1,0:T(8,128)}', space=vmem, size = 0x16000, scoped, tag = 'scratch operand']
  %s0 = inlined_call_operand.hbm [shape: bf16[2,16,352], index: 0, kind: input, shape index: {}]
  %s1 = inlined_call_operand.hbm [shape: bf16[352,1408], index: 1, kind: input, shape index: {}]
  %s2 = inlined_call_operand.hbm [shape: f32[1,1408], index: 2, kind: input, shape index: {}]
  %s3 = inlined_call_operand.hbm [shape: bf16[1408,128], index: 3, kind: input, shape index: {}]
  %s4 = inlined_call_operand.vmem [shape: f32[1,128], index: 4, kind: input, shape index: {}]
  %s5 = inlined_call_operand.hbm [shape: f32[1,2,128], index: 5, kind: output, shape index: {}]
  %s6 = sld [smem:[#allocation0]]
  $region54: #{tpu_custom_call.1} parent=0
    _
  %s8 = ssub.s32 1, %s6
  %s9 = scalar_select 0, %s8, %s6
  $region1: #{tpu_custom_call.1} parent=0
    #allocation3 [shape = 'u8[24576]{0}', space=vmem, size = 0x6000, scoped, tag = 'input window, operand 0, single buffered']
    #allocation4 [shape = 's32[1]{0}', space=sflag, size = 0x4, scoped, tag = 'scoped memory for tpu_custom_call.1']
    #allocation5 [shape = 's32[1]{0}', space=sflag, size = 0x4, scoped, tag = 'scoped memory for tpu_custom_call.1']
    #allocation6 [shape = 'u8[991232]{0}', space=vmem, size = 0xf2000, scoped, tag = 'input window, operand 1, single buffered']
    #allocation7 [shape = 's32[1]{0}', space=sflag, size = 0x4, scoped, tag = 'scoped memory for tpu_custom_call.1']
    #allocation8 [shape = 'u8[5632]{0}', space=vmem, size = 0x1800, scoped, tag = 'input window, operand 2, single buffered']
    #allocation9 [shape = 'u8[360448]{0}', space=vmem, size = 0x58000, scoped, tag = 'input window, operand 3, single buffered']
    #allocation10 [shape = 's32[1]{0}', space=sflag, size = 0x4, scoped, tag = 'scoped memory for tpu_custom_call.1']
    #allocation11 [shape = 'u8[1024]{0}', space=vmem, size = 0x400, scoped, tag = 'output window, operand 0, single buffered']
    %10 = vsyncpa [#allocation4], 0
    %11 = vsyncpa [#allocation7], 0
    %12 = vsyncpa [#allocation10], 0
    %13 = vsyncpa [#allocation5], 0
    // Predicated region
    $region2: #{tpu_custom_call.1} parent=1 // pred_check
      _
    $region3: #{tpu_custom_call.1} parent=1 // pred_check_branch
      %15 = sbr.rel (0) target = $region5
    $region4: #{tpu_custom_call.1} parent=1 // pred_region
      %17 = vsyncadd [#allocation4], 0
      %s18 = sshll.u32 %s0, 4
      %s19 = int_to_ptr.hbm [resolvable:$true] %s18
      %s20 = sshll.u32 [#allocation3], 4
      %s21 = int_to_ptr.vmem [resolvable:$true] %s20
      %26 = dma.hbm_to_vmem [thread:$0]  %s19, 768, %s21, [#allocation4], 192, 192, 12
    $region5: #{tpu_custom_call.1} parent=1 // pred_fallthru
      _
    // Predicated region
    $region6: #{tpu_custom_call.1} parent=1 // pred_check
      _
    $region7: #{tpu_custom_call.1} parent=1 // pred_check_branch
      %28 = sbr.rel (0) target = $region9
    $region8: #{tpu_custom_call.1} parent=1 // pred_region
      %30 = vsyncadd [#allocation7], 0
      %s31 = sshll.u32 %s1, 4
      %s32 = int_to_ptr.hbm [resolvable:$true] %s31
      %s33 = sshll.u32 [#allocation6], 4
      %s34 = int_to_ptr.vmem [resolvable:$true] %s33
      %39 = dma.hbm_to_vmem [thread:$0]  %s32, 30976, %s34, [#allocation7], 704, 704, 44
    $region9: #{tpu_custom_call.1} parent=1 // pred_fallthru
      _
    // Predicated region
    $region10: #{tpu_custom_call.1} parent=1 // pred_check
      _
    $region11: #{tpu_custom_call.1} parent=1 // pred_check_branch
      %41 = sbr.rel (0) target = $region13
    $region12: #{tpu_custom_call.1} parent=1 // pred_region
      %43 = vsyncadd [#allocation7], 0
      %s45 = sshll.u32 %s2, 4
      %s46 = int_to_ptr.hbm [resolvable:$true] %s45
      %s47 = sshll.u32 [#allocation8], 4
      %s48 = int_to_ptr.vmem [resolvable:$true] %s47
      %50 = dma.hbm_to_vmem [thread:$0]  %s46, 176, %s48, [#allocation7]
    $region13: #{tpu_custom_call.1} parent=1 // pred_fallthru
      _
    // Predicated region
    $region14: #{tpu_custom_call.1} parent=1 // pred_check
      _
    $region15: #{tpu_custom_call.1} parent=1 // pred_check_branch
      %52 = sbr.rel (0) target = $region17
    $region16: #{tpu_custom_call.1} parent=1 // pred_region
      %54 = vsyncadd [#allocation10], 0
      %s55 = sshll.u32 %s3, 4
      %s56 = int_to_ptr.hbm [resolvable:$true] %s55
      %s57 = sshll.u32 [#allocation9], 4
      %s58 = int_to_ptr.vmem [resolvable:$true] %s57
      %63 = dma.hbm_to_vmem [thread:$0]  %s56, 11264, %s58, [#allocation10], 64, 64, 4
    $region17: #{tpu_custom_call.1} parent=1 // pred_fallthru
      _
    // Predicated region
    $region18: #{tpu_custom_call.1} parent=1 // pred_check
      _
    $region19: #{tpu_custom_call.1} parent=1 // pred_check_branch
      %65 = sbr.rel (0) target = $region21
    $region20: #{tpu_custom_call.1} parent=1 // pred_region
      _
    $region21: #{tpu_custom_call.1} parent=1 // pred_fallthru
      _
    // Predicated region
    $region22: #{tpu_custom_call.1} parent=1 // pred_check
      _
    $region23: #{tpu_custom_call.1} parent=1 // pred_check_branch
      %67 = sbr.rel (0) target = $region25
    $region24: #{tpu_custom_call.1} parent=1 // pred_region
      %69 = dma.done [#allocation4], 768
    $region25: #{tpu_custom_call.1} parent=1 // pred_fallthru
      _
    // Predicated region
    $region26: #{tpu_custom_call.1} parent=1 // pred_check
      _
    $region27: #{tpu_custom_call.1} parent=1 // pred_check_branch
      %71 = sbr.rel (0) target = $region29
    $region28: #{tpu_custom_call.1} parent=1 // pred_region
      %73 = dma.done [#allocation7], 30976
    $region29: #{tpu_custom_call.1} parent=1 // pred_fallthru
      _
    // Predicated region
    $region30: #{tpu_custom_call.1} parent=1 // pred_check
      _
    $region31: #{tpu_custom_call.1} parent=1 // pred_check_branch
      %75 = sbr.rel (0) target = $region33
    $region32: #{tpu_custom_call.1} parent=1 // pred_region
      %77 = dma.done [#allocation7], 176
    $region33: #{tpu_custom_call.1} parent=1 // pred_fallthru
      _
    // Predicated region
    $region34: #{tpu_custom_call.1} parent=1 // pred_check
      _
    $region35: #{tpu_custom_call.1} parent=1 // pred_check_branch
      %79 = sbr.rel (0) target = $region37
    $region36: #{tpu_custom_call.1} parent=1 // pred_region
      %81 = dma.done [#allocation10], 11264
    $region37: #{tpu_custom_call.1} parent=1 // pred_fallthru
      _
    %p83 = scmp.eq.s32.totalorder 0, 0
    // Predicated region
    $region38: #{tpu_custom_call.1} parent=1 // pred_check
      %p84 = pneg %p83
    $region39: #{tpu_custom_call.1} parent=1 // pred_check_branch
      %86 = sbr.rel (%p84) target = $region41
    $region40: #{tpu_custom_call.1} parent=1 // pred_region
      %87 = vst [vmem:[#allocation2] sm:$0xff] 0.0
      %88 = vst [vmem:[#allocation2 + $0x8] sm:$0xff] 0.0
      %89 = vst [vmem:[#allocation2 + $0x10] sm:$0xff] 0.0
      %90 = vst [vmem:[#allocation2 + $0x18] sm:$0xff] 0.0
      %91 = vst [vmem:[#allocation2 + $0x20] sm:$0xff] 0.0
      %92 = vst [vmem:[#allocation2 + $0x28] sm:$0xff] 0.0
      %93 = vst [vmem:[#allocation2 + $0x30] sm:$0xff] 0.0
      %94 = vst [vmem:[#allocation2 + $0x38] sm:$0xff] 0.0
      %95 = vst [vmem:[#allocation2 + $0x40] sm:$0xff] 0.0
      %96 = vst [vmem:[#allocation2 + $0x48] sm:$0xff] 0.0
      %97 = vst [vmem:[#allocation2 + $0x50] sm:$0xff] 0.0
      %98 = vst [vmem:[#allocation2 + $0x58] sm:$0xff] 0.0
      %99 = vst [vmem:[#allocation2 + $0x60] sm:$0xff] 0.0
      %100 = vst [vmem:[#allocation2 + $0x68] sm:$0xff] 0.0
      %101 = vst [vmem:[#allocation2 + $0x70] sm:$0xff] 0.0
      %102 = vst [vmem:[#allocation2 + $0x78] sm:$0xff] 0.0
      %103 = vst [vmem:[#allocation2 + $0x80] sm:$0xff] 0.0
      %104 = vst [vmem:[#allocation2 + $0x88] sm:$0xff] 0.0
      %105 = vst [vmem:[#allocation2 + $0x90] sm:$0xff] 0.0
      %106 = vst [vmem:[#allocation2 + $0x98] sm:$0xff] 0.0
      %107 = vst [vmem:[#allocation2 + $0xa0] sm:$0xff] 0.0
      %108 = vst [vmem:[#allocation2 + $0xa8] sm:$0xff] 0.0
    $region41: #{tpu_custom_call.1} parent=1 // pred_fallthru
      _
    %v109 = vld [vmem:[#allocation6] sm:$0xff]
    %v110 = vld [vmem:[#allocation6 + $0x8] sm:$0xff]
    %v111 = vld [vmem:[#allocation6 + $0x10] sm:$0xff]
    %v112 = vld [vmem:[#allocation6 + $0x18] sm:$0xff]
    %v113 = vld [vmem:[#allocation6 + $0x20] sm:$0xff]
    %v114 = vld [vmem:[#allocation6 + $0x28] sm:$0xf]
    %v115 = vld [vmem:[#allocation6 + $0x2c] sm:$0xff]
    %v116 = vld [vmem:[#allocation6 + $0x34] sm:$0xff]
    %v117 = vld [vmem:[#allocation6 + $0x3c] sm:$0xff]
    %v118 = vld [vmem:[#allocation6 + $0x44] sm:$0xff]
    %v119 = vld [vmem:[#allocation6 + $0x4c] sm:$0xff]
    %v120 = vld [vmem:[#allocation6 + $0x54] sm:$0xf]
    %v121 = vld [vmem:[#allocation6 + $0x58] sm:$0xff]
    %v122 = vld [vmem:[#allocation6 + $0x60] sm:$0xff]
    %v123 = vld [vmem:[#allocation6 + $0x68] sm:$0xff]
    %v124 = vld [vmem:[#allocation6 + $0x70] sm:$0xff]
    %v125 = vld [vmem:[#allocation6 + $0x78] sm:$0xff]
    %v126 = vld [vmem:[#allocation6 + $0x80] sm:$0xf]
    %v127 = vld [vmem:[#allocation6 + $0x84] sm:$0xff]
    %v128 = vld [vmem:[#allocation6 + $0x8c] sm:$0xff]
    %v129 = vld [vmem:[#allocation6 + $0x94] sm:$0xff]
    %v130 = vld [vmem:[#allocation6 + $0x9c] sm:$0xff]
    %v131 = vld [vmem:[#allocation6 + $0xa4] sm:$0xff]
    %v132 = vld [vmem:[#allocation6 + $0xac] sm:$0xf]
    %v133 = vld [vmem:[#allocation6 + $0xb0] sm:$0xff]
    %v134 = vld [vmem:[#allocation6 + $0xb8] sm:$0xff]
    %v135 = vld [vmem:[#allocation6 + $0xc0] sm:$0xff]
    %v136 = vld [vmem:[#allocation6 + $0xc8] sm:$0xff]
    %v137 = vld [vmem:[#allocation6 + $0xd0] sm:$0xff]
    %v138 = vld [vmem:[#allocation6 + $0xd8] sm:$0xf]
    %v139 = vld [vmem:[#allocation6 + $0xdc] sm:$0xff]
    %v140 = vld [vmem:[#allocation6 + $0xe4] sm:$0xff]
    %v141 = vld [vmem:[#allocation6 + $0xec] sm:$0xff]
    %v142 = vld [vmem:[#allocation6 + $0xf4] sm:$0xff]
    %v143 = vld [vmem:[#allocation6 + $0xfc] sm:$0xff]
    %v144 = vld [vmem:[#allocation6 + $0x104] sm:$0xf]
    %v145 = vld [vmem:[#allocation6 + $0x108] sm:$0xff]
    %v146 = vld [vmem:[#allocation6 + $0x110] sm:$0xff]
    %v147 = vld [vmem:[#allocation6 + $0x118] sm:$0xff]
    %v148 = vld [vmem:[#allocation6 + $0x120] sm:$0xff]
    %v149 = vld [vmem:[#allocation6 + $0x128] sm:$0xff]
    %v150 = vld [vmem:[#allocation6 + $0x130] sm:$0xf]
    %v151 = vld [vmem:[#allocation6 + $0x134] sm:$0xff]
    %v152 = vld [vmem:[#allocation6 + $0x13c] sm:$0xff]
    %v153 = vld [vmem:[#allocation6 + $0x144] sm:$0xff]
    %v154 = vld [vmem:[#allocation6 + $0x14c] sm:$0xff]
    %v155 = vld [vmem:[#allocation6 + $0x154] sm:$0xff]
    %v156 = vld [vmem:[#allocation6 + $0x15c] sm:$0xf]
    %v157 = vld [vmem:[#allocation6 + $0x160] sm:$0xff]
    %v158 = vld [vmem:[#allocation6 + $0x168] sm:$0xff]
    %v159 = vld [vmem:[#allocation6 + $0x170] sm:$0xff]
    %v160 = vld [vmem:[#allocation6 + $0x178] sm:$0xff]
    %v161 = vld [vmem:[#allocation6 + $0x180] sm:$0xff]
    %v162 = vld [vmem:[#allocation6 + $0x188] sm:$0xf]
    %v163 = vld [vmem:[#allocation6 + $0x18c] sm:$0xff]
    %v164 = vld [vmem:[#allocation6 + $0x194] sm:$0xff]
    %v165 = vld [vmem:[#allocation6 + $0x19c] sm:$0xff]
    %v166 = vld [vmem:[#allocation6 + $0x1a4] sm:$0xff]
    %v167 = vld [vmem:[#allocation6 + $0x1ac] sm:$0xff]
    %v168 = vld [vmem:[#allocation6 + $0x1b4] sm:$0xf]
    %v169 = vld [vmem:[#allocation6 + $0x1b8] sm:$0xff]
    %v170 = vld [vmem:[#allocation6 + $0x1c0] sm:$0xff]
    %v171 = vld [vmem:[#allocation6 + $0x1c8] sm:$0xff]
    %v172 = vld [vmem:[#allocation6 + $0x1d0] sm:$0xff]
    %v173 = vld [vmem:[#allocation6 + $0x1d8] sm:$0xff]
    %v174 = vld [vmem:[#allocation6 + $0x1e0] sm:$0xf]
    %v175 = vld [vmem:[#allocation6 + $0x1e4] sm:$0xff]
    %v176 = vld [vmem:[#allocation6 + $0x1ec] sm:$0xff]
    %v177 = vld [vmem:[#allocation6 + $0x1f4] sm:$0xff]
    %v178 = vld [vmem:[#allocation6 + $0x1fc] sm:$0xff]
    %v179 = vld [vmem:[#allocation6 + $0x204] sm:$0xff]
    %v180 = vld [vmem:[#allocation6 + $0x20c] sm:$0xf]
    %v181 = vld [vmem:[#allocation6 + $0x210] sm:$0xff]
    %v182 = vld [vmem:[#allocation6 + $0x218] sm:$0xff]
    %v183 = vld [vmem:[#allocation6 + $0x220] sm:$0xff]
    %v184 = vld [vmem:[#allocation6 + $0x228] sm:$0xff]
    %v185 = vld [vmem:[#allocation6 + $0x230] sm:$0xff]
    %v186 = vld [vmem:[#allocation6 + $0x238] sm:$0xf]
    %v187 = vld [vmem:[#allocation6 + $0x23c] sm:$0xff]
    %v188 = vld [vmem:[#allocation6 + $0x244] sm:$0xff]
    %v189 = vld [vmem:[#allocation6 + $0x24c] sm:$0xff]
    %v190 = vld [vmem:[#allocation6 + $0x254] sm:$0xff]
    %v191 = vld [vmem:[#allocation6 + $0x25c] sm:$0xff]
    %v192 = vld [vmem:[#allocation6 + $0x264] sm:$0xf]
    %v193 = vld [vmem:[#allocation6 + $0x268] sm:$0xff]
    %v194 = vld [vmem:[#allocation6 + $0x270] sm:$0xff]
    %v195 = vld [vmem:[#allocation6 + $0x278] sm:$0xff]
    %v196 = vld [vmem:[#allocation6 + $0x280] sm:$0xff]
    %v197 = vld [vmem:[#allocation6 + $0x288] sm:$0xff]
    %v198 = vld [vmem:[#allocation6 + $0x290] sm:$0xf]
    %v199 = vld [vmem:[#allocation6 + $0x294] sm:$0xff]
    %v200 = vld [vmem:[#allocation6 + $0x29c] sm:$0xff]
    %v201 = vld [vmem:[#allocation6 + $0x2a4] sm:$0xff]
    %v202 = vld [vmem:[#allocation6 + $0x2ac] sm:$0xff]
    %v203 = vld [vmem:[#allocation6 + $0x2b4] sm:$0xff]
    %v204 = vld [vmem:[#allocation6 + $0x2bc] sm:$0xf]
    %v205 = vld [vmem:[#allocation6 + $0x2c0] sm:$0xff]
    %v206 = vld [vmem:[#allocation6 + $0x2c8] sm:$0xff]
    %v207 = vld [vmem:[#allocation6 + $0x2d0] sm:$0xff]
    %v208 = vld [vmem:[#allocation6 + $0x2d8] sm:$0xff]
    %v209 = vld [vmem:[#allocation6 + $0x2e0] sm:$0xff]
    %v210 = vld [vmem:[#allocation6 + $0x2e8] sm:$0xf]
    %v211 = vld [vmem:[#allocation6 + $0x2ec] sm:$0xff]
    %v212 = vld [vmem:[#allocation6 + $0x2f4] sm:$0xff]
    %v213 = vld [vmem:[#allocation6 + $0x2fc] sm:$0xff]
    %v214 = vld [vmem:[#allocation6 + $0x304] sm:$0xff]
    %v215 = vld [vmem:[#allocation6 + $0x30c] sm:$0xff]
    %v216 = vld [vmem:[#allocation6 + $0x314] sm:$0xf]
    %v217 = vld [vmem:[#allocation6 + $0x318] sm:$0xff]
    %v218 = vld [vmem:[#allocation6 + $0x320] sm:$0xff]
    %v219 = vld [vmem:[#allocation6 + $0x328] sm:$0xff]
    %v220 = vld [vmem:[#allocation6 + $0x330] sm:$0xff]
    %v221 = vld [vmem:[#allocation6 + $0x338] sm:$0xff]
    %v222 = vld [vmem:[#allocation6 + $0x340] sm:$0xf]
    %v223 = vld [vmem:[#allocation6 + $0x344] sm:$0xff]
    %v224 = vld [vmem:[#allocation6 + $0x34c] sm:$0xff]
    %v225 = vld [vmem:[#allocation6 + $0x354] sm:$0xff]
    %v226 = vld [vmem:[#allocation6 + $0x35c] sm:$0xff]
    %v227 = vld [vmem:[#allocation6 + $0x364] sm:$0xff]
    %v228 = vld [vmem:[#allocation6 + $0x36c] sm:$0xf]
    %v229 = vld [vmem:[#allocation6 + $0x370] sm:$0xff]
    %v230 = vld [vmem:[#allocation6 + $0x378] sm:$0xff]
    %v231 = vld [vmem:[#allocation6 + $0x380] sm:$0xff]
    %v232 = vld [vmem:[#allocation6 + $0x388] sm:$0xff]
    %v233 = vld [vmem:[#allocation6 + $0x390] sm:$0xff]
    %v234 = vld [vmem:[#allocation6 + $0x398] sm:$0xf]
    %v235 = vld [vmem:[#allocation6 + $0x39c] sm:$0xff]
    %v236 = vld [vmem:[#allocation6 + $0x3a4] sm:$0xff]
    %v237 = vld [vmem:[#allocation6 + $0x3ac] sm:$0xff]
    %v238 = vld [vmem:[#allocation6 + $0x3b4] sm:$0xff]
    %v239 = vld [vmem:[#allocation6 + $0x3bc] sm:$0xff]
    %v240 = vld [vmem:[#allocation6 + $0x3c4] sm:$0xf]
    %v241 = vld [vmem:[#allocation6 + $0x3c8] sm:$0xff]
    %v242 = vld [vmem:[#allocation6 + $0x3d0] sm:$0xff]
    %v243 = vld [vmem:[#allocation6 + $0x3d8] sm:$0xff]
    %v244 = vld [vmem:[#allocation6 + $0x3e0] sm:$0xff]
    %v245 = vld [vmem:[#allocation6 + $0x3e8] sm:$0xff]
    %v246 = vld [vmem:[#allocation6 + $0x3f0] sm:$0xf]
    %v247 = vld [vmem:[#allocation6 + $0x3f4] sm:$0xff]
    %v248 = vld [vmem:[#allocation6 + $0x3fc] sm:$0xff]
    %v249 = vld [vmem:[#allocation6 + $0x404] sm:$0xff]
    %v250 = vld [vmem:[#allocation6 + $0x40c] sm:$0xff]
    %v251 = vld [vmem:[#allocation6 + $0x414] sm:$0xff]
    %v252 = vld [vmem:[#allocation6 + $0x41c] sm:$0xf]
    %v253 = vld [vmem:[#allocation6 + $0x420] sm:$0xff]
    %v254 = vld [vmem:[#allocation6 + $0x428] sm:$0xff]
    %v255 = vld [vmem:[#allocation6 + $0x430] sm:$0xff]
    %v256 = vld [vmem:[#allocation6 + $0x438] sm:$0xff]
    %v257 = vld [vmem:[#allocation6 + $0x440] sm:$0xff]
    %v258 = vld [vmem:[#allocation6 + $0x448] sm:$0xf]
    %v259 = vld [vmem:[#allocation6 + $0x44c] sm:$0xff]
    %v260 = vld [vmem:[#allocation6 + $0x454] sm:$0xff]
    %v261 = vld [vmem:[#allocation6 + $0x45c] sm:$0xff]
    %v262 = vld [vmem:[#allocation6 + $0x464] sm:$0xff]
    %v263 = vld [vmem:[#allocation6 + $0x46c] sm:$0xff]
    %v264 = vld [vmem:[#allocation6 + $0x474] sm:$0xf]
    %v265 = vld [vmem:[#allocation6 + $0x478] sm:$0xff]
    %v266 = vld [vmem:[#allocation6 + $0x480] sm:$0xff]
    %v267 = vld [vmem:[#allocation6 + $0x488] sm:$0xff]
    %v268 = vld [vmem:[#allocation6 + $0x490] sm:$0xff]
    %v269 = vld [vmem:[#allocation6 + $0x498] sm:$0xff]
    %v270 = vld [vmem:[#allocation6 + $0x4a0] sm:$0xf]
    %v271 = vld [vmem:[#allocation6 + $0x4a4] sm:$0xff]
    %v272 = vld [vmem:[#allocation6 + $0x4ac] sm:$0xff]
    %v273 = vld [vmem:[#allocation6 + $0x4b4] sm:$0xff]
    %v274 = vld [vmem:[#allocation6 + $0x4bc] sm:$0xff]
    %v275 = vld [vmem:[#allocation6 + $0x4c4] sm:$0xff]
    %v276 = vld [vmem:[#allocation6 + $0x4cc] sm:$0xf]
    %v277 = vld [vmem:[#allocation6 + $0x4d0] sm:$0xff]
    %v278 = vld [vmem:[#allocation6 + $0x4d8] sm:$0xff]
    %v279 = vld [vmem:[#allocation6 + $0x4e0] sm:$0xff]
    %v280 = vld [vmem:[#allocation6 + $0x4e8] sm:$0xff]
    %v281 = vld [vmem:[#allocation6 + $0x4f0] sm:$0xff]
    %v282 = vld [vmem:[#allocation6 + $0x4f8] sm:$0xf]
    %v283 = vld [vmem:[#allocation6 + $0x4fc] sm:$0xff]
    %v284 = vld [vmem:[#allocation6 + $0x504] sm:$0xff]
    %v285 = vld [vmem:[#allocation6 + $0x50c] sm:$0xff]
    %v286 = vld [vmem:[#allocation6 + $0x514] sm:$0xff]
    %v287 = vld [vmem:[#allocation6 + $0x51c] sm:$0xff]
    %v288 = vld [vmem:[#allocation6 + $0x524] sm:$0xf]
    %v289 = vld [vmem:[#allocation6 + $0x528] sm:$0xff]
    %v290 = vld [vmem:[#allocation6 + $0x530] sm:$0xff]
    %v291 = vld [vmem:[#allocation6 + $0x538] sm:$0xff]
    %v292 = vld [vmem:[#allocation6 + $0x540] sm:$0xff]
    %v293 = vld [vmem:[#allocation6 + $0x548] sm:$0xff]
    %v294 = vld [vmem:[#allocation6 + $0x550] sm:$0xf]
    %v295 = vld [vmem:[#allocation6 + $0x554] sm:$0xff]
    %v296 = vld [vmem:[#allocation6 + $0x55c] sm:$0xff]
    %v297 = vld [vmem:[#allocation6 + $0x564] sm:$0xff]
    %v298 = vld [vmem:[#allocation6 + $0x56c] sm:$0xff]
    %v299 = vld [vmem:[#allocation6 + $0x574] sm:$0xff]
    %v300 = vld [vmem:[#allocation6 + $0x57c] sm:$0xf]
    %v301 = vld [vmem:[#allocation6 + $0x580] sm:$0xff]
    %v302 = vld [vmem:[#allocation6 + $0x588] sm:$0xff]
    %v303 = vld [vmem:[#allocation6 + $0x590] sm:$0xff]
    %v304 = vld [vmem:[#allocation6 + $0x598] sm:$0xff]
    %v305 = vld [vmem:[#allocation6 + $0x5a0] sm:$0xff]
    %v306 = vld [vmem:[#allocation6 + $0x5a8] sm:$0xf]
    %v307 = vld [vmem:[#allocation6 + $0x5ac] sm:$0xff]
    %v308 = vld [vmem:[#allocation6 + $0x5b4] sm:$0xff]
    %v309 = vld [vmem:[#allocation6 + $0x5bc] sm:$0xff]
    %v310 = vld [vmem:[#allocation6 + $0x5c4] sm:$0xff]
    %v311 = vld [vmem:[#allocation6 + $0x5cc] sm:$0xff]
    %v312 = vld [vmem:[#allocation6 + $0x5d4] sm:$0xf]
    %v313 = vld [vmem:[#allocation6 + $0x5d8] sm:$0xff]
    %v314 = vld [vmem:[#allocation6 + $0x5e0] sm:$0xff]
    %v315 = vld [vmem:[#allocation6 + $0x5e8] sm:$0xff]
    %v316 = vld [vmem:[#allocation6 + $0x5f0] sm:$0xff]
    %v317 = vld [vmem:[#allocation6 + $0x5f8] sm:$0xff]
    %v318 = vld [vmem:[#allocation6 + $0x600] sm:$0xf]
    %v319 = vld [vmem:[#allocation6 + $0x604] sm:$0xff]
    %v320 = vld [vmem:[#allocation6 + $0x60c] sm:$0xff]
    %v321 = vld [vmem:[#allocation6 + $0x614] sm:$0xff]
    %v322 = vld [vmem:[#allocation6 + $0x61c] sm:$0xff]
    %v323 = vld [vmem:[#allocation6 + $0x624] sm:$0xff]
    %v324 = vld [vmem:[#allocation6 + $0x62c] sm:$0xf]
    %v325 = vld [vmem:[#allocation6 + $0x630] sm:$0xff]
    %v326 = vld [vmem:[#allocation6 + $0x638] sm:$0xff]
    %v327 = vld [vmem:[#allocation6 + $0x640] sm:$0xff]
    %v328 = vld [vmem:[#allocation6 + $0x648] sm:$0xff]
    %v329 = vld [vmem:[#allocation6 + $0x650] sm:$0xff]
    %v330 = vld [vmem:[#allocation6 + $0x658] sm:$0xf]
    %v331 = vld [vmem:[#allocation6 + $0x65c] sm:$0xff]
    %v332 = vld [vmem:[#allocation6 + $0x664] sm:$0xff]
    %v333 = vld [vmem:[#allocation6 + $0x66c] sm:$0xff]
    %v334 = vld [vmem:[#allocation6 + $0x674] sm:$0xff]
    %v335 = vld [vmem:[#allocation6 + $0x67c] sm:$0xff]
    %v336 = vld [vmem:[#allocation6 + $0x684] sm:$0xf]
    %v337 = vld [vmem:[#allocation6 + $0x688] sm:$0xff]
    %v338 = vld [vmem:[#allocation6 + $0x690] sm:$0xff]
    %v339 = vld [vmem:[#allocation6 + $0x698] sm:$0xff]
    %v340 = vld [vmem:[#allocation6 + $0x6a0] sm:$0xff]
    %v341 = vld [vmem:[#allocation6 + $0x6a8] sm:$0xff]
    %v342 = vld [vmem:[#allocation6 + $0x6b0] sm:$0xf]
    %v343 = vld [vmem:[#allocation6 + $0x6b4] sm:$0xff]
    %v344 = vld [vmem:[#allocation6 + $0x6bc] sm:$0xff]
    %v345 = vld [vmem:[#allocation6 + $0x6c4] sm:$0xff]
    %v346 = vld [vmem:[#allocation6 + $0x6cc] sm:$0xff]
    %v347 = vld [vmem:[#allocation6 + $0x6d4] sm:$0xff]
    %v348 = vld [vmem:[#allocation6 + $0x6dc] sm:$0xf]
    %v349 = vld [vmem:[#allocation6 + $0x6e0] sm:$0xff]
    %v350 = vld [vmem:[#allocation6 + $0x6e8] sm:$0xff]
    %v351 = vld [vmem:[#allocation6 + $0x6f0] sm:$0xff]
    %v352 = vld [vmem:[#allocation6 + $0x6f8] sm:$0xff]
    %v353 = vld [vmem:[#allocation6 + $0x700] sm:$0xff]
    %v354 = vld [vmem:[#allocation6 + $0x708] sm:$0xf]
    %v355 = vld [vmem:[#allocation6 + $0x70c] sm:$0xff]
    %v356 = vld [vmem:[#allocation6 + $0x714] sm:$0xff]
    %v357 = vld [vmem:[#allocation6 + $0x71c] sm:$0xff]
    %v358 = vld [vmem:[#allocation6 + $0x724] sm:$0xff]
    %v359 = vld [vmem:[#allocation6 + $0x72c] sm:$0xff]
    %v360 = vld [vmem:[#allocation6 + $0x734] sm:$0xf]
    %v361 = vld [vmem:[#allocation6 + $0x738] sm:$0xff]
    %v362 = vld [vmem:[#allocation6 + $0x740] sm:$0xff]
    %v363 = vld [vmem:[#allocation6 + $0x748] sm:$0xff]
    %v364 = vld [vmem:[#allocation6 + $0x750] sm:$0xff]
    %v365 = vld [vmem:[#allocation6 + $0x758] sm:$0xff]
    %v366 = vld [vmem:[#allocation6 + $0x760] sm:$0xf]
    %v367 = vld [vmem:[#allocation6 + $0x764] sm:$0xff]
    %v368 = vld [vmem:[#allocation6 + $0x76c] sm:$0xff]
    %v369 = vld [vmem:[#allocation6 + $0x774] sm:$0xff]
    %v370 = vld [vmem:[#allocation6 + $0x77c] sm:$0xff]
    %v371 = vld [vmem:[#allocation6 + $0x784] sm:$0xff]
    %v372 = vld [vmem:[#allocation6 + $0x78c] sm:$0xf]
    %v373 = vld [vmem:[#allocation8] sm:$0xff]
    %v374 = vld [vmem:[#allocation8 + $0x8] sm:$0x7]
    %v375 = vld [vmem:[#allocation3] sm:$0xff]
    %v376 = vld [vmem:[#allocation3 + $0x8] sm:$0xf]
    %v377 = vld [vmem:[#allocation3 + $0xc] sm:$0xff]
    %v378 = vld [vmem:[#allocation3 + $0x14] sm:$0xf]
    %v379 = vld [vmem:[#allocation3 + $0x18] sm:$0xff]
    %v380 = vld [vmem:[#allocation3 + $0x20] sm:$0xf]
    %v381 = vld [vmem:[#allocation3 + $0x24] sm:$0xff]
    %v382 = vld [vmem:[#allocation3 + $0x2c] sm:$0xf]
    %v385 = vperm.slane %v373, 0
    %v386 = vperm.slane %v373, 1
    %v387 = vperm.slane %v373, 2
    %v388 = vperm.slane %v373, 3
    %v389 = vperm.slane %v373, 4
    %v390 = vperm.slane %v373, 5
    %v391 = vperm.slane %v373, 6
    %v392 = vperm.slane %v373, 7
    %v393 = vperm.slane %v374, 0
    %v394 = vperm.slane %v374, 1
    %v395 = vperm.slane %v374, 2
    %v415 = vunpack.c.l.b16 %v375
    %v416 = vunpack.c.h.b16 %v375
    %v417 = vunpack.c.l.b16 %v376
    %v418 = vunpack.c.l.b16 %v377
    %v419 = vunpack.c.h.b16 %v377
    %v420 = vunpack.c.l.b16 %v378
    %v421 = vunpack.c.l.b16 %v379
    %v422 = vunpack.c.h.b16 %v379
    %v423 = vunpack.c.l.b16 %v380
    %v424 = vunpack.c.l.b16 %v381
    %v425 = vunpack.c.h.b16 %v381
    %v426 = vunpack.c.l.b16 %v382
    %v427 = vpack.c.b16 %v418, %v415
    %v428 = vpack.c.b16 %v419, %v416
    %v429 = vpack.c.b16 %v420, %v417
    %v430 = vpack.c.b16 %v424, %v421
    %v431 = vpack.c.b16 %v425, %v422
    %v432 = vpack.c.b16 %v426, %v423
    %v701 = vunpack.c.l.b16 %v109
    %v702 = vunpack.c.h.b16 %v109
    %v703 = vunpack.c.l.b16 %v110
    %v704 = vunpack.c.h.b16 %v110
    %v705 = vunpack.c.l.b16 %v111
    %v706 = vunpack.c.h.b16 %v111
    %v707 = vunpack.c.l.b16 %v112
    %v708 = vunpack.c.h.b16 %v112
    %v709 = vunpack.c.l.b16 %v113
    %v710 = vunpack.c.h.b16 %v113
    %v711 = vunpack.c.l.b16 %v114
    %v712 = vunpack.c.l.b16 %v115
    %v713 = vunpack.c.h.b16 %v115
    %v714 = vunpack.c.l.b16 %v116
    %v715 = vunpack.c.h.b16 %v116
    %v716 = vunpack.c.l.b16 %v117
    %v717 = vunpack.c.h.b16 %v117
    %v718 = vunpack.c.l.b16 %v118
    %v719 = vunpack.c.h.b16 %v118
    %v720 = vunpack.c.l.b16 %v119
    %v721 = vunpack.c.h.b16 %v119
    %v722 = vunpack.c.l.b16 %v120
    %v723 = vunpack.c.l.b16 %v121
    %v724 = vunpack.c.h.b16 %v121
    %v725 = vunpack.c.l.b16 %v122
    %v726 = vunpack.c.h.b16 %v122
    %v727 = vunpack.c.l.b16 %v123
    %v728 = vunpack.c.h.b16 %v123
    %v729 = vunpack.c.l.b16 %v124
    %v730 = vunpack.c.h.b16 %v124
    %v731 = vunpack.c.l.b16 %v125
    %v732 = vunpack.c.h.b16 %v125
    %v733 = vunpack.c.l.b16 %v126
    %v734 = vunpack.c.l.b16 %v127
    %v735 = vunpack.c.h.b16 %v127
    %v736 = vunpack.c.l.b16 %v128
    %v737 = vunpack.c.h.b16 %v128
    %v738 = vunpack.c.l.b16 %v129
    %v739 = vunpack.c.h.b16 %v129
    %v740 = vunpack.c.l.b16 %v130
    %v741 = vunpack.c.h.b16 %v130
    %v742 = vunpack.c.l.b16 %v131
    %v743 = vunpack.c.h.b16 %v131
    %v744 = vunpack.c.l.b16 %v132
    %v745 = vunpack.c.l.b16 %v133
    %v746 = vunpack.c.h.b16 %v133
    %v747 = vunpack.c.l.b16 %v134
    %v748 = vunpack.c.h.b16 %v134
    %v749 = vunpack.c.l.b16 %v135
    %v750 = vunpack.c.h.b16 %v135
    %v751 = vunpack.c.l.b16 %v136
    %v752 = vunpack.c.h.b16 %v136
    %v753 = vunpack.c.l.b16 %v137
    %v754 = vunpack.c.h.b16 %v137
    %v755 = vunpack.c.l.b16 %v138
    %v756 = vunpack.c.l.b16 %v139
    %v757 = vunpack.c.h.b16 %v139
    %v758 = vunpack.c.l.b16 %v140
    %v759 = vunpack.c.h.b16 %v140
    %v760 = vunpack.c.l.b16 %v141
    %v761 = vunpack.c.h.b16 %v141
    %v762 = vunpack.c.l.b16 %v142
    %v763 = vunpack.c.h.b16 %v142
    %v764 = vunpack.c.l.b16 %v143
    %v765 = vunpack.c.h.b16 %v143
    %v766 = vunpack.c.l.b16 %v144
    %v767 = vunpack.c.l.b16 %v145
    %v768 = vunpack.c.h.b16 %v145
    %v769 = vunpack.c.l.b16 %v146
    %v770 = vunpack.c.h.b16 %v146
    %v771 = vunpack.c.l.b16 %v147
    %v772 = vunpack.c.h.b16 %v147
    %v773 = vunpack.c.l.b16 %v148
    %v774 = vunpack.c.h.b16 %v148
    %v775 = vunpack.c.l.b16 %v149
    %v776 = vunpack.c.h.b16 %v149
    %v777 = vunpack.c.l.b16 %v150
    %v778 = vunpack.c.l.b16 %v151
    %v779 = vunpack.c.h.b16 %v151
    %v780 = vunpack.c.l.b16 %v152
    %v781 = vunpack.c.h.b16 %v152
    %v782 = vunpack.c.l.b16 %v153
    %v783 = vunpack.c.h.b16 %v153
    %v784 = vunpack.c.l.b16 %v154
    %v785 = vunpack.c.h.b16 %v154
    %v786 = vunpack.c.l.b16 %v155
    %v787 = vunpack.c.h.b16 %v155
    %v788 = vunpack.c.l.b16 %v156
    %v789 = vunpack.c.l.b16 %v157
    %v790 = vunpack.c.h.b16 %v157
    %v791 = vunpack.c.l.b16 %v158
    %v792 = vunpack.c.h.b16 %v158
    %v793 = vunpack.c.l.b16 %v159
    %v794 = vunpack.c.h.b16 %v159
    %v795 = vunpack.c.l.b16 %v160
    %v796 = vunpack.c.h.b16 %v160
    %v797 = vunpack.c.l.b16 %v161
    %v798 = vunpack.c.h.b16 %v161
    %v799 = vunpack.c.l.b16 %v162
    %v800 = vunpack.c.l.b16 %v163
    %v801 = vunpack.c.h.b16 %v163
    %v802 = vunpack.c.l.b16 %v164
    %v803 = vunpack.c.h.b16 %v164
    %v804 = vunpack.c.l.b16 %v165
    %v805 = vunpack.c.h.b16 %v165
    %v806 = vunpack.c.l.b16 %v166
    %v807 = vunpack.c.h.b16 %v166
    %v808 = vunpack.c.l.b16 %v167
    %v809 = vunpack.c.h.b16 %v167
    %v810 = vunpack.c.l.b16 %v168
    %v811 = vunpack.c.l.b16 %v169
    %v812 = vunpack.c.h.b16 %v169
    %v813 = vunpack.c.l.b16 %v170
    %v814 = vunpack.c.h.b16 %v170
    %v815 = vunpack.c.l.b16 %v171
    %v816 = vunpack.c.h.b16 %v171
    %v817 = vunpack.c.l.b16 %v172
    %v818 = vunpack.c.h.b16 %v172
    %v819 = vunpack.c.l.b16 %v173
    %v820 = vunpack.c.h.b16 %v173
    %v821 = vunpack.c.l.b16 %v174
    %v822 = vunpack.c.l.b16 %v175
    %v823 = vunpack.c.h.b16 %v175
    %v824 = vunpack.c.l.b16 %v176
    %v825 = vunpack.c.h.b16 %v176
    %v826 = vunpack.c.l.b16 %v177
    %v827 = vunpack.c.h.b16 %v177
    %v828 = vunpack.c.l.b16 %v178
    %v829 = vunpack.c.h.b16 %v178
    %v830 = vunpack.c.l.b16 %v179
    %v831 = vunpack.c.h.b16 %v179
    %v832 = vunpack.c.l.b16 %v180
    %v833 = vunpack.c.l.b16 %v181
    %v834 = vunpack.c.h.b16 %v181
    %v835 = vunpack.c.l.b16 %v182
    %v836 = vunpack.c.h.b16 %v182
    %v837 = vunpack.c.l.b16 %v183
    %v838 = vunpack.c.h.b16 %v183
    %v839 = vunpack.c.l.b16 %v184
    %v840 = vunpack.c.h.b16 %v184
    %v841 = vunpack.c.l.b16 %v185
    %v842 = vunpack.c.h.b16 %v185
    %v843 = vunpack.c.l.b16 %v186
    %v844 = vunpack.c.l.b16 %v187
    %v845 = vunpack.c.h.b16 %v187
    %v846 = vunpack.c.l.b16 %v188
    %v847 = vunpack.c.h.b16 %v188
    %v848 = vunpack.c.l.b16 %v189
    %v849 = vunpack.c.h.b16 %v189
    %v850 = vunpack.c.l.b16 %v190
    %v851 = vunpack.c.h.b16 %v190
    %v852 = vunpack.c.l.b16 %v191
    %v853 = vunpack.c.h.b16 %v191
    %v854 = vunpack.c.l.b16 %v192
    %v855 = vunpack.c.l.b16 %v193
    %v856 = vunpack.c.h.b16 %v193
    %v857 = vunpack.c.l.b16 %v194
    %v858 = vunpack.c.h.b16 %v194
    %v859 = vunpack.c.l.b16 %v195
    %v860 = vunpack.c.h.b16 %v195
    %v861 = vunpack.c.l.b16 %v196
    %v862 = vunpack.c.h.b16 %v196
    %v863 = vunpack.c.l.b16 %v197
    %v864 = vunpack.c.h.b16 %v197
    %v865 = vunpack.c.l.b16 %v198
    %v866 = vunpack.c.l.b16 %v199
    %v867 = vunpack.c.h.b16 %v199
    %v868 = vunpack.c.l.b16 %v200
    %v869 = vunpack.c.h.b16 %v200
    %v870 = vunpack.c.l.b16 %v201
    %v871 = vunpack.c.h.b16 %v201
    %v872 = vunpack.c.l.b16 %v202
    %v873 = vunpack.c.h.b16 %v202
    %v874 = vunpack.c.l.b16 %v203
    %v875 = vunpack.c.h.b16 %v203
    %v876 = vunpack.c.l.b16 %v204
    %v877 = vunpack.c.l.b16 %v205
    %v878 = vunpack.c.h.b16 %v205
    %v879 = vunpack.c.l.b16 %v206
    %v880 = vunpack.c.h.b16 %v206
    %v881 = vunpack.c.l.b16 %v207
    %v882 = vunpack.c.h.b16 %v207
    %v883 = vunpack.c.l.b16 %v208
    %v884 = vunpack.c.h.b16 %v208
    %v885 = vunpack.c.l.b16 %v209
    %v886 = vunpack.c.h.b16 %v209
    %v887 = vunpack.c.l.b16 %v210
    %v888 = vunpack.c.l.b16 %v211
    %v889 = vunpack.c.h.b16 %v211
    %v890 = vunpack.c.l.b16 %v212
    %v891 = vunpack.c.h.b16 %v212
    %v892 = vunpack.c.l.b16 %v213
    %v893 = vunpack.c.h.b16 %v213
    %v894 = vunpack.c.l.b16 %v214
    %v895 = vunpack.c.h.b16 %v214
    %v896 = vunpack.c.l.b16 %v215
    %v897 = vunpack.c.h.b16 %v215
    %v898 = vunpack.c.l.b16 %v216
    %v899 = vunpack.c.l.b16 %v217
    %v900 = vunpack.c.h.b16 %v217
    %v901 = vunpack.c.l.b16 %v218
    %v902 = vunpack.c.h.b16 %v218
    %v903 = vunpack.c.l.b16 %v219
    %v904 = vunpack.c.h.b16 %v219
    %v905 = vunpack.c.l.b16 %v220
    %v906 = vunpack.c.h.b16 %v220
    %v907 = vunpack.c.l.b16 %v221
    %v908 = vunpack.c.h.b16 %v221
    %v909 = vunpack.c.l.b16 %v222
    %v910 = vunpack.c.l.b16 %v223
    %v911 = vunpack.c.h.b16 %v223
    %v912 = vunpack.c.l.b16 %v224
    %v913 = vunpack.c.h.b16 %v224
    %v914 = vunpack.c.l.b16 %v225
    %v915 = vunpack.c.h.b16 %v225
    %v916 = vunpack.c.l.b16 %v226
    %v917 = vunpack.c.h.b16 %v226
    %v918 = vunpack.c.l.b16 %v227
    %v919 = vunpack.c.h.b16 %v227
    %v920 = vunpack.c.l.b16 %v228
    %v921 = vunpack.c.l.b16 %v229
    %v922 = vunpack.c.h.b16 %v229
    %v923 = vunpack.c.l.b16 %v230
    %v924 = vunpack.c.h.b16 %v230
    %v925 = vunpack.c.l.b16 %v231
    %v926 = vunpack.c.h.b16 %v231
    %v927 = vunpack.c.l.b16 %v232
    %v928 = vunpack.c.h.b16 %v232
    %v929 = vunpack.c.l.b16 %v233
    %v930 = vunpack.c.h.b16 %v233
    %v931 = vunpack.c.l.b16 %v234
    %v932 = vunpack.c.l.b16 %v235
    %v933 = vunpack.c.h.b16 %v235
    %v934 = vunpack.c.l.b16 %v236
    %v935 = vunpack.c.h.b16 %v236
    %v936 = vunpack.c.l.b16 %v237
    %v937 = vunpack.c.h.b16 %v237
    %v938 = vunpack.c.l.b16 %v238
    %v939 = vunpack.c.h.b16 %v238
    %v940 = vunpack.c.l.b16 %v239
    %v941 = vunpack.c.h.b16 %v239
    %v942 = vunpack.c.l.b16 %v240
    %v943 = vunpack.c.l.b16 %v241
    %v944 = vunpack.c.h.b16 %v241
    %v945 = vunpack.c.l.b16 %v242
    %v946 = vunpack.c.h.b16 %v242
    %v947 = vunpack.c.l.b16 %v243
    %v948 = vunpack.c.h.b16 %v243
    %v949 = vunpack.c.l.b16 %v244
    %v950 = vunpack.c.h.b16 %v244
    %v951 = vunpack.c.l.b16 %v245
    %v952 = vunpack.c.h.b16 %v245
    %v953 = vunpack.c.l.b16 %v246
    %v954 = vunpack.c.l.b16 %v247
    %v955 = vunpack.c.h.b16 %v247
    %v956 = vunpack.c.l.b16 %v248
    %v957 = vunpack.c.h.b16 %v248
    %v958 = vunpack.c.l.b16 %v249
    %v959 = vunpack.c.h.b16 %v249
    %v960 = vunpack.c.l.b16 %v250
    %v961 = vunpack.c.h.b16 %v250
    %v962 = vunpack.c.l.b16 %v251
    %v963 = vunpack.c.h.b16 %v251
    %v964 = vunpack.c.l.b16 %v252
    %v965 = vunpack.c.l.b16 %v253
    %v966 = vunpack.c.h.b16 %v253
    %v967 = vunpack.c.l.b16 %v254
    %v968 = vunpack.c.h.b16 %v254
    %v969 = vunpack.c.l.b16 %v255
    %v970 = vunpack.c.h.b16 %v255
    %v971 = vunpack.c.l.b16 %v256
    %v972 = vunpack.c.h.b16 %v256
    %v973 = vunpack.c.l.b16 %v257
    %v974 = vunpack.c.h.b16 %v257
    %v975 = vunpack.c.l.b16 %v258
    %v976 = vunpack.c.l.b16 %v259
    %v977 = vunpack.c.h.b16 %v259
    %v978 = vunpack.c.l.b16 %v260
    %v979 = vunpack.c.h.b16 %v260
    %v980 = vunpack.c.l.b16 %v261
    %v981 = vunpack.c.h.b16 %v261
    %v982 = vunpack.c.l.b16 %v262
    %v983 = vunpack.c.h.b16 %v262
    %v984 = vunpack.c.l.b16 %v263
    %v985 = vunpack.c.h.b16 %v263
    %v986 = vunpack.c.l.b16 %v264
    %v987 = vunpack.c.l.b16 %v265
    %v988 = vunpack.c.h.b16 %v265
    %v989 = vunpack.c.l.b16 %v266
    %v990 = vunpack.c.h.b16 %v266
    %v991 = vunpack.c.l.b16 %v267
    %v992 = vunpack.c.h.b16 %v267
    %v993 = vunpack.c.l.b16 %v268
    %v994 = vunpack.c.h.b16 %v268
    %v995 = vunpack.c.l.b16 %v269
    %v996 = vunpack.c.h.b16 %v269
    %v997 = vunpack.c.l.b16 %v270
    %v998 = vunpack.c.l.b16 %v271
    %v999 = vunpack.c.h.b16 %v271
    %v1000 = vunpack.c.l.b16 %v272
    %v1001 = vunpack.c.h.b16 %v272
    %v1002 = vunpack.c.l.b16 %v273
    %v1003 = vunpack.c.h.b16 %v273
    %v1004 = vunpack.c.l.b16 %v274
    %v1005 = vunpack.c.h.b16 %v274
    %v1006 = vunpack.c.l.b16 %v275
    %v1007 = vunpack.c.h.b16 %v275
    %v1008 = vunpack.c.l.b16 %v276
    %v1009 = vunpack.c.l.b16 %v277
    %v1010 = vunpack.c.h.b16 %v277
    %v1011 = vunpack.c.l.b16 %v278
    %v1012 = vunpack.c.h.b16 %v278
    %v1013 = vunpack.c.l.b16 %v279
    %v1014 = vunpack.c.h.b16 %v279
    %v1015 = vunpack.c.l.b16 %v280
    %v1016 = vunpack.c.h.b16 %v280
    %v1017 = vunpack.c.l.b16 %v281
    %v1018 = vunpack.c.h.b16 %v281
    %v1019 = vunpack.c.l.b16 %v282
    %v1020 = vunpack.c.l.b16 %v283
    %v1021 = vunpack.c.h.b16 %v283
    %v1022 = vunpack.c.l.b16 %v284
    %v1023 = vunpack.c.h.b16 %v284
    %v1024 = vunpack.c.l.b16 %v285
    %v1025 = vunpack.c.h.b16 %v285
    %v1026 = vunpack.c.l.b16 %v286
    %v1027 = vunpack.c.h.b16 %v286
    %v1028 = vunpack.c.l.b16 %v287
    %v1029 = vunpack.c.h.b16 %v287
    %v1030 = vunpack.c.l.b16 %v288
    %v1031 = vunpack.c.l.b16 %v289
    %v1032 = vunpack.c.h.b16 %v289
    %v1033 = vunpack.c.l.b16 %v290
    %v1034 = vunpack.c.h.b16 %v290
    %v1035 = vunpack.c.l.b16 %v291
    %v1036 = vunpack.c.h.b16 %v291
    %v1037 = vunpack.c.l.b16 %v292
    %v1038 = vunpack.c.h.b16 %v292
    %v1039 = vunpack.c.l.b16 %v293
    %v1040 = vunpack.c.h.b16 %v293
    %v1041 = vunpack.c.l.b16 %v294
    %v1042 = vunpack.c.l.b16 %v295
    %v1043 = vunpack.c.h.b16 %v295
    %v1044 = vunpack.c.l.b16 %v296
    %v1045 = vunpack.c.h.b16 %v296
    %v1046 = vunpack.c.l.b16 %v297
    %v1047 = vunpack.c.h.b16 %v297
    %v1048 = vunpack.c.l.b16 %v298
    %v1049 = vunpack.c.h.b16 %v298
    %v1050 = vunpack.c.l.b16 %v299
    %v1051 = vunpack.c.h.b16 %v299
    %v1052 = vunpack.c.l.b16 %v300
    %v1053 = vunpack.c.l.b16 %v301
    %v1054 = vunpack.c.h.b16 %v301
    %v1055 = vunpack.c.l.b16 %v302
    %v1056 = vunpack.c.h.b16 %v302
    %v1057 = vunpack.c.l.b16 %v303
    %v1058 = vunpack.c.h.b16 %v303
    %v1059 = vunpack.c.l.b16 %v304
    %v1060 = vunpack.c.h.b16 %v304
    %v1061 = vunpack.c.l.b16 %v305
    %v1062 = vunpack.c.h.b16 %v305
    %v1063 = vunpack.c.l.b16 %v306
    %v1064 = vunpack.c.l.b16 %v307
    %v1065 = vunpack.c.h.b16 %v307
    %v1066 = vunpack.c.l.b16 %v308
    %v1067 = vunpack.c.h.b16 %v308
    %v1068 = vunpack.c.l.b16 %v309
    %v1069 = vunpack.c.h.b16 %v309
    %v1070 = vunpack.c.l.b16 %v310
    %v1071 = vunpack.c.h.b16 %v310
    %v1072 = vunpack.c.l.b16 %v311
    %v1073 = vunpack.c.h.b16 %v311
    %v1074 = vunpack.c.l.b16 %v312
    %v1075 = vunpack.c.l.b16 %v313
    %v1076 = vunpack.c.h.b16 %v313
    %v1077 = vunpack.c.l.b16 %v314
    %v1078 = vunpack.c.h.b16 %v314
    %v1079 = vunpack.c.l.b16 %v315
    %v1080 = vunpack.c.h.b16 %v315
    %v1081 = vunpack.c.l.b16 %v316
    %v1082 = vunpack.c.h.b16 %v316
    %v1083 = vunpack.c.l.b16 %v317
    %v1084 = vunpack.c.h.b16 %v317
    %v1085 = vunpack.c.l.b16 %v318
    %v1086 = vunpack.c.l.b16 %v319
    %v1087 = vunpack.c.h.b16 %v319
    %v1088 = vunpack.c.l.b16 %v320
    %v1089 = vunpack.c.h.b16 %v320
    %v1090 = vunpack.c.l.b16 %v321
    %v1091 = vunpack.c.h.b16 %v321
    %v1092 = vunpack.c.l.b16 %v322
    %v1093 = vunpack.c.h.b16 %v322
    %v1094 = vunpack.c.l.b16 %v323
    %v1095 = vunpack.c.h.b16 %v323
    %v1096 = vunpack.c.l.b16 %v324
    %v1097 = vunpack.c.l.b16 %v325
    %v1098 = vunpack.c.h.b16 %v325
    %v1099 = vunpack.c.l.b16 %v326
    %v1100 = vunpack.c.h.b16 %v326
    %v1101 = vunpack.c.l.b16 %v327
    %v1102 = vunpack.c.h.b16 %v327
    %v1103 = vunpack.c.l.b16 %v328
    %v1104 = vunpack.c.h.b16 %v328
    %v1105 = vunpack.c.l.b16 %v329
    %v1106 = vunpack.c.h.b16 %v329
    %v1107 = vunpack.c.l.b16 %v330
    %v1108 = vunpack.c.l.b16 %v331
    %v1109 = vunpack.c.h.b16 %v331
    %v1110 = vunpack.c.l.b16 %v332
    %v1111 = vunpack.c.h.b16 %v332
    %v1112 = vunpack.c.l.b16 %v333
    %v1113 = vunpack.c.h.b16 %v333
    %v1114 = vunpack.c.l.b16 %v334
    %v1115 = vunpack.c.h.b16 %v334
    %v1116 = vunpack.c.l.b16 %v335
    %v1117 = vunpack.c.h.b16 %v335
    %v1118 = vunpack.c.l.b16 %v336
    %v1119 = vunpack.c.l.b16 %v337
    %v1120 = vunpack.c.h.b16 %v337
    %v1121 = vunpack.c.l.b16 %v338
    %v1122 = vunpack.c.h.b16 %v338
    %v1123 = vunpack.c.l.b16 %v339
    %v1124 = vunpack.c.h.b16 %v339
    %v1125 = vunpack.c.l.b16 %v340
    %v1126 = vunpack.c.h.b16 %v340
    %v1127 = vunpack.c.l.b16 %v341
    %v1128 = vunpack.c.h.b16 %v341
    %v1129 = vunpack.c.l.b16 %v342
    %v1130 = vunpack.c.l.b16 %v343
    %v1131 = vunpack.c.h.b16 %v343
    %v1132 = vunpack.c.l.b16 %v344
    %v1133 = vunpack.c.h.b16 %v344
    %v1134 = vunpack.c.l.b16 %v345
    %v1135 = vunpack.c.h.b16 %v345
    %v1136 = vunpack.c.l.b16 %v346
    %v1137 = vunpack.c.h.b16 %v346
    %v1138 = vunpack.c.l.b16 %v347
    %v1139 = vunpack.c.h.b16 %v347
    %v1140 = vunpack.c.l.b16 %v348
    %v1141 = vunpack.c.l.b16 %v349
    %v1142 = vunpack.c.h.b16 %v349
    %v1143 = vunpack.c.l.b16 %v350
    %v1144 = vunpack.c.h.b16 %v350
    %v1145 = vunpack.c.l.b16 %v351
    %v1146 = vunpack.c.h.b16 %v351
    %v1147 = vunpack.c.l.b16 %v352
    %v1148 = vunpack.c.h.b16 %v352
    %v1149 = vunpack.c.l.b16 %v353
    %v1150 = vunpack.c.h.b16 %v353
    %v1151 = vunpack.c.l.b16 %v354
    %v1152 = vunpack.c.l.b16 %v355
    %v1153 = vunpack.c.h.b16 %v355
    %v1154 = vunpack.c.l.b16 %v356
    %v1155 = vunpack.c.h.b16 %v356
    %v1156 = vunpack.c.l.b16 %v357
    %v1157 = vunpack.c.h.b16 %v357
    %v1158 = vunpack.c.l.b16 %v358
    %v1159 = vunpack.c.h.b16 %v358
    %v1160 = vunpack.c.l.b16 %v359
    %v1161 = vunpack.c.h.b16 %v359
    %v1162 = vunpack.c.l.b16 %v360
    %v1163 = vunpack.c.l.b16 %v361
    %v1164 = vunpack.c.h.b16 %v361
    %v1165 = vunpack.c.l.b16 %v362
    %v1166 = vunpack.c.h.b16 %v362
    %v1167 = vunpack.c.l.b16 %v363
    %v1168 = vunpack.c.h.b16 %v363
    %v1169 = vunpack.c.l.b16 %v364
    %v1170 = vunpack.c.h.b16 %v364
    %v1171 = vunpack.c.l.b16 %v365
    %v1172 = vunpack.c.h.b16 %v365
    %v1173 = vunpack.c.l.b16 %v366
    %v1174 = vunpack.c.l.b16 %v367
    %v1175 = vunpack.c.h.b16 %v367
    %v1176 = vunpack.c.l.b16 %v368
    %v1177 = vunpack.c.h.b16 %v368
    %v1178 = vunpack.c.l.b16 %v369
    %v1179 = vunpack.c.h.b16 %v369
    %v1180 = vunpack.c.l.b16 %v370
    %v1181 = vunpack.c.h.b16 %v370
    %v1182 = vunpack.c.l.b16 %v371
    %v1183 = vunpack.c.h.b16 %v371
    %v1184 = vunpack.c.l.b16 %v372
    %v1185 = vpack.c.b16 %v712, %v701
    %v1186 = vpack.c.b16 %v713, %v702
    %v1187 = vpack.c.b16 %v714, %v703
    %v1188 = vpack.c.b16 %v715, %v704
    %v1189 = vpack.c.b16 %v716, %v705
    %v1190 = vpack.c.b16 %v717, %v706
    %v1191 = vpack.c.b16 %v718, %v707
    %v1192 = vpack.c.b16 %v719, %v708
    %v1193 = vpack.c.b16 %v720, %v709
    %v1194 = vpack.c.b16 %v721, %v710
    %v1195 = vpack.c.b16 %v722, %v711
    %v1196 = vpack.c.b16 %v734, %v723
    %v1197 = vpack.c.b16 %v735, %v724
    %v1198 = vpack.c.b16 %v736, %v725
    %v1199 = vpack.c.b16 %v737, %v726
    %v1200 = vpack.c.b16 %v738, %v727
    %v1201 = vpack.c.b16 %v739, %v728
    %v1202 = vpack.c.b16 %v740, %v729
    %v1203 = vpack.c.b16 %v741, %v730
    %v1204 = vpack.c.b16 %v742, %v731
    %v1205 = vpack.c.b16 %v743, %v732
    %v1206 = vpack.c.b16 %v744, %v733
    %v1207 = vpack.c.b16 %v756, %v745
    %v1208 = vpack.c.b16 %v757, %v746
    %v1209 = vpack.c.b16 %v758, %v747
    %v1210 = vpack.c.b16 %v759, %v748
    %v1211 = vpack.c.b16 %v760, %v749
    %v1212 = vpack.c.b16 %v761, %v750
    %v1213 = vpack.c.b16 %v762, %v751
    %v1214 = vpack.c.b16 %v763, %v752
    %v1215 = vpack.c.b16 %v764, %v753
    %v1216 = vpack.c.b16 %v765, %v754
    %v1217 = vpack.c.b16 %v766, %v755
    %v1218 = vpack.c.b16 %v778, %v767
    %v1219 = vpack.c.b16 %v779, %v768
    %v1220 = vpack.c.b16 %v780, %v769
    %v1221 = vpack.c.b16 %v781, %v770
    %v1222 = vpack.c.b16 %v782, %v771
    %v1223 = vpack.c.b16 %v783, %v772
    %v1224 = vpack.c.b16 %v784, %v773
    %v1225 = vpack.c.b16 %v785, %v774
    %v1226 = vpack.c.b16 %v786, %v775
    %v1227 = vpack.c.b16 %v787, %v776
    %v1228 = vpack.c.b16 %v788, %v777
    %v1229 = vpack.c.b16 %v800, %v789
    %v1230 = vpack.c.b16 %v801, %v790
    %v1231 = vpack.c.b16 %v802, %v791
    %v1232 = vpack.c.b16 %v803, %v792
    %v1233 = vpack.c.b16 %v804, %v793
    %v1234 = vpack.c.b16 %v805, %v794
    %v1235 = vpack.c.b16 %v806, %v795
    %v1236 = vpack.c.b16 %v807, %v796
    %v1237 = vpack.c.b16 %v808, %v797
    %v1238 = vpack.c.b16 %v809, %v798
    %v1239 = vpack.c.b16 %v810, %v799
    %v1240 = vpack.c.b16 %v822, %v811
    %v1241 = vpack.c.b16 %v823, %v812
    %v1242 = vpack.c.b16 %v824, %v813
    %v1243 = vpack.c.b16 %v825, %v814
    %v1244 = vpack.c.b16 %v826, %v815
    %v1245 = vpack.c.b16 %v827, %v816
    %v1246 = vpack.c.b16 %v828, %v817
    %v1247 = vpack.c.b16 %v829, %v818
    %v1248 = vpack.c.b16 %v830, %v819
    %v1249 = vpack.c.b16 %v831, %v820
    %v1250 = vpack.c.b16 %v832, %v821
    %v1251 = vpack.c.b16 %v844, %v833
    %v1252 = vpack.c.b16 %v845, %v834
    %v1253 = vpack.c.b16 %v846, %v835
    %v1254 = vpack.c.b16 %v847, %v836
    %v1255 = vpack.c.b16 %v848, %v837
    %v1256 = vpack.c.b16 %v849, %v838
    %v1257 = vpack.c.b16 %v850, %v839
    %v1258 = vpack.c.b16 %v851, %v840
    %v1259 = vpack.c.b16 %v852, %v841
    %v1260 = vpack.c.b16 %v853, %v842
    %v1261 = vpack.c.b16 %v854, %v843
    %v1262 = vpack.c.b16 %v866, %v855
    %v1263 = vpack.c.b16 %v867, %v856
    %v1264 = vpack.c.b16 %v868, %v857
    %v1265 = vpack.c.b16 %v869, %v858
    %v1266 = vpack.c.b16 %v870, %v859
    %v1267 = vpack.c.b16 %v871, %v860
    %v1268 = vpack.c.b16 %v872, %v861
    %v1269 = vpack.c.b16 %v873, %v862
    %v1270 = vpack.c.b16 %v874, %v863
    %v1271 = vpack.c.b16 %v875, %v864
    %v1272 = vpack.c.b16 %v876, %v865
    %v1273 = vpack.c.b16 %v888, %v877
    %v1274 = vpack.c.b16 %v889, %v878
    %v1275 = vpack.c.b16 %v890, %v879
    %v1276 = vpack.c.b16 %v891, %v880
    %v1277 = vpack.c.b16 %v892, %v881
    %v1278 = vpack.c.b16 %v893, %v882
    %v1279 = vpack.c.b16 %v894, %v883
    %v1280 = vpack.c.b16 %v895, %v884
    %v1281 = vpack.c.b16 %v896, %v885
    %v1282 = vpack.c.b16 %v897, %v886
    %v1283 = vpack.c.b16 %v898, %v887
    %v1284 = vpack.c.b16 %v910, %v899
    %v1285 = vpack.c.b16 %v911, %v900
    %v1286 = vpack.c.b16 %v912, %v901
    %v1287 = vpack.c.b16 %v913, %v902
    %v1288 = vpack.c.b16 %v914, %v903
    %v1289 = vpack.c.b16 %v915, %v904
    %v1290 = vpack.c.b16 %v916, %v905
    %v1291 = vpack.c.b16 %v917, %v906
    %v1292 = vpack.c.b16 %v918, %v907
    %v1293 = vpack.c.b16 %v919, %v908
    %v1294 = vpack.c.b16 %v920, %v909
    %v1295 = vpack.c.b16 %v932, %v921
    %v1296 = vpack.c.b16 %v933, %v922
    %v1297 = vpack.c.b16 %v934, %v923
    %v1298 = vpack.c.b16 %v935, %v924
    %v1299 = vpack.c.b16 %v936, %v925
    %v1300 = vpack.c.b16 %v937, %v926
    %v1301 = vpack.c.b16 %v938, %v927
    %v1302 = vpack.c.b16 %v939, %v928
    %v1303 = vpack.c.b16 %v940, %v929
    %v1304 = vpack.c.b16 %v941, %v930
    %v1305 = vpack.c.b16 %v942, %v931
    %v1306 = vpack.c.b16 %v954, %v943
    %v1307 = vpack.c.b16 %v955, %v944
    %v1308 = vpack.c.b16 %v956, %v945
    %v1309 = vpack.c.b16 %v957, %v946
    %v1310 = vpack.c.b16 %v958, %v947
    %v1311 = vpack.c.b16 %v959, %v948
    %v1312 = vpack.c.b16 %v960, %v949
    %v1313 = vpack.c.b16 %v961, %v950
    %v1314 = vpack.c.b16 %v962, %v951
    %v1315 = vpack.c.b16 %v963, %v952
    %v1316 = vpack.c.b16 %v964, %v953
    %v1317 = vpack.c.b16 %v976, %v965
    %v1318 = vpack.c.b16 %v977, %v966
    %v1319 = vpack.c.b16 %v978, %v967
    %v1320 = vpack.c.b16 %v979, %v968
    %v1321 = vpack.c.b16 %v980, %v969
    %v1322 = vpack.c.b16 %v981, %v970
    %v1323 = vpack.c.b16 %v982, %v971
    %v1324 = vpack.c.b16 %v983, %v972
    %v1325 = vpack.c.b16 %v984, %v973
    %v1326 = vpack.c.b16 %v985, %v974
    %v1327 = vpack.c.b16 %v986, %v975
    %v1328 = vpack.c.b16 %v998, %v987
    %v1329 = vpack.c.b16 %v999, %v988
    %v1330 = vpack.c.b16 %v1000, %v989
    %v1331 = vpack.c.b16 %v1001, %v990
    %v1332 = vpack.c.b16 %v1002, %v991
    %v1333 = vpack.c.b16 %v1003, %v992
    %v1334 = vpack.c.b16 %v1004, %v993
    %v1335 = vpack.c.b16 %v1005, %v994
    %v1336 = vpack.c.b16 %v1006, %v995
    %v1337 = vpack.c.b16 %v1007, %v996
    %v1338 = vpack.c.b16 %v1008, %v997
    %v1339 = vpack.c.b16 %v1020, %v1009
    %v1340 = vpack.c.b16 %v1021, %v1010
    %v1341 = vpack.c.b16 %v1022, %v1011
    %v1342 = vpack.c.b16 %v1023, %v1012
    %v1343 = vpack.c.b16 %v1024, %v1013
    %v1344 = vpack.c.b16 %v1025, %v1014
    %v1345 = vpack.c.b16 %v1026, %v1015
    %v1346 = vpack.c.b16 %v1027, %v1016
    %v1347 = vpack.c.b16 %v1028, %v1017
    %v1348 = vpack.c.b16 %v1029, %v1018
    %v1349 = vpack.c.b16 %v1030, %v1019
    %v1350 = vpack.c.b16 %v1042, %v1031
    %v1351 = vpack.c.b16 %v1043, %v1032
    %v1352 = vpack.c.b16 %v1044, %v1033
    %v1353 = vpack.c.b16 %v1045, %v1034
    %v1354 = vpack.c.b16 %v1046, %v1035
    %v1355 = vpack.c.b16 %v1047, %v1036
    %v1356 = vpack.c.b16 %v1048, %v1037
    %v1357 = vpack.c.b16 %v1049, %v1038
    %v1358 = vpack.c.b16 %v1050, %v1039
    %v1359 = vpack.c.b16 %v1051, %v1040
    %v1360 = vpack.c.b16 %v1052, %v1041
    %v1361 = vpack.c.b16 %v1064, %v1053
    %v1362 = vpack.c.b16 %v1065, %v1054
    %v1363 = vpack.c.b16 %v1066, %v1055
    %v1364 = vpack.c.b16 %v1067, %v1056
    %v1365 = vpack.c.b16 %v1068, %v1057
    %v1366 = vpack.c.b16 %v1069, %v1058
    %v1367 = vpack.c.b16 %v1070, %v1059
    %v1368 = vpack.c.b16 %v1071, %v1060
    %v1369 = vpack.c.b16 %v1072, %v1061
    %v1370 = vpack.c.b16 %v1073, %v1062
    %v1371 = vpack.c.b16 %v1074, %v1063
    %v1372 = vpack.c.b16 %v1086, %v1075
    %v1373 = vpack.c.b16 %v1087, %v1076
    %v1374 = vpack.c.b16 %v1088, %v1077
    %v1375 = vpack.c.b16 %v1089, %v1078
    %v1376 = vpack.c.b16 %v1090, %v1079
    %v1377 = vpack.c.b16 %v1091, %v1080
    %v1378 = vpack.c.b16 %v1092, %v1081
    %v1379 = vpack.c.b16 %v1093, %v1082
    %v1380 = vpack.c.b16 %v1094, %v1083
    %v1381 = vpack.c.b16 %v1095, %v1084
    %v1382 = vpack.c.b16 %v1096, %v1085
    %v1383 = vpack.c.b16 %v1108, %v1097
    %v1384 = vpack.c.b16 %v1109, %v1098
    %v1385 = vpack.c.b16 %v1110, %v1099
    %v1386 = vpack.c.b16 %v1111, %v1100
    %v1387 = vpack.c.b16 %v1112, %v1101
    %v1388 = vpack.c.b16 %v1113, %v1102
    %v1389 = vpack.c.b16 %v1114, %v1103
    %v1390 = vpack.c.b16 %v1115, %v1104
    %v1391 = vpack.c.b16 %v1116, %v1105
    %v1392 = vpack.c.b16 %v1117, %v1106
    %v1393 = vpack.c.b16 %v1118, %v1107
    %v1394 = vpack.c.b16 %v1130, %v1119
    %v1395 = vpack.c.b16 %v1131, %v1120
    %v1396 = vpack.c.b16 %v1132, %v1121
    %v1397 = vpack.c.b16 %v1133, %v1122
    %v1398 = vpack.c.b16 %v1134, %v1123
    %v1399 = vpack.c.b16 %v1135, %v1124
    %v1400 = vpack.c.b16 %v1136, %v1125
    %v1401 = vpack.c.b16 %v1137, %v1126
    %v1402 = vpack.c.b16 %v1138, %v1127
    %v1403 = vpack.c.b16 %v1139, %v1128
    %v1404 = vpack.c.b16 %v1140, %v1129
    %v1405 = vpack.c.b16 %v1152, %v1141
    %v1406 = vpack.c.b16 %v1153, %v1142
    %v1407 = vpack.c.b16 %v1154, %v1143
    %v1408 = vpack.c.b16 %v1155, %v1144
    %v1409 = vpack.c.b16 %v1156, %v1145
    %v1410 = vpack.c.b16 %v1157, %v1146
    %v1411 = vpack.c.b16 %v1158, %v1147
    %v1412 = vpack.c.b16 %v1159, %v1148
    %v1413 = vpack.c.b16 %v1160, %v1149
    %v1414 = vpack.c.b16 %v1161, %v1150
    %v1415 = vpack.c.b16 %v1162, %v1151
    %v1416 = vpack.c.b16 %v1174, %v1163
    %v1417 = vpack.c.b16 %v1175, %v1164
    %v1418 = vpack.c.b16 %v1176, %v1165
    %v1419 = vpack.c.b16 %v1177, %v1166
    %v1420 = vpack.c.b16 %v1178, %v1167
    %v1421 = vpack.c.b16 %v1179, %v1168
    %v1422 = vpack.c.b16 %v1180, %v1169
    %v1423 = vpack.c.b16 %v1181, %v1170
    %v1424 = vpack.c.b16 %v1182, %v1171
    %v1425 = vpack.c.b16 %v1183, %v1172
    %v1426 = vpack.c.b16 %v1184, %v1173
    %vm1669 = vcmask 785408
    %v1671 = vsel %vm1669, %v429, 0
    %v1674 = vsel %vm1669, %v432, 0
    %1676 = vmatpush.bf16.msra.mxu0 %v1262
    %1677 = vmatpush.bf16.msra.mxu0 %v1251
    %1678 = vmatpush.bf16.msra.mxu0 %v1240
    %1679 = vmatpush.bf16.msra.mxu0 %v1229
    %1680 = vmatpush.bf16.msra.mxu0 %v1218
    %1681 = vmatpush.bf16.msra.mxu0 %v1207
    %1682 = vmatpush.bf16.msra.mxu0 %v1196
    %1683 = vmatpush.bf16.msra.mxu0 %v1185
    %1684 = vmatmul.bf16.gmra.mxu0 %v427
    %v1685 = vpop.f32.mrf.mxu0
    %v1686 = vadd.f32 %v385, %v1685
    %v1687 = vpop.f32.mrf.mxu0
    %v1688 = vadd.f32 %v385, %v1687
    %1689 = vmatmul.bf16.gmra.mxu0 %v430
    %v1690 = vpop.f32.mrf.mxu0
    %v1691 = vadd.f32 %v385, %v1690
    %v1692 = vpop.f32.mrf.mxu0
    %v1693 = vadd.f32 %v385, %v1692
    %1694 = vdwg.mxu0
    %1695 = vmatpush.bf16.msra.mxu0 %v1350
    %1696 = vmatpush.bf16.msra.mxu0 %v1339
    %1697 = vmatpush.bf16.msra.mxu0 %v1328
    %1698 = vmatpush.bf16.msra.mxu0 %v1317
    %1699 = vmatpush.bf16.msra.mxu0 %v1306
    %1700 = vmatpush.bf16.msra.mxu0 %v1295
    %1701 = vmatpush.bf16.msra.mxu0 %v1284
    %1702 = vmatpush.bf16.msra.mxu0 %v1273
    %1703 = vmatmul.bf16.gmra.mxu0 %v428
    %v1704 = vpop.f32.mrf.mxu0
    %v1705 = vadd.f32 %v1686, %v1704
    %v1706 = vpop.f32.mrf.mxu0
    %v1707 = vadd.f32 %v1688, %v1706
    %1708 = vmatmul.bf16.gmra.mxu0 %v431
    %v1709 = vpop.f32.mrf.mxu0
    %v1710 = vadd.f32 %v1691, %v1709
    %v1711 = vpop.f32.mrf.mxu0
    %v1712 = vadd.f32 %v1693, %v1711
    %1713 = vdwg.mxu0
    %1714 = vmatpush.bf16.msra.mxu0 0
    %1715 = vmatpush.bf16.msra.mxu0 0
    %1716 = vmatpush.bf16.msra.mxu0 %v1416
    %1717 = vmatpush.bf16.msra.mxu0 %v1405
    %1718 = vmatpush.bf16.msra.mxu0 %v1394
    %1719 = vmatpush.bf16.msra.mxu0 %v1383
    %1720 = vmatpush.bf16.msra.mxu0 %v1372
    %1721 = vmatpush.bf16.msra.mxu0 %v1361
    %1722 = vmatmul.bf16.gmra.mxu0 %v1671
    %v1723 = vpop.f32.mrf.mxu0
    %v1724 = vadd.f32 %v1705, %v1723
    %v1725 = vpop.f32.mrf.mxu0
    %v1726 = vadd.f32 %v1707, %v1725
    %1727 = vmatmul.bf16.gmra.mxu0 %v1674
    %v1728 = vpop.f32.mrf.mxu0
    %v1729 = vadd.f32 %v1710, %v1728
    %v1730 = vpop.f32.mrf.mxu0
    %v1731 = vadd.f32 %v1712, %v1730
    %1732 = vdwg.mxu0
    %1733 = vmatpush.bf16.msra.mxu0 %v1263
    %1734 = vmatpush.bf16.msra.mxu0 %v1252
    %1735 = vmatpush.bf16.msra.mxu0 %v1241
    %1736 = vmatpush.bf16.msra.mxu0 %v1230
    %1737 = vmatpush.bf16.msra.mxu0 %v1219
    %1738 = vmatpush.bf16.msra.mxu0 %v1208
    %1739 = vmatpush.bf16.msra.mxu0 %v1197
    %1740 = vmatpush.bf16.msra.mxu0 %v1186
    %1741 = vmatmul.bf16.gmra.mxu0 %v427
    %v1742 = vpop.f32.mrf.mxu0
    %v1743 = vadd.f32 %v386, %v1742
    %v1744 = vpop.f32.mrf.mxu0
    %v1745 = vadd.f32 %v386, %v1744
    %1746 = vmatmul.bf16.gmra.mxu0 %v430
    %v1747 = vpop.f32.mrf.mxu0
    %v1748 = vadd.f32 %v386, %v1747
    %v1749 = vpop.f32.mrf.mxu0
    %v1750 = vadd.f32 %v386, %v1749
    %1751 = vdwg.mxu0
    %1752 = vmatpush.bf16.msra.mxu0 %v1351
    %1753 = vmatpush.bf16.msra.mxu0 %v1340
    %1754 = vmatpush.bf16.msra.mxu0 %v1329
    %1755 = vmatpush.bf16.msra.mxu0 %v1318
    %1756 = vmatpush.bf16.msra.mxu0 %v1307
    %1757 = vmatpush.bf16.msra.mxu0 %v1296
    %1758 = vmatpush.bf16.msra.mxu0 %v1285
    %1759 = vmatpush.bf16.msra.mxu0 %v1274
    %1760 = vmatmul.bf16.gmra.mxu0 %v428
    %v1761 = vpop.f32.mrf.mxu0
    %v1762 = vadd.f32 %v1743, %v1761
    %v1763 = vpop.f32.mrf.mxu0
    %v1764 = vadd.f32 %v1745, %v1763
    %1765 = vmatmul.bf16.gmra.mxu0 %v431
    %v1766 = vpop.f32.mrf.mxu0
    %v1767 = vadd.f32 %v1748, %v1766
    %v1768 = vpop.f32.mrf.mxu0
    %v1769 = vadd.f32 %v1750, %v1768
    %1770 = vdwg.mxu0
    %1771 = vmatpush.bf16.msra.mxu0 0
    %1772 = vmatpush.bf16.msra.mxu0 0
    %1773 = vmatpush.bf16.msra.mxu0 %v1417
    %1774 = vmatpush.bf16.msra.mxu0 %v1406
    %1775 = vmatpush.bf16.msra.mxu0 %v1395
    %1776 = vmatpush.bf16.msra.mxu0 %v1384
    %1777 = vmatpush.bf16.msra.mxu0 %v1373
    %1778 = vmatpush.bf16.msra.mxu0 %v1362
    %1779 = vmatmul.bf16.gmra.mxu0 %v1671
    %v1780 = vpop.f32.mrf.mxu0
    %v1781 = vadd.f32 %v1762, %v1780
    %v1782 = vpop.f32.mrf.mxu0
    %v1783 = vadd.f32 %v1764, %v1782
    %1784 = vmatmul.bf16.gmra.mxu0 %v1674
    %v1785 = vpop.f32.mrf.mxu0
    %v1786 = vadd.f32 %v1767, %v1785
    %v1787 = vpop.f32.mrf.mxu0
    %v1788 = vadd.f32 %v1769, %v1787
    %1789 = vdwg.mxu0
    %1790 = vmatpush.bf16.msra.mxu0 %v1264
    %1791 = vmatpush.bf16.msra.mxu0 %v1253
    %1792 = vmatpush.bf16.msra.mxu0 %v1242
    %1793 = vmatpush.bf16.msra.mxu0 %v1231
    %1794 = vmatpush.bf16.msra.mxu0 %v1220
    %1795 = vmatpush.bf16.msra.mxu0 %v1209
    %1796 = vmatpush.bf16.msra.mxu0 %v1198
    %1797 = vmatpush.bf16.msra.mxu0 %v1187
    %1798 = vmatmul.bf16.gmra.mxu0 %v427
    %v1799 = vpop.f32.mrf.mxu0
    %v1800 = vadd.f32 %v387, %v1799
    %v1801 = vpop.f32.mrf.mxu0
    %v1802 = vadd.f32 %v387, %v1801
    %1803 = vmatmul.bf16.gmra.mxu0 %v430
    %v1804 = vpop.f32.mrf.mxu0
    %v1805 = vadd.f32 %v387, %v1804
    %v1806 = vpop.f32.mrf.mxu0
    %v1807 = vadd.f32 %v387, %v1806
    %1808 = vdwg.mxu0
    %1809 = vmatpush.bf16.msra.mxu0 %v1352
    %1810 = vmatpush.bf16.msra.mxu0 %v1341
    %1811 = vmatpush.bf16.msra.mxu0 %v1330
    %1812 = vmatpush.bf16.msra.mxu0 %v1319
    %1813 = vmatpush.bf16.msra.mxu0 %v1308
    %1814 = vmatpush.bf16.msra.mxu0 %v1297
    %1815 = vmatpush.bf16.msra.mxu0 %v1286
    %1816 = vmatpush.bf16.msra.mxu0 %v1275
    %1817 = vmatmul.bf16.gmra.mxu0 %v428
    %v1818 = vpop.f32.mrf.mxu0
    %v1819 = vadd.f32 %v1800, %v1818
    %v1820 = vpop.f32.mrf.mxu0
    %v1821 = vadd.f32 %v1802, %v1820
    %1822 = vmatmul.bf16.gmra.mxu0 %v431
    %v1823 = vpop.f32.mrf.mxu0
    %v1824 = vadd.f32 %v1805, %v1823
    %v1825 = vpop.f32.mrf.mxu0
    %v1826 = vadd.f32 %v1807, %v1825
    %1827 = vdwg.mxu0
    %1828 = vmatpush.bf16.msra.mxu0 0
    %1829 = vmatpush.bf16.msra.mxu0 0
    %1830 = vmatpush.bf16.msra.mxu0 %v1418
    %1831 = vmatpush.bf16.msra.mxu0 %v1407
    %1832 = vmatpush.bf16.msra.mxu0 %v1396
    %1833 = vmatpush.bf16.msra.mxu0 %v1385
    %1834 = vmatpush.bf16.msra.mxu0 %v1374
    %1835 = vmatpush.bf16.msra.mxu0 %v1363
    %1836 = vmatmul.bf16.gmra.mxu0 %v1671
    %v1837 = vpop.f32.mrf.mxu0
    %v1838 = vadd.f32 %v1819, %v1837
    %v1839 = vpop.f32.mrf.mxu0
    %v1840 = vadd.f32 %v1821, %v1839
    %1841 = vmatmul.bf16.gmra.mxu0 %v1674
    %v1842 = vpop.f32.mrf.mxu0
    %v1843 = vadd.f32 %v1824, %v1842
    %v1844 = vpop.f32.mrf.mxu0
    %v1845 = vadd.f32 %v1826, %v1844
    %1846 = vdwg.mxu0
    %1847 = vmatpush.bf16.msra.mxu0 %v1265
    %1848 = vmatpush.bf16.msra.mxu0 %v1254
    %1849 = vmatpush.bf16.msra.mxu0 %v1243
    %1850 = vmatpush.bf16.msra.mxu0 %v1232
    %1851 = vmatpush.bf16.msra.mxu0 %v1221
    %1852 = vmatpush.bf16.msra.mxu0 %v1210
    %1853 = vmatpush.bf16.msra.mxu0 %v1199
    %1854 = vmatpush.bf16.msra.mxu0 %v1188
    %1855 = vmatmul.bf16.gmra.mxu0 %v427
    %v1856 = vpop.f32.mrf.mxu0
    %v1857 = vadd.f32 %v388, %v1856
    %v1858 = vpop.f32.mrf.mxu0
    %v1859 = vadd.f32 %v388, %v1858
    %1860 = vmatmul.bf16.gmra.mxu0 %v430
    %v1861 = vpop.f32.mrf.mxu0
    %v1862 = vadd.f32 %v388, %v1861
    %v1863 = vpop.f32.mrf.mxu0
    %v1864 = vadd.f32 %v388, %v1863
    %1865 = vdwg.mxu0
    %1866 = vmatpush.bf16.msra.mxu0 %v1353
    %1867 = vmatpush.bf16.msra.mxu0 %v1342
    %1868 = vmatpush.bf16.msra.mxu0 %v1331
    %1869 = vmatpush.bf16.msra.mxu0 %v1320
    %1870 = vmatpush.bf16.msra.mxu0 %v1309
    %1871 = vmatpush.bf16.msra.mxu0 %v1298
    %1872 = vmatpush.bf16.msra.mxu0 %v1287
    %1873 = vmatpush.bf16.msra.mxu0 %v1276
    %1874 = vmatmul.bf16.gmra.mxu0 %v428
    %v1875 = vpop.f32.mrf.mxu0
    %v1876 = vadd.f32 %v1857, %v1875
    %v1877 = vpop.f32.mrf.mxu0
    %v1878 = vadd.f32 %v1859, %v1877
    %1879 = vmatmul.bf16.gmra.mxu0 %v431
    %v1880 = vpop.f32.mrf.mxu0
    %v1881 = vadd.f32 %v1862, %v1880
    %v1882 = vpop.f32.mrf.mxu0
    %v1883 = vadd.f32 %v1864, %v1882
    %1884 = vdwg.mxu0
    %1885 = vmatpush.bf16.msra.mxu0 0
    %1886 = vmatpush.bf16.msra.mxu0 0
    %1887 = vmatpush.bf16.msra.mxu0 %v1419
    %1888 = vmatpush.bf16.msra.mxu0 %v1408
    %1889 = vmatpush.bf16.msra.mxu0 %v1397
    %1890 = vmatpush.bf16.msra.mxu0 %v1386
    %1891 = vmatpush.bf16.msra.mxu0 %v1375
    %1892 = vmatpush.bf16.msra.mxu0 %v1364
    %1893 = vmatmul.bf16.gmra.mxu0 %v1671
    %v1894 = vpop.f32.mrf.mxu0
    %v1895 = vadd.f32 %v1876, %v1894
    %v1896 = vpop.f32.mrf.mxu0
    %v1897 = vadd.f32 %v1878, %v1896
    %1898 = vmatmul.bf16.gmra.mxu0 %v1674
    %v1899 = vpop.f32.mrf.mxu0
    %v1900 = vadd.f32 %v1881, %v1899
    %v1901 = vpop.f32.mrf.mxu0
    %v1902 = vadd.f32 %v1883, %v1901
    %1903 = vdwg.mxu0
    %1904 = vmatpush.bf16.msra.mxu0 %v1266
    %1905 = vmatpush.bf16.msra.mxu0 %v1255
    %1906 = vmatpush.bf16.msra.mxu0 %v1244
    %1907 = vmatpush.bf16.msra.mxu0 %v1233
    %1908 = vmatpush.bf16.msra.mxu0 %v1222
    %1909 = vmatpush.bf16.msra.mxu0 %v1211
    %1910 = vmatpush.bf16.msra.mxu0 %v1200
    %1911 = vmatpush.bf16.msra.mxu0 %v1189
    %1912 = vmatmul.bf16.gmra.mxu0 %v427
    %v1913 = vpop.f32.mrf.mxu0
    %v1914 = vadd.f32 %v389, %v1913
    %v1915 = vpop.f32.mrf.mxu0
    %v1916 = vadd.f32 %v389, %v1915
    %1917 = vmatmul.bf16.gmra.mxu0 %v430
    %v1918 = vpop.f32.mrf.mxu0
    %v1919 = vadd.f32 %v389, %v1918
    %v1920 = vpop.f32.mrf.mxu0
    %v1921 = vadd.f32 %v389, %v1920
    %1922 = vdwg.mxu0
    %1923 = vmatpush.bf16.msra.mxu0 %v1354
    %1924 = vmatpush.bf16.msra.mxu0 %v1343
    %1925 = vmatpush.bf16.msra.mxu0 %v1332
    %1926 = vmatpush.bf16.msra.mxu0 %v1321
    %1927 = vmatpush.bf16.msra.mxu0 %v1310
    %1928 = vmatpush.bf16.msra.mxu0 %v1299
    %1929 = vmatpush.bf16.msra.mxu0 %v1288
    %1930 = vmatpush.bf16.msra.mxu0 %v1277
    %1931 = vmatmul.bf16.gmra.mxu0 %v428
    %v1932 = vpop.f32.mrf.mxu0
    %v1933 = vadd.f32 %v1914, %v1932
    %v1934 = vpop.f32.mrf.mxu0
    %v1935 = vadd.f32 %v1916, %v1934
    %1936 = vmatmul.bf16.gmra.mxu0 %v431
    %v1937 = vpop.f32.mrf.mxu0
    %v1938 = vadd.f32 %v1919, %v1937
    %v1939 = vpop.f32.mrf.mxu0
    %v1940 = vadd.f32 %v1921, %v1939
    %1941 = vdwg.mxu0
    %1942 = vmatpush.bf16.msra.mxu0 0
    %1943 = vmatpush.bf16.msra.mxu0 0
    %1944 = vmatpush.bf16.msra.mxu0 %v1420
    %1945 = vmatpush.bf16.msra.mxu0 %v1409
    %1946 = vmatpush.bf16.msra.mxu0 %v1398
    %1947 = vmatpush.bf16.msra.mxu0 %v1387
    %1948 = vmatpush.bf16.msra.mxu0 %v1376
    %1949 = vmatpush.bf16.msra.mxu0 %v1365
    %1950 = vmatmul.bf16.gmra.mxu0 %v1671
    %v1951 = vpop.f32.mrf.mxu0
    %v1952 = vadd.f32 %v1933, %v1951
    %v1953 = vpop.f32.mrf.mxu0
    %v1954 = vadd.f32 %v1935, %v1953
    %1955 = vmatmul.bf16.gmra.mxu0 %v1674
    %v1956 = vpop.f32.mrf.mxu0
    %v1957 = vadd.f32 %v1938, %v1956
    %v1958 = vpop.f32.mrf.mxu0
    %v1959 = vadd.f32 %v1940, %v1958
    %1960 = vdwg.mxu0
    %1961 = vmatpush.bf16.msra.mxu0 %v1267
    %1962 = vmatpush.bf16.msra.mxu0 %v1256
    %1963 = vmatpush.bf16.msra.mxu0 %v1245
    %1964 = vmatpush.bf16.msra.mxu0 %v1234
    %1965 = vmatpush.bf16.msra.mxu0 %v1223
    %1966 = vmatpush.bf16.msra.mxu0 %v1212
    %1967 = vmatpush.bf16.msra.mxu0 %v1201
    %1968 = vmatpush.bf16.msra.mxu0 %v1190
    %1969 = vmatmul.bf16.gmra.mxu0 %v427
    %v1970 = vpop.f32.mrf.mxu0
    %v1971 = vadd.f32 %v390, %v1970
    %v1972 = vpop.f32.mrf.mxu0
    %v1973 = vadd.f32 %v390, %v1972
    %1974 = vmatmul.bf16.gmra.mxu0 %v430
    %v1975 = vpop.f32.mrf.mxu0
    %v1976 = vadd.f32 %v390, %v1975
    %v1977 = vpop.f32.mrf.mxu0
    %v1978 = vadd.f32 %v390, %v1977
    %1979 = vdwg.mxu0
    %1980 = vmatpush.bf16.msra.mxu0 %v1355
    %1981 = vmatpush.bf16.msra.mxu0 %v1344
    %1982 = vmatpush.bf16.msra.mxu0 %v1333
    %1983 = vmatpush.bf16.msra.mxu0 %v1322
    %1984 = vmatpush.bf16.msra.mxu0 %v1311
    %1985 = vmatpush.bf16.msra.mxu0 %v1300
    %1986 = vmatpush.bf16.msra.mxu0 %v1289
    %1987 = vmatpush.bf16.msra.mxu0 %v1278
    %1988 = vmatmul.bf16.gmra.mxu0 %v428
    %v1989 = vpop.f32.mrf.mxu0
    %v1990 = vadd.f32 %v1971, %v1989
    %v1991 = vpop.f32.mrf.mxu0
    %v1992 = vadd.f32 %v1973, %v1991
    %1993 = vmatmul.bf16.gmra.mxu0 %v431
    %v1994 = vpop.f32.mrf.mxu0
    %v1995 = vadd.f32 %v1976, %v1994
    %v1996 = vpop.f32.mrf.mxu0
    %v1997 = vadd.f32 %v1978, %v1996
    %1998 = vdwg.mxu0
    %1999 = vmatpush.bf16.msra.mxu0 0
    %2000 = vmatpush.bf16.msra.mxu0 0
    %2001 = vmatpush.bf16.msra.mxu0 %v1421
    %2002 = vmatpush.bf16.msra.mxu0 %v1410
    %2003 = vmatpush.bf16.msra.mxu0 %v1399
    %2004 = vmatpush.bf16.msra.mxu0 %v1388
    %2005 = vmatpush.bf16.msra.mxu0 %v1377
    %2006 = vmatpush.bf16.msra.mxu0 %v1366
    %2007 = vmatmul.bf16.gmra.mxu0 %v1671
    %v2008 = vpop.f32.mrf.mxu0
    %v2009 = vadd.f32 %v1990, %v2008
    %v2010 = vpop.f32.mrf.mxu0
    %v2011 = vadd.f32 %v1992, %v2010
    %2012 = vmatmul.bf16.gmra.mxu0 %v1674
    %v2013 = vpop.f32.mrf.mxu0
    %v2014 = vadd.f32 %v1995, %v2013
    %v2015 = vpop.f32.mrf.mxu0
    %v2016 = vadd.f32 %v1997, %v2015
    %2017 = vdwg.mxu0
    %2018 = vmatpush.bf16.msra.mxu0 %v1268
    %2019 = vmatpush.bf16.msra.mxu0 %v1257
    %2020 = vmatpush.bf16.msra.mxu0 %v1246
    %2021 = vmatpush.bf16.msra.mxu0 %v1235
    %2022 = vmatpush.bf16.msra.mxu0 %v1224
    %2023 = vmatpush.bf16.msra.mxu0 %v1213
    %2024 = vmatpush.bf16.msra.mxu0 %v1202
    %2025 = vmatpush.bf16.msra.mxu0 %v1191
    %2026 = vmatmul.bf16.gmra.mxu0 %v427
    %v2027 = vpop.f32.mrf.mxu0
    %v2028 = vadd.f32 %v391, %v2027
    %v2029 = vpop.f32.mrf.mxu0
    %v2030 = vadd.f32 %v391, %v2029
    %2031 = vmatmul.bf16.gmra.mxu0 %v430
    %v2032 = vpop.f32.mrf.mxu0
    %v2033 = vadd.f32 %v391, %v2032
    %v2034 = vpop.f32.mrf.mxu0
    %v2035 = vadd.f32 %v391, %v2034
    %2036 = vdwg.mxu0
    %2037 = vmatpush.bf16.msra.mxu0 %v1356
    %2038 = vmatpush.bf16.msra.mxu0 %v1345
    %2039 = vmatpush.bf16.msra.mxu0 %v1334
    %2040 = vmatpush.bf16.msra.mxu0 %v1323
    %2041 = vmatpush.bf16.msra.mxu0 %v1312
    %2042 = vmatpush.bf16.msra.mxu0 %v1301
    %2043 = vmatpush.bf16.msra.mxu0 %v1290
    %2044 = vmatpush.bf16.msra.mxu0 %v1279
    %2045 = vmatmul.bf16.gmra.mxu0 %v428
    %v2046 = vpop.f32.mrf.mxu0
    %v2047 = vadd.f32 %v2028, %v2046
    %v2048 = vpop.f32.mrf.mxu0
    %v2049 = vadd.f32 %v2030, %v2048
    %2050 = vmatmul.bf16.gmra.mxu0 %v431
    %v2051 = vpop.f32.mrf.mxu0
    %v2052 = vadd.f32 %v2033, %v2051
    %v2053 = vpop.f32.mrf.mxu0
    %v2054 = vadd.f32 %v2035, %v2053
    %2055 = vdwg.mxu0
    %2056 = vmatpush.bf16.msra.mxu0 0
    %2057 = vmatpush.bf16.msra.mxu0 0
    %2058 = vmatpush.bf16.msra.mxu0 %v1422
    %2059 = vmatpush.bf16.msra.mxu0 %v1411
    %2060 = vmatpush.bf16.msra.mxu0 %v1400
    %2061 = vmatpush.bf16.msra.mxu0 %v1389
    %2062 = vmatpush.bf16.msra.mxu0 %v1378
    %2063 = vmatpush.bf16.msra.mxu0 %v1367
    %2064 = vmatmul.bf16.gmra.mxu0 %v1671
    %v2065 = vpop.f32.mrf.mxu0
    %v2066 = vadd.f32 %v2047, %v2065
    %v2067 = vpop.f32.mrf.mxu0
    %v2068 = vadd.f32 %v2049, %v2067
    %2069 = vmatmul.bf16.gmra.mxu0 %v1674
    %v2070 = vpop.f32.mrf.mxu0
    %v2071 = vadd.f32 %v2052, %v2070
    %v2072 = vpop.f32.mrf.mxu0
    %v2073 = vadd.f32 %v2054, %v2072
    %2074 = vdwg.mxu0
    %2075 = vmatpush.bf16.msra.mxu0 %v1269
    %2076 = vmatpush.bf16.msra.mxu0 %v1258
    %2077 = vmatpush.bf16.msra.mxu0 %v1247
    %2078 = vmatpush.bf16.msra.mxu0 %v1236
    %2079 = vmatpush.bf16.msra.mxu0 %v1225
    %2080 = vmatpush.bf16.msra.mxu0 %v1214
    %2081 = vmatpush.bf16.msra.mxu0 %v1203
    %2082 = vmatpush.bf16.msra.mxu0 %v1192
    %2083 = vmatmul.bf16.gmra.mxu0 %v427
    %v2084 = vpop.f32.mrf.mxu0
    %v2085 = vadd.f32 %v392, %v2084
    %v2086 = vpop.f32.mrf.mxu0
    %v2087 = vadd.f32 %v392, %v2086
    %2088 = vmatmul.bf16.gmra.mxu0 %v430
    %v2089 = vpop.f32.mrf.mxu0
    %v2090 = vadd.f32 %v392, %v2089
    %v2091 = vpop.f32.mrf.mxu0
    %v2092 = vadd.f32 %v392, %v2091
    %2093 = vdwg.mxu0
    %2094 = vmatpush.bf16.msra.mxu0 %v1357
    %2095 = vmatpush.bf16.msra.mxu0 %v1346
    %2096 = vmatpush.bf16.msra.mxu0 %v1335
    %2097 = vmatpush.bf16.msra.mxu0 %v1324
    %2098 = vmatpush.bf16.msra.mxu0 %v1313
    %2099 = vmatpush.bf16.msra.mxu0 %v1302
    %2100 = vmatpush.bf16.msra.mxu0 %v1291
    %2101 = vmatpush.bf16.msra.mxu0 %v1280
    %2102 = vmatmul.bf16.gmra.mxu0 %v428
    %v2103 = vpop.f32.mrf.mxu0
    %v2104 = vadd.f32 %v2085, %v2103
    %v2105 = vpop.f32.mrf.mxu0
    %v2106 = vadd.f32 %v2087, %v2105
    %2107 = vmatmul.bf16.gmra.mxu0 %v431
    %v2108 = vpop.f32.mrf.mxu0
    %v2109 = vadd.f32 %v2090, %v2108
    %v2110 = vpop.f32.mrf.mxu0
    %v2111 = vadd.f32 %v2092, %v2110
    %2112 = vdwg.mxu0
    %2113 = vmatpush.bf16.msra.mxu0 0
    %2114 = vmatpush.bf16.msra.mxu0 0
    %2115 = vmatpush.bf16.msra.mxu0 %v1423
    %2116 = vmatpush.bf16.msra.mxu0 %v1412
    %2117 = vmatpush.bf16.msra.mxu0 %v1401
    %2118 = vmatpush.bf16.msra.mxu0 %v1390
    %2119 = vmatpush.bf16.msra.mxu0 %v1379
    %2120 = vmatpush.bf16.msra.mxu0 %v1368
    %2121 = vmatmul.bf16.gmra.mxu0 %v1671
    %v2122 = vpop.f32.mrf.mxu0
    %v2123 = vadd.f32 %v2104, %v2122
    %v2124 = vpop.f32.mrf.mxu0
    %v2125 = vadd.f32 %v2106, %v2124
    %2126 = vmatmul.bf16.gmra.mxu0 %v1674
    %v2127 = vpop.f32.mrf.mxu0
    %v2128 = vadd.f32 %v2109, %v2127
    %v2129 = vpop.f32.mrf.mxu0
    %v2130 = vadd.f32 %v2111, %v2129
    %2131 = vdwg.mxu0
    %2132 = vmatpush.bf16.msra.mxu0 %v1270
    %2133 = vmatpush.bf16.msra.mxu0 %v1259
    %2134 = vmatpush.bf16.msra.mxu0 %v1248
    %2135 = vmatpush.bf16.msra.mxu0 %v1237
    %2136 = vmatpush.bf16.msra.mxu0 %v1226
    %2137 = vmatpush.bf16.msra.mxu0 %v1215
    %2138 = vmatpush.bf16.msra.mxu0 %v1204
    %2139 = vmatpush.bf16.msra.mxu0 %v1193
    %2140 = vmatmul.bf16.gmra.mxu0 %v427
    %v2141 = vpop.f32.mrf.mxu0
    %v2142 = vadd.f32 %v393, %v2141
    %v2143 = vpop.f32.mrf.mxu0
    %v2144 = vadd.f32 %v393, %v2143
    %2145 = vmatmul.bf16.gmra.mxu0 %v430
    %v2146 = vpop.f32.mrf.mxu0
    %v2147 = vadd.f32 %v393, %v2146
    %v2148 = vpop.f32.mrf.mxu0
    %v2149 = vadd.f32 %v393, %v2148
    %2150 = vdwg.mxu0
    %2151 = vmatpush.bf16.msra.mxu0 %v1358
    %2152 = vmatpush.bf16.msra.mxu0 %v1347
    %2153 = vmatpush.bf16.msra.mxu0 %v1336
    %2154 = vmatpush.bf16.msra.mxu0 %v1325
    %2155 = vmatpush.bf16.msra.mxu0 %v1314
    %2156 = vmatpush.bf16.msra.mxu0 %v1303
    %2157 = vmatpush.bf16.msra.mxu0 %v1292
    %2158 = vmatpush.bf16.msra.mxu0 %v1281
    %2159 = vmatmul.bf16.gmra.mxu0 %v428
    %v2160 = vpop.f32.mrf.mxu0
    %v2161 = vadd.f32 %v2142, %v2160
    %v2162 = vpop.f32.mrf.mxu0
    %v2163 = vadd.f32 %v2144, %v2162
    %2164 = vmatmul.bf16.gmra.mxu0 %v431
    %v2165 = vpop.f32.mrf.mxu0
    %v2166 = vadd.f32 %v2147, %v2165
    %v2167 = vpop.f32.mrf.mxu0
    %v2168 = vadd.f32 %v2149, %v2167
    %2169 = vdwg.mxu0
    %2170 = vmatpush.bf16.msra.mxu0 0
    %2171 = vmatpush.bf16.msra.mxu0 0
    %2172 = vmatpush.bf16.msra.mxu0 %v1424
    %2173 = vmatpush.bf16.msra.mxu0 %v1413
    %2174 = vmatpush.bf16.msra.mxu0 %v1402
    %2175 = vmatpush.bf16.msra.mxu0 %v1391
    %2176 = vmatpush.bf16.msra.mxu0 %v1380
    %2177 = vmatpush.bf16.msra.mxu0 %v1369
    %2178 = vmatmul.bf16.gmra.mxu0 %v1671
    %v2179 = vpop.f32.mrf.mxu0
    %v2180 = vadd.f32 %v2161, %v2179
    %v2181 = vpop.f32.mrf.mxu0
    %v2182 = vadd.f32 %v2163, %v2181
    %2183 = vmatmul.bf16.gmra.mxu0 %v1674
    %v2184 = vpop.f32.mrf.mxu0
    %v2185 = vadd.f32 %v2166, %v2184
    %v2186 = vpop.f32.mrf.mxu0
    %v2187 = vadd.f32 %v2168, %v2186
    %2188 = vdwg.mxu0
    %2189 = vmatpush.bf16.msra.mxu0 %v1271
    %2190 = vmatpush.bf16.msra.mxu0 %v1260
    %2191 = vmatpush.bf16.msra.mxu0 %v1249
    %2192 = vmatpush.bf16.msra.mxu0 %v1238
    %2193 = vmatpush.bf16.msra.mxu0 %v1227
    %2194 = vmatpush.bf16.msra.mxu0 %v1216
    %2195 = vmatpush.bf16.msra.mxu0 %v1205
    %2196 = vmatpush.bf16.msra.mxu0 %v1194
    %2197 = vmatmul.bf16.gmra.mxu0 %v427
    %v2198 = vpop.f32.mrf.mxu0
    %v2199 = vadd.f32 %v394, %v2198
    %v2200 = vpop.f32.mrf.mxu0
    %v2201 = vadd.f32 %v394, %v2200
    %2202 = vmatmul.bf16.gmra.mxu0 %v430
    %v2203 = vpop.f32.mrf.mxu0
    %v2204 = vadd.f32 %v394, %v2203
    %v2205 = vpop.f32.mrf.mxu0
    %v2206 = vadd.f32 %v394, %v2205
    %2207 = vdwg.mxu0
    %2208 = vmatpush.bf16.msra.mxu0 %v1359
    %2209 = vmatpush.bf16.msra.mxu0 %v1348
    %2210 = vmatpush.bf16.msra.mxu0 %v1337
    %2211 = vmatpush.bf16.msra.mxu0 %v1326
    %2212 = vmatpush.bf16.msra.mxu0 %v1315
    %2213 = vmatpush.bf16.msra.mxu0 %v1304
    %2214 = vmatpush.bf16.msra.mxu0 %v1293
    %2215 = vmatpush.bf16.msra.mxu0 %v1282
    %2216 = vmatmul.bf16.gmra.mxu0 %v428
    %v2217 = vpop.f32.mrf.mxu0
    %v2218 = vadd.f32 %v2199, %v2217
    %v2219 = vpop.f32.mrf.mxu0
    %v2220 = vadd.f32 %v2201, %v2219
    %2221 = vmatmul.bf16.gmra.mxu0 %v431
    %v2222 = vpop.f32.mrf.mxu0
    %v2223 = vadd.f32 %v2204, %v2222
    %v2224 = vpop.f32.mrf.mxu0
    %v2225 = vadd.f32 %v2206, %v2224
    %2226 = vdwg.mxu0
    %2227 = vmatpush.bf16.msra.mxu0 0
    %2228 = vmatpush.bf16.msra.mxu0 0
    %2229 = vmatpush.bf16.msra.mxu0 %v1425
    %2230 = vmatpush.bf16.msra.mxu0 %v1414
    %2231 = vmatpush.bf16.msra.mxu0 %v1403
    %2232 = vmatpush.bf16.msra.mxu0 %v1392
    %2233 = vmatpush.bf16.msra.mxu0 %v1381
    %2234 = vmatpush.bf16.msra.mxu0 %v1370
    %2235 = vmatmul.bf16.gmra.mxu0 %v1671
    %v2236 = vpop.f32.mrf.mxu0
    %v2237 = vadd.f32 %v2218, %v2236
    %v2238 = vpop.f32.mrf.mxu0
    %v2239 = vadd.f32 %v2220, %v2238
    %2240 = vmatmul.bf16.gmra.mxu0 %v1674
    %v2241 = vpop.f32.mrf.mxu0
    %v2242 = vadd.f32 %v2223, %v2241
    %v2243 = vpop.f32.mrf.mxu0
    %v2244 = vadd.f32 %v2225, %v2243
    %2245 = vdwg.mxu0
    %2246 = vmatpush.bf16.msra.mxu0 %v1272
    %2247 = vmatpush.bf16.msra.mxu0 %v1261
    %2248 = vmatpush.bf16.msra.mxu0 %v1250
    %2249 = vmatpush.bf16.msra.mxu0 %v1239
    %2250 = vmatpush.bf16.msra.mxu0 %v1228
    %2251 = vmatpush.bf16.msra.mxu0 %v1217
    %2252 = vmatpush.bf16.msra.mxu0 %v1206
    %2253 = vmatpush.bf16.msra.mxu0 %v1195
    %2254 = vmatmul.bf16.gmra.mxu0 %v427
    %v2255 = vpop.f32.mrf.mxu0
    %v2256 = vadd.f32 %v395, %v2255
    %v2257 = vpop.f32.mrf.mxu0
    %v2258 = vadd.f32 %v395, %v2257
    %2259 = vmatmul.bf16.gmra.mxu0 %v430
    %v2260 = vpop.f32.mrf.mxu0
    %v2261 = vadd.f32 %v395, %v2260
    %v2262 = vpop.f32.mrf.mxu0
    %v2263 = vadd.f32 %v395, %v2262
    %2264 = vdwg.mxu0
    %2265 = vmatpush.bf16.msra.mxu0 %v1360
    %2266 = vmatpush.bf16.msra.mxu0 %v1349
    %2267 = vmatpush.bf16.msra.mxu0 %v1338
    %2268 = vmatpush.bf16.msra.mxu0 %v1327
    %2269 = vmatpush.bf16.msra.mxu0 %v1316
    %2270 = vmatpush.bf16.msra.mxu0 %v1305
    %2271 = vmatpush.bf16.msra.mxu0 %v1294
    %2272 = vmatpush.bf16.msra.mxu0 %v1283
    %2273 = vmatmul.bf16.gmra.mxu0 %v428
    %v2274 = vpop.f32.mrf.mxu0
    %v2275 = vadd.f32 %v2256, %v2274
    %v2276 = vpop.f32.mrf.mxu0
    %v2277 = vadd.f32 %v2258, %v2276
    %2278 = vmatmul.bf16.gmra.mxu0 %v431
    %v2279 = vpop.f32.mrf.mxu0
    %v2280 = vadd.f32 %v2261, %v2279
    %v2281 = vpop.f32.mrf.mxu0
    %v2282 = vadd.f32 %v2263, %v2281
    %2283 = vdwg.mxu0
    %2284 = vmatpush.bf16.msra.mxu0 0
    %2285 = vmatpush.bf16.msra.mxu0 0
    %2286 = vmatpush.bf16.msra.mxu0 %v1426
    %2287 = vmatpush.bf16.msra.mxu0 %v1415
    %2288 = vmatpush.bf16.msra.mxu0 %v1404
    %2289 = vmatpush.bf16.msra.mxu0 %v1393
    %2290 = vmatpush.bf16.msra.mxu0 %v1382
    %2291 = vmatpush.bf16.msra.mxu0 %v1371
    %2292 = vmatmul.bf16.gmra.mxu0 %v1671
    %v2293 = vpop.f32.mrf.mxu0
    %v2294 = vadd.f32 %v2275, %v2293
    %v2295 = vpop.f32.mrf.mxu0
    %v2296 = vadd.f32 %v2277, %v2295
    %2297 = vmatmul.bf16.gmra.mxu0 %v1674
    %v2298 = vpop.f32.mrf.mxu0
    %v2299 = vadd.f32 %v2280, %v2298
    %v2300 = vpop.f32.mrf.mxu0
    %v2301 = vadd.f32 %v2282, %v2300
    %2302 = vdwg.mxu0
    %v2303 = vmul.f32 %v1724, 0.5
    %v2304 = vmul.f32 %v1781, 0.5
    %v2305 = vmul.f32 %v1838, 0.5
    %v2306 = vmul.f32 %v1895, 0.5
    %v2307 = vmul.f32 %v1952, 0.5
    %v2308 = vmul.f32 %v2009, 0.5
    %v2309 = vmul.f32 %v2066, 0.5
    %v2310 = vmul.f32 %v2123, 0.5
    %v2311 = vmul.f32 %v2180, 0.5
    %v2312 = vmul.f32 %v2237, 0.5
    %v2313 = vmul.f32 %v2294, 0.5
    %v2314 = vmul.f32 %v1726, 0.5
    %v2315 = vmul.f32 %v1783, 0.5
    %v2316 = vmul.f32 %v1840, 0.5
    %v2317 = vmul.f32 %v1897, 0.5
    %v2318 = vmul.f32 %v1954, 0.5
    %v2319 = vmul.f32 %v2011, 0.5
    %v2320 = vmul.f32 %v2068, 0.5
    %v2321 = vmul.f32 %v2125, 0.5
    %v2322 = vmul.f32 %v2182, 0.5
    %v2323 = vmul.f32 %v2239, 0.5
    %v2324 = vmul.f32 %v2296, 0.5
    %v2325 = vmul.f32 %v1729, 0.5
    %v2326 = vmul.f32 %v1786, 0.5
    %v2327 = vmul.f32 %v1843, 0.5
    %v2328 = vmul.f32 %v1900, 0.5
    %v2329 = vmul.f32 %v1957, 0.5
    %v2330 = vmul.f32 %v2014, 0.5
    %v2331 = vmul.f32 %v2071, 0.5
    %v2332 = vmul.f32 %v2128, 0.5
    %v2333 = vmul.f32 %v2185, 0.5
    %v2334 = vmul.f32 %v2242, 0.5
    %v2335 = vmul.f32 %v2299, 0.5
    %v2336 = vmul.f32 %v1731, 0.5
    %v2337 = vmul.f32 %v1788, 0.5
    %v2338 = vmul.f32 %v1845, 0.5
    %v2339 = vmul.f32 %v1902, 0.5
    %v2340 = vmul.f32 %v1959, 0.5
    %v2341 = vmul.f32 %v2016, 0.5
    %v2342 = vmul.f32 %v2073, 0.5
    %v2343 = vmul.f32 %v2130, 0.5
    %v2344 = vmul.f32 %v2187, 0.5
    %v2345 = vmul.f32 %v2244, 0.5
    %v2346 = vmul.f32 %v2301, 0.5
    %v2347 = vtanh.pop %v2303
    %v2348 = vtanh.pop %v2304
    %v2349 = vtanh.pop %v2305
    %v2350 = vtanh.pop %v2306
    %v2351 = vtanh.pop %v2307
    %v2352 = vtanh.pop %v2308
    %v2353 = vtanh.pop %v2309
    %v2354 = vtanh.pop %v2310
    %v2355 = vtanh.pop %v2311
    %v2356 = vtanh.pop %v2312
    %v2357 = vtanh.pop %v2313
    %v2358 = vtanh.pop %v2314
    %v2359 = vtanh.pop %v2315
    %v2360 = vtanh.pop %v2316
    %v2361 = vtanh.pop %v2317
    %v2362 = vtanh.pop %v2318
    %v2363 = vtanh.pop %v2319
    %v2364 = vtanh.pop %v2320
    %v2365 = vtanh.pop %v2321
    %v2366 = vtanh.pop %v2322
    %v2367 = vtanh.pop %v2323
    %v2368 = vtanh.pop %v2324
    %v2369 = vtanh.pop %v2325
    %v2370 = vtanh.pop %v2326
    %v2371 = vtanh.pop %v2327
    %v2372 = vtanh.pop %v2328
    %v2373 = vtanh.pop %v2329
    %v2374 = vtanh.pop %v2330
    %v2375 = vtanh.pop %v2331
    %v2376 = vtanh.pop %v2332
    %v2377 = vtanh.pop %v2333
    %v2378 = vtanh.pop %v2334
    %v2379 = vtanh.pop %v2335
    %v2380 = vtanh.pop %v2336
    %v2381 = vtanh.pop %v2337
    %v2382 = vtanh.pop %v2338
    %v2383 = vtanh.pop %v2339
    %v2384 = vtanh.pop %v2340
    %v2385 = vtanh.pop %v2341
    %v2386 = vtanh.pop %v2342
    %v2387 = vtanh.pop %v2343
    %v2388 = vtanh.pop %v2344
    %v2389 = vtanh.pop %v2345
    %v2390 = vtanh.pop %v2346
    %v2391 = vmul.f32 %v2347, 0.5
    %v2392 = vmul.f32 %v2348, 0.5
    %v2393 = vmul.f32 %v2349, 0.5
    %v2394 = vmul.f32 %v2350, 0.5
    %v2395 = vmul.f32 %v2351, 0.5
    %v2396 = vmul.f32 %v2352, 0.5
    %v2397 = vmul.f32 %v2353, 0.5
    %v2398 = vmul.f32 %v2354, 0.5
    %v2399 = vmul.f32 %v2355, 0.5
    %v2400 = vmul.f32 %v2356, 0.5
    %v2401 = vmul.f32 %v2357, 0.5
    %v2402 = vmul.f32 %v2358, 0.5
    %v2403 = vmul.f32 %v2359, 0.5
    %v2404 = vmul.f32 %v2360, 0.5
    %v2405 = vmul.f32 %v2361, 0.5
    %v2406 = vmul.f32 %v2362, 0.5
    %v2407 = vmul.f32 %v2363, 0.5
    %v2408 = vmul.f32 %v2364, 0.5
    %v2409 = vmul.f32 %v2365, 0.5
    %v2410 = vmul.f32 %v2366, 0.5
    %v2411 = vmul.f32 %v2367, 0.5
    %v2412 = vmul.f32 %v2368, 0.5
    %v2413 = vmul.f32 %v2369, 0.5
    %v2414 = vmul.f32 %v2370, 0.5
    %v2415 = vmul.f32 %v2371, 0.5
    %v2416 = vmul.f32 %v2372, 0.5
    %v2417 = vmul.f32 %v2373, 0.5
    %v2418 = vmul.f32 %v2374, 0.5
    %v2419 = vmul.f32 %v2375, 0.5
    %v2420 = vmul.f32 %v2376, 0.5
    %v2421 = vmul.f32 %v2377, 0.5
    %v2422 = vmul.f32 %v2378, 0.5
    %v2423 = vmul.f32 %v2379, 0.5
    %v2424 = vmul.f32 %v2380, 0.5
    %v2425 = vmul.f32 %v2381, 0.5
    %v2426 = vmul.f32 %v2382, 0.5
    %v2427 = vmul.f32 %v2383, 0.5
    %v2428 = vmul.f32 %v2384, 0.5
    %v2429 = vmul.f32 %v2385, 0.5
    %v2430 = vmul.f32 %v2386, 0.5
    %v2431 = vmul.f32 %v2387, 0.5
    %v2432 = vmul.f32 %v2388, 0.5
    %v2433 = vmul.f32 %v2389, 0.5
    %v2434 = vmul.f32 %v2390, 0.5
    %v2435 = vadd.f32 %v2391, 0.5
    %v2436 = vadd.f32 %v2392, 0.5
    %v2437 = vadd.f32 %v2393, 0.5
    %v2438 = vadd.f32 %v2394, 0.5
    %v2439 = vadd.f32 %v2395, 0.5
    %v2440 = vadd.f32 %v2396, 0.5
    %v2441 = vadd.f32 %v2397, 0.5
    %v2442 = vadd.f32 %v2398, 0.5
    %v2443 = vadd.f32 %v2399, 0.5
    %v2444 = vadd.f32 %v2400, 0.5
    %v2445 = vadd.f32 %v2401, 0.5
    %v2446 = vadd.f32 %v2402, 0.5
    %v2447 = vadd.f32 %v2403, 0.5
    %v2448 = vadd.f32 %v2404, 0.5
    %v2449 = vadd.f32 %v2405, 0.5
    %v2450 = vadd.f32 %v2406, 0.5
    %v2451 = vadd.f32 %v2407, 0.5
    %v2452 = vadd.f32 %v2408, 0.5
    %v2453 = vadd.f32 %v2409, 0.5
    %v2454 = vadd.f32 %v2410, 0.5
    %v2455 = vadd.f32 %v2411, 0.5
    %v2456 = vadd.f32 %v2412, 0.5
    %v2457 = vadd.f32 %v2413, 0.5
    %v2458 = vadd.f32 %v2414, 0.5
    %v2459 = vadd.f32 %v2415, 0.5
    %v2460 = vadd.f32 %v2416, 0.5
    %v2461 = vadd.f32 %v2417, 0.5
    %v2462 = vadd.f32 %v2418, 0.5
    %v2463 = vadd.f32 %v2419, 0.5
    %v2464 = vadd.f32 %v2420, 0.5
    %v2465 = vadd.f32 %v2421, 0.5
    %v2466 = vadd.f32 %v2422, 0.5
    %v2467 = vadd.f32 %v2423, 0.5
    %v2468 = vadd.f32 %v2424, 0.5
    %v2469 = vadd.f32 %v2425, 0.5
    %v2470 = vadd.f32 %v2426, 0.5
    %v2471 = vadd.f32 %v2427, 0.5
    %v2472 = vadd.f32 %v2428, 0.5
    %v2473 = vadd.f32 %v2429, 0.5
    %v2474 = vadd.f32 %v2430, 0.5
    %v2475 = vadd.f32 %v2431, 0.5
    %v2476 = vadd.f32 %v2432, 0.5
    %v2477 = vadd.f32 %v2433, 0.5
    %v2478 = vadd.f32 %v2434, 0.5
    %v2479 = vmul.f32 %v1724, %v2435
    %v2480 = vmul.f32 %v1781, %v2436
    %v2481 = vmul.f32 %v1838, %v2437
    %v2482 = vmul.f32 %v1895, %v2438
    %v2483 = vmul.f32 %v1952, %v2439
    %v2484 = vmul.f32 %v2009, %v2440
    %v2485 = vmul.f32 %v2066, %v2441
    %v2486 = vmul.f32 %v2123, %v2442
    %v2487 = vmul.f32 %v2180, %v2443
    %v2488 = vmul.f32 %v2237, %v2444
    %v2489 = vmul.f32 %v2294, %v2445
    %v2490 = vmul.f32 %v1726, %v2446
    %v2491 = vmul.f32 %v1783, %v2447
    %v2492 = vmul.f32 %v1840, %v2448
    %v2493 = vmul.f32 %v1897, %v2449
    %v2494 = vmul.f32 %v1954, %v2450
    %v2495 = vmul.f32 %v2011, %v2451
    %v2496 = vmul.f32 %v2068, %v2452
    %v2497 = vmul.f32 %v2125, %v2453
    %v2498 = vmul.f32 %v2182, %v2454
    %v2499 = vmul.f32 %v2239, %v2455
    %v2500 = vmul.f32 %v2296, %v2456
    %v2501 = vmul.f32 %v1729, %v2457
    %v2502 = vmul.f32 %v1786, %v2458
    %v2503 = vmul.f32 %v1843, %v2459
    %v2504 = vmul.f32 %v1900, %v2460
    %v2505 = vmul.f32 %v1957, %v2461
    %v2506 = vmul.f32 %v2014, %v2462
    %v2507 = vmul.f32 %v2071, %v2463
    %v2508 = vmul.f32 %v2128, %v2464
    %v2509 = vmul.f32 %v2185, %v2465
    %v2510 = vmul.f32 %v2242, %v2466
    %v2511 = vmul.f32 %v2299, %v2467
    %v2512 = vmul.f32 %v1731, %v2468
    %v2513 = vmul.f32 %v1788, %v2469
    %v2514 = vmul.f32 %v1845, %v2470
    %v2515 = vmul.f32 %v1902, %v2471
    %v2516 = vmul.f32 %v1959, %v2472
    %v2517 = vmul.f32 %v2016, %v2473
    %v2518 = vmul.f32 %v2073, %v2474
    %v2519 = vmul.f32 %v2130, %v2475
    %v2520 = vmul.f32 %v2187, %v2476
    %v2521 = vmul.f32 %v2244, %v2477
    %v2522 = vmul.f32 %v2301, %v2478
    %v2523 = vld [vmem:[#allocation2] sm:$0xff]
    %v2524 = vld [vmem:[#allocation2 + $0x8] sm:$0xff]
    %v2525 = vld [vmem:[#allocation2 + $0x10] sm:$0xff]
    %v2526 = vld [vmem:[#allocation2 + $0x18] sm:$0xff]
    %v2527 = vld [vmem:[#allocation2 + $0x20] sm:$0xff]
    %v2528 = vld [vmem:[#allocation2 + $0x28] sm:$0xff]
    %v2529 = vld [vmem:[#allocation2 + $0x30] sm:$0xff]
    %v2530 = vld [vmem:[#allocation2 + $0x38] sm:$0xff]
    %v2531 = vld [vmem:[#allocation2 + $0x40] sm:$0xff]
    %v2532 = vld [vmem:[#allocation2 + $0x48] sm:$0xff]
    %v2533 = vld [vmem:[#allocation2 + $0x50] sm:$0xff]
    %v2534 = vadd.f32 %v2479, %v2490
    %v2535 = vadd.f32 %v2480, %v2491
    %v2536 = vadd.f32 %v2481, %v2492
    %v2537 = vadd.f32 %v2482, %v2493
    %v2538 = vadd.f32 %v2483, %v2494
    %v2539 = vadd.f32 %v2484, %v2495
    %v2540 = vadd.f32 %v2485, %v2496
    %v2541 = vadd.f32 %v2486, %v2497
    %v2542 = vadd.f32 %v2487, %v2498
    %v2543 = vadd.f32 %v2488, %v2499
    %v2544 = vadd.f32 %v2489, %v2500
    %v2545 = vadd.f32 %v2523, %v2534
    %v2546 = vadd.f32 %v2524, %v2535
    %v2547 = vadd.f32 %v2525, %v2536
    %v2548 = vadd.f32 %v2526, %v2537
    %v2549 = vadd.f32 %v2527, %v2538
    %v2550 = vadd.f32 %v2528, %v2539
    %v2551 = vadd.f32 %v2529, %v2540
    %v2552 = vadd.f32 %v2530, %v2541
    %v2553 = vadd.f32 %v2531, %v2542
    %v2554 = vadd.f32 %v2532, %v2543
    %v2555 = vadd.f32 %v2533, %v2544
    %2556 = vst [vmem:[#allocation2] sm:$0xff] %v2545
    %2557 = vst [vmem:[#allocation2 + $0x8] sm:$0xff] %v2546
    %2558 = vst [vmem:[#allocation2 + $0x10] sm:$0xff] %v2547
    %2559 = vst [vmem:[#allocation2 + $0x18] sm:$0xff] %v2548
    %2560 = vst [vmem:[#allocation2 + $0x20] sm:$0xff] %v2549
    %2561 = vst [vmem:[#allocation2 + $0x28] sm:$0xff] %v2550
    %2562 = vst [vmem:[#allocation2 + $0x30] sm:$0xff] %v2551
    %2563 = vst [vmem:[#allocation2 + $0x38] sm:$0xff] %v2552
    %2564 = vst [vmem:[#allocation2 + $0x40] sm:$0xff] %v2553
    %2565 = vst [vmem:[#allocation2 + $0x48] sm:$0xff] %v2554
    %2566 = vst [vmem:[#allocation2 + $0x50] sm:$0xff] %v2555
    %s2567 = scalar_lea.vmem [#allocation2], 88
    %v2568 = vld [vmem:[%s2567] sm:$0xff]
    %v2569 = vld [vmem:[%s2567 + $0x8] sm:$0xff]
    %v2570 = vld [vmem:[%s2567 + $0x10] sm:$0xff]
    %v2571 = vld [vmem:[%s2567 + $0x18] sm:$0xff]
    %v2572 = vld [vmem:[%s2567 + $0x20] sm:$0xff]
    %v2573 = vld [vmem:[%s2567 + $0x28] sm:$0xff]
    %v2574 = vld [vmem:[%s2567 + $0x30] sm:$0xff]
    %v2575 = vld [vmem:[%s2567 + $0x38] sm:$0xff]
    %v2576 = vld [vmem:[%s2567 + $0x40] sm:$0xff]
    %v2577 = vld [vmem:[%s2567 + $0x48] sm:$0xff]
    %v2578 = vld [vmem:[%s2567 + $0x50] sm:$0xff]
    %v2579 = vadd.f32 %v2501, %v2512
    %v2580 = vadd.f32 %v2502, %v2513
    %v2581 = vadd.f32 %v2503, %v2514
    %v2582 = vadd.f32 %v2504, %v2515
    %v2583 = vadd.f32 %v2505, %v2516
    %v2584 = vadd.f32 %v2506, %v2517
    %v2585 = vadd.f32 %v2507, %v2518
    %v2586 = vadd.f32 %v2508, %v2519
    %v2587 = vadd.f32 %v2509, %v2520
    %v2588 = vadd.f32 %v2510, %v2521
    %v2589 = vadd.f32 %v2511, %v2522
    %v2590 = vadd.f32 %v2568, %v2579
    %v2591 = vadd.f32 %v2569, %v2580
    %v2592 = vadd.f32 %v2570, %v2581
    %v2593 = vadd.f32 %v2571, %v2582
    %v2594 = vadd.f32 %v2572, %v2583
    %v2595 = vadd.f32 %v2573, %v2584
    %v2596 = vadd.f32 %v2574, %v2585
    %v2597 = vadd.f32 %v2575, %v2586
    %v2598 = vadd.f32 %v2576, %v2587
    %v2599 = vadd.f32 %v2577, %v2588
    %v2600 = vadd.f32 %v2578, %v2589
    %2601 = vst [vmem:[%s2567] sm:$0xff] %v2590
    %2602 = vst [vmem:[%s2567 + $0x8] sm:$0xff] %v2591
    %2603 = vst [vmem:[%s2567 + $0x10] sm:$0xff] %v2592
    %2604 = vst [vmem:[%s2567 + $0x18] sm:$0xff] %v2593
    %2605 = vst [vmem:[%s2567 + $0x20] sm:$0xff] %v2594
    %2606 = vst [vmem:[%s2567 + $0x28] sm:$0xff] %v2595
    %2607 = vst [vmem:[%s2567 + $0x30] sm:$0xff] %v2596
    %2608 = vst [vmem:[%s2567 + $0x38] sm:$0xff] %v2597
    %2609 = vst [vmem:[%s2567 + $0x40] sm:$0xff] %v2598
    %2610 = vst [vmem:[%s2567 + $0x48] sm:$0xff] %v2599
    %2611 = vst [vmem:[%s2567 + $0x50] sm:$0xff] %v2600
    // Predicated region
    $region42: #{tpu_custom_call.1} parent=1 // pred_check
      %p2612 = pneg %p83
    $region43: #{tpu_custom_call.1} parent=1 // pred_check_branch
      %2614 = sbr.rel (%p2612) target = $region45
    $region44: #{tpu_custom_call.1} parent=1 // pred_region
      %v2615 = vld [vmem:[#allocation2] sm:$0xff]
      %v2616 = vld [vmem:[#allocation2 + $0x8] sm:$0xff]
      %v2617 = vld [vmem:[#allocation2 + $0x10] sm:$0xff]
      %v2618 = vld [vmem:[#allocation2 + $0x18] sm:$0xff]
      %v2619 = vld [vmem:[#allocation2 + $0x20] sm:$0xff]
      %v2620 = vld [vmem:[#allocation2 + $0x28] sm:$0xff]
      %v2621 = vld [vmem:[#allocation2 + $0x30] sm:$0xff]
      %v2622 = vld [vmem:[#allocation2 + $0x38] sm:$0xff]
      %v2623 = vld [vmem:[#allocation2 + $0x40] sm:$0xff]
      %v2624 = vld [vmem:[#allocation2 + $0x48] sm:$0xff]
      %v2625 = vld [vmem:[#allocation2 + $0x50] sm:$0xff]
      %v2626 = vld [vmem:[#allocation2 + $0x58] sm:$0xff]
      %v2627 = vld [vmem:[#allocation2 + $0x60] sm:$0xff]
      %v2628 = vld [vmem:[#allocation2 + $0x68] sm:$0xff]
      %v2629 = vld [vmem:[#allocation2 + $0x70] sm:$0xff]
      %v2630 = vld [vmem:[#allocation2 + $0x78] sm:$0xff]
      %v2631 = vld [vmem:[#allocation2 + $0x80] sm:$0xff]
      %v2632 = vld [vmem:[#allocation2 + $0x88] sm:$0xff]
      %v2633 = vld [vmem:[#allocation2 + $0x90] sm:$0xff]
      %v2634 = vld [vmem:[#allocation2 + $0x98] sm:$0xff]
      %v2635 = vld [vmem:[#allocation2 + $0xa0] sm:$0xff]
      %v2636 = vld [vmem:[#allocation2 + $0xa8] sm:$0xff]
      %v2637 = vrot.slane %v2615, 4
      %v2638 = vadd.f32 %v2615, %v2637
      %v2639 = vrot.slane %v2638, 2
      %v2640 = vadd.f32 %v2638, %v2639
      %v2641 = vrot.slane %v2640, 1
      %v2642 = vadd.f32 %v2640, %v2641
      %v2643 = vrot.slane %v2616, 4
      %v2644 = vadd.f32 %v2616, %v2643
      %v2645 = vrot.slane %v2644, 2
      %v2646 = vadd.f32 %v2644, %v2645
      %v2647 = vrot.slane %v2646, 1
      %v2648 = vadd.f32 %v2646, %v2647
      %v2649 = vrot.slane %v2617, 4
      %v2650 = vadd.f32 %v2617, %v2649
      %v2651 = vrot.slane %v2650, 2
      %v2652 = vadd.f32 %v2650, %v2651
      %v2653 = vrot.slane %v2652, 1
      %v2654 = vadd.f32 %v2652, %v2653
      %v2655 = vrot.slane %v2618, 4
      %v2656 = vadd.f32 %v2618, %v2655
      %v2657 = vrot.slane %v2656, 2
      %v2658 = vadd.f32 %v2656, %v2657
      %v2659 = vrot.slane %v2658, 1
      %v2660 = vadd.f32 %v2658, %v2659
      %v2661 = vrot.slane %v2619, 4
      %v2662 = vadd.f32 %v2619, %v2661
      %v2663 = vrot.slane %v2662, 2
      %v2664 = vadd.f32 %v2662, %v2663
      %v2665 = vrot.slane %v2664, 1
      %v2666 = vadd.f32 %v2664, %v2665
      %v2667 = vrot.slane %v2620, 4
      %v2668 = vadd.f32 %v2620, %v2667
      %v2669 = vrot.slane %v2668, 2
      %v2670 = vadd.f32 %v2668, %v2669
      %v2671 = vrot.slane %v2670, 1
      %v2672 = vadd.f32 %v2670, %v2671
      %v2673 = vrot.slane %v2621, 4
      %v2674 = vadd.f32 %v2621, %v2673
      %v2675 = vrot.slane %v2674, 2
      %v2676 = vadd.f32 %v2674, %v2675
      %v2677 = vrot.slane %v2676, 1
      %v2678 = vadd.f32 %v2676, %v2677
      %v2679 = vrot.slane %v2622, 4
      %v2680 = vadd.f32 %v2622, %v2679
      %v2681 = vrot.slane %v2680, 2
      %v2682 = vadd.f32 %v2680, %v2681
      %v2683 = vrot.slane %v2682, 1
      %v2684 = vadd.f32 %v2682, %v2683
      %v2685 = vrot.slane %v2623, 4
      %v2686 = vadd.f32 %v2623, %v2685
      %v2687 = vrot.slane %v2686, 2
      %v2688 = vadd.f32 %v2686, %v2687
      %v2689 = vrot.slane %v2688, 1
      %v2690 = vadd.f32 %v2688, %v2689
      %v2691 = vrot.slane %v2624, 4
      %v2692 = vadd.f32 %v2624, %v2691
      %v2693 = vrot.slane %v2692, 2
      %v2694 = vadd.f32 %v2692, %v2693
      %v2695 = vrot.slane %v2694, 1
      %v2696 = vadd.f32 %v2694, %v2695
      %v2697 = vrot.slane %v2625, 4
      %v2698 = vadd.f32 %v2625, %v2697
      %v2699 = vrot.slane %v2698, 2
      %v2700 = vadd.f32 %v2698, %v2699
      %v2701 = vrot.slane %v2700, 1
      %v2702 = vadd.f32 %v2700, %v2701
      %v2703 = vrot.slane %v2626, 4
      %v2704 = vadd.f32 %v2626, %v2703
      %v2705 = vrot.slane %v2704, 2
      %v2706 = vadd.f32 %v2704, %v2705
      %v2707 = vrot.slane %v2706, 1
      %v2708 = vadd.f32 %v2706, %v2707
      %v2709 = vrot.slane %v2627, 4
      %v2710 = vadd.f32 %v2627, %v2709
      %v2711 = vrot.slane %v2710, 2
      %v2712 = vadd.f32 %v2710, %v2711
      %v2713 = vrot.slane %v2712, 1
      %v2714 = vadd.f32 %v2712, %v2713
      %v2715 = vrot.slane %v2628, 4
      %v2716 = vadd.f32 %v2628, %v2715
      %v2717 = vrot.slane %v2716, 2
      %v2718 = vadd.f32 %v2716, %v2717
      %v2719 = vrot.slane %v2718, 1
      %v2720 = vadd.f32 %v2718, %v2719
      %v2721 = vrot.slane %v2629, 4
      %v2722 = vadd.f32 %v2629, %v2721
      %v2723 = vrot.slane %v2722, 2
      %v2724 = vadd.f32 %v2722, %v2723
      %v2725 = vrot.slane %v2724, 1
      %v2726 = vadd.f32 %v2724, %v2725
      %v2727 = vrot.slane %v2630, 4
      %v2728 = vadd.f32 %v2630, %v2727
      %v2729 = vrot.slane %v2728, 2
      %v2730 = vadd.f32 %v2728, %v2729
      %v2731 = vrot.slane %v2730, 1
      %v2732 = vadd.f32 %v2730, %v2731
      %v2733 = vrot.slane %v2631, 4
      %v2734 = vadd.f32 %v2631, %v2733
      %v2735 = vrot.slane %v2734, 2
      %v2736 = vadd.f32 %v2734, %v2735
      %v2737 = vrot.slane %v2736, 1
      %v2738 = vadd.f32 %v2736, %v2737
      %v2739 = vrot.slane %v2632, 4
      %v2740 = vadd.f32 %v2632, %v2739
      %v2741 = vrot.slane %v2740, 2
      %v2742 = vadd.f32 %v2740, %v2741
      %v2743 = vrot.slane %v2742, 1
      %v2744 = vadd.f32 %v2742, %v2743
      %v2745 = vrot.slane %v2633, 4
      %v2746 = vadd.f32 %v2633, %v2745
      %v2747 = vrot.slane %v2746, 2
      %v2748 = vadd.f32 %v2746, %v2747
      %v2749 = vrot.slane %v2748, 1
      %v2750 = vadd.f32 %v2748, %v2749
      %v2751 = vrot.slane %v2634, 4
      %v2752 = vadd.f32 %v2634, %v2751
      %v2753 = vrot.slane %v2752, 2
      %v2754 = vadd.f32 %v2752, %v2753
      %v2755 = vrot.slane %v2754, 1
      %v2756 = vadd.f32 %v2754, %v2755
      %v2757 = vrot.slane %v2635, 4
      %v2758 = vadd.f32 %v2635, %v2757
      %v2759 = vrot.slane %v2758, 2
      %v2760 = vadd.f32 %v2758, %v2759
      %v2761 = vrot.slane %v2760, 1
      %v2762 = vadd.f32 %v2760, %v2761
      %v2763 = vrot.slane %v2636, 4
      %v2764 = vadd.f32 %v2636, %v2763
      %v2765 = vrot.slane %v2764, 2
      %v2766 = vadd.f32 %v2764, %v2765
      %v2767 = vrot.slane %v2766, 1
      %v2768 = vadd.f32 %v2766, %v2767
      %v2769 = vpack.c.bf16 %v2642, %v2642
      %v2770 = vpack.c.bf16 %v2648, %v2648
      %v2771 = vpack.c.bf16 %v2654, %v2654
      %v2772 = vpack.c.bf16 %v2660, %v2660
      %v2773 = vpack.c.bf16 %v2666, %v2666
      %v2774 = vpack.c.bf16 %v2672, %v2672
      %v2775 = vpack.c.bf16 %v2678, %v2678
      %v2776 = vpack.c.bf16 %v2684, %v2684
      %v2777 = vpack.c.bf16 %v2690, %v2690
      %v2778 = vpack.c.bf16 %v2696, %v2696
      %v2779 = vpack.c.bf16 %v2702, %v2702
      %v2780 = vpack.c.bf16 %v2708, %v2708
      %v2781 = vpack.c.bf16 %v2714, %v2714
      %v2782 = vpack.c.bf16 %v2720, %v2720
      %v2783 = vpack.c.bf16 %v2726, %v2726
      %v2784 = vpack.c.bf16 %v2732, %v2732
      %v2785 = vpack.c.bf16 %v2738, %v2738
      %v2786 = vpack.c.bf16 %v2744, %v2744
      %v2787 = vpack.c.bf16 %v2750, %v2750
      %v2788 = vpack.c.bf16 %v2756, %v2756
      %v2789 = vpack.c.bf16 %v2762, %v2762
      %v2790 = vpack.c.bf16 %v2768, %v2768
      %v2791 = vld [vmem:[#allocation9] sm:$0xf]
      %v2792 = vld [vmem:[#allocation9 + $0x4] sm:$0xf]
      %v2793 = vld [vmem:[#allocation9 + $0x8] sm:$0xf]
      %v2794 = vld [vmem:[#allocation9 + $0xc] sm:$0xf]
      %v2795 = vld [vmem:[#allocation9 + $0x10] sm:$0xf]
      %v2796 = vld [vmem:[#allocation9 + $0x14] sm:$0xf]
      %v2797 = vld [vmem:[#allocation9 + $0x18] sm:$0xf]
      %v2798 = vld [vmem:[#allocation9 + $0x1c] sm:$0xf]
      %v2799 = vld [vmem:[#allocation9 + $0x20] sm:$0xf]
      %v2800 = vld [vmem:[#allocation9 + $0x24] sm:$0xf]
      %v2801 = vld [vmem:[#allocation9 + $0x28] sm:$0xf]
      %v2802 = vld [vmem:[#allocation9 + $0x2c] sm:$0xf]
      %v2803 = vld [vmem:[#allocation9 + $0x30] sm:$0xf]
      %v2804 = vld [vmem:[#allocation9 + $0x34] sm:$0xf]
      %v2805 = vld [vmem:[#allocation9 + $0x38] sm:$0xf]
      %v2806 = vld [vmem:[#allocation9 + $0x3c] sm:$0xf]
      %v2807 = vld [vmem:[#allocation9 + $0x40] sm:$0xf]
      %v2808 = vld [vmem:[#allocation9 + $0x44] sm:$0xf]
      %v2809 = vld [vmem:[#allocation9 + $0x48] sm:$0xf]
      %v2810 = vld [vmem:[#allocation9 + $0x4c] sm:$0xf]
      %v2811 = vld [vmem:[#allocation9 + $0x50] sm:$0xf]
      %v2812 = vld [vmem:[#allocation9 + $0x54] sm:$0xf]
      %v2813 = vld [vmem:[#allocation9 + $0x58] sm:$0xf]
      %v2814 = vld [vmem:[#allocation9 + $0x5c] sm:$0xf]
      %v2815 = vld [vmem:[#allocation9 + $0x60] sm:$0xf]
      %v2816 = vld [vmem:[#allocation9 + $0x64] sm:$0xf]
      %v2817 = vld [vmem:[#allocation9 + $0x68] sm:$0xf]
      %v2818 = vld [vmem:[#allocation9 + $0x6c] sm:$0xf]
      %v2819 = vld [vmem:[#allocation9 + $0x70] sm:$0xf]
      %v2820 = vld [vmem:[#allocation9 + $0x74] sm:$0xf]
      %v2821 = vld [vmem:[#allocation9 + $0x78] sm:$0xf]
      %v2822 = vld [vmem:[#allocation9 + $0x7c] sm:$0xf]
      %v2823 = vld [vmem:[#allocation9 + $0x80] sm:$0xf]
      %v2824 = vld [vmem:[#allocation9 + $0x84] sm:$0xf]
      %v2825 = vld [vmem:[#allocation9 + $0x88] sm:$0xf]
      %v2826 = vld [vmem:[#allocation9 + $0x8c] sm:$0xf]
      %v2827 = vld [vmem:[#allocation9 + $0x90] sm:$0xf]
      %v2828 = vld [vmem:[#allocation9 + $0x94] sm:$0xf]
      %v2829 = vld [vmem:[#allocation9 + $0x98] sm:$0xf]
      %v2830 = vld [vmem:[#allocation9 + $0x9c] sm:$0xf]
      %v2831 = vld [vmem:[#allocation9 + $0xa0] sm:$0xf]
      %v2832 = vld [vmem:[#allocation9 + $0xa4] sm:$0xf]
      %v2833 = vld [vmem:[#allocation9 + $0xa8] sm:$0xf]
      %v2834 = vld [vmem:[#allocation9 + $0xac] sm:$0xf]
      %v2835 = vld [vmem:[#allocation9 + $0xb0] sm:$0xf]
      %v2836 = vld [vmem:[#allocation9 + $0xb4] sm:$0xf]
      %v2837 = vld [vmem:[#allocation9 + $0xb8] sm:$0xf]
      %v2838 = vld [vmem:[#allocation9 + $0xbc] sm:$0xf]
      %v2839 = vld [vmem:[#allocation9 + $0xc0] sm:$0xf]
      %v2840 = vld [vmem:[#allocation9 + $0xc4] sm:$0xf]
      %v2841 = vld [vmem:[#allocation9 + $0xc8] sm:$0xf]
      %v2842 = vld [vmem:[#allocation9 + $0xcc] sm:$0xf]
      %v2843 = vld [vmem:[#allocation9 + $0xd0] sm:$0xf]
      %v2844 = vld [vmem:[#allocation9 + $0xd4] sm:$0xf]
      %v2845 = vld [vmem:[#allocation9 + $0xd8] sm:$0xf]
      %v2846 = vld [vmem:[#allocation9 + $0xdc] sm:$0xf]
      %v2847 = vld [vmem:[#allocation9 + $0xe0] sm:$0xf]
      %v2848 = vld [vmem:[#allocation9 + $0xe4] sm:$0xf]
      %v2849 = vld [vmem:[#allocation9 + $0xe8] sm:$0xf]
      %v2850 = vld [vmem:[#allocation9 + $0xec] sm:$0xf]
      %v2851 = vld [vmem:[#allocation9 + $0xf0] sm:$0xf]
      %v2852 = vld [vmem:[#allocation9 + $0xf4] sm:$0xf]
      %v2853 = vld [vmem:[#allocation9 + $0xf8] sm:$0xf]
      %v2854 = vld [vmem:[#allocation9 + $0xfc] sm:$0xf]
      %v2855 = vld [vmem:[#allocation9 + $0x100] sm:$0xf]
      %v2856 = vld [vmem:[#allocation9 + $0x104] sm:$0xf]
      %v2857 = vld [vmem:[#allocation9 + $0x108] sm:$0xf]
      %v2858 = vld [vmem:[#allocation9 + $0x10c] sm:$0xf]
      %v2859 = vld [vmem:[#allocation9 + $0x110] sm:$0xf]
      %v2860 = vld [vmem:[#allocation9 + $0x114] sm:$0xf]
      %v2861 = vld [vmem:[#allocation9 + $0x118] sm:$0xf]
      %v2862 = vld [vmem:[#allocation9 + $0x11c] sm:$0xf]
      %v2863 = vld [vmem:[#allocation9 + $0x120] sm:$0xf]
      %v2864 = vld [vmem:[#allocation9 + $0x124] sm:$0xf]
      %v2865 = vld [vmem:[#allocation9 + $0x128] sm:$0xf]
      %v2866 = vld [vmem:[#allocation9 + $0x12c] sm:$0xf]
      %v2867 = vld [vmem:[#allocation9 + $0x130] sm:$0xf]
      %v2868 = vld [vmem:[#allocation9 + $0x134] sm:$0xf]
      %v2869 = vld [vmem:[#allocation9 + $0x138] sm:$0xf]
      %v2870 = vld [vmem:[#allocation9 + $0x13c] sm:$0xf]
      %v2871 = vld [vmem:[#allocation9 + $0x140] sm:$0xf]
      %v2872 = vld [vmem:[#allocation9 + $0x144] sm:$0xf]
      %v2873 = vld [vmem:[#allocation9 + $0x148] sm:$0xf]
      %v2874 = vld [vmem:[#allocation9 + $0x14c] sm:$0xf]
      %v2875 = vld [vmem:[#allocation9 + $0x150] sm:$0xf]
      %v2876 = vld [vmem:[#allocation9 + $0x154] sm:$0xf]
      %v2877 = vld [vmem:[#allocation9 + $0x158] sm:$0xf]
      %v2878 = vld [vmem:[#allocation9 + $0x15c] sm:$0xf]
      %v2879 = vld [vmem:[#allocation9 + $0x160] sm:$0xf]
      %v2880 = vld [vmem:[#allocation9 + $0x164] sm:$0xf]
      %v2881 = vld [vmem:[#allocation9 + $0x168] sm:$0xf]
      %v2882 = vld [vmem:[#allocation9 + $0x16c] sm:$0xf]
      %v2883 = vld [vmem:[#allocation9 + $0x170] sm:$0xf]
      %v2884 = vld [vmem:[#allocation9 + $0x174] sm:$0xf]
      %v2885 = vld [vmem:[#allocation9 + $0x178] sm:$0xf]
      %v2886 = vld [vmem:[#allocation9 + $0x17c] sm:$0xf]
      %v2887 = vld [vmem:[#allocation9 + $0x180] sm:$0xf]
      %v2888 = vld [vmem:[#allocation9 + $0x184] sm:$0xf]
      %v2889 = vld [vmem:[#allocation9 + $0x188] sm:$0xf]
      %v2890 = vld [vmem:[#allocation9 + $0x18c] sm:$0xf]
      %v2891 = vld [vmem:[#allocation9 + $0x190] sm:$0xf]
      %v2892 = vld [vmem:[#allocation9 + $0x194] sm:$0xf]
      %v2893 = vld [vmem:[#allocation9 + $0x198] sm:$0xf]
      %v2894 = vld [vmem:[#allocation9 + $0x19c] sm:$0xf]
      %v2895 = vld [vmem:[#allocation9 + $0x1a0] sm:$0xf]
      %v2896 = vld [vmem:[#allocation9 + $0x1a4] sm:$0xf]
      %v2897 = vld [vmem:[#allocation9 + $0x1a8] sm:$0xf]
      %v2898 = vld [vmem:[#allocation9 + $0x1ac] sm:$0xf]
      %v2899 = vld [vmem:[#allocation9 + $0x1b0] sm:$0xf]
      %v2900 = vld [vmem:[#allocation9 + $0x1b4] sm:$0xf]
      %v2901 = vld [vmem:[#allocation9 + $0x1b8] sm:$0xf]
      %v2902 = vld [vmem:[#allocation9 + $0x1bc] sm:$0xf]
      %v2903 = vld [vmem:[#allocation9 + $0x1c0] sm:$0xf]
      %v2904 = vld [vmem:[#allocation9 + $0x1c4] sm:$0xf]
      %v2905 = vld [vmem:[#allocation9 + $0x1c8] sm:$0xf]
      %v2906 = vld [vmem:[#allocation9 + $0x1cc] sm:$0xf]
      %v2907 = vld [vmem:[#allocation9 + $0x1d0] sm:$0xf]
      %v2908 = vld [vmem:[#allocation9 + $0x1d4] sm:$0xf]
      %v2909 = vld [vmem:[#allocation9 + $0x1d8] sm:$0xf]
      %v2910 = vld [vmem:[#allocation9 + $0x1dc] sm:$0xf]
      %v2911 = vld [vmem:[#allocation9 + $0x1e0] sm:$0xf]
      %v2912 = vld [vmem:[#allocation9 + $0x1e4] sm:$0xf]
      %v2913 = vld [vmem:[#allocation9 + $0x1e8] sm:$0xf]
      %v2914 = vld [vmem:[#allocation9 + $0x1ec] sm:$0xf]
      %v2915 = vld [vmem:[#allocation9 + $0x1f0] sm:$0xf]
      %v2916 = vld [vmem:[#allocation9 + $0x1f4] sm:$0xf]
      %v2917 = vld [vmem:[#allocation9 + $0x1f8] sm:$0xf]
      %v2918 = vld [vmem:[#allocation9 + $0x1fc] sm:$0xf]
      %v2919 = vld [vmem:[#allocation9 + $0x200] sm:$0xf]
      %v2920 = vld [vmem:[#allocation9 + $0x204] sm:$0xf]
      %v2921 = vld [vmem:[#allocation9 + $0x208] sm:$0xf]
      %v2922 = vld [vmem:[#allocation9 + $0x20c] sm:$0xf]
      %v2923 = vld [vmem:[#allocation9 + $0x210] sm:$0xf]
      %v2924 = vld [vmem:[#allocation9 + $0x214] sm:$0xf]
      %v2925 = vld [vmem:[#allocation9 + $0x218] sm:$0xf]
      %v2926 = vld [vmem:[#allocation9 + $0x21c] sm:$0xf]
      %v2927 = vld [vmem:[#allocation9 + $0x220] sm:$0xf]
      %v2928 = vld [vmem:[#allocation9 + $0x224] sm:$0xf]
      %v2929 = vld [vmem:[#allocation9 + $0x228] sm:$0xf]
      %v2930 = vld [vmem:[#allocation9 + $0x22c] sm:$0xf]
      %v2931 = vld [vmem:[#allocation9 + $0x230] sm:$0xf]
      %v2932 = vld [vmem:[#allocation9 + $0x234] sm:$0xf]
      %v2933 = vld [vmem:[#allocation9 + $0x238] sm:$0xf]
      %v2934 = vld [vmem:[#allocation9 + $0x23c] sm:$0xf]
      %v2935 = vld [vmem:[#allocation9 + $0x240] sm:$0xf]
      %v2936 = vld [vmem:[#allocation9 + $0x244] sm:$0xf]
      %v2937 = vld [vmem:[#allocation9 + $0x248] sm:$0xf]
      %v2938 = vld [vmem:[#allocation9 + $0x24c] sm:$0xf]
      %v2939 = vld [vmem:[#allocation9 + $0x250] sm:$0xf]
      %v2940 = vld [vmem:[#allocation9 + $0x254] sm:$0xf]
      %v2941 = vld [vmem:[#allocation9 + $0x258] sm:$0xf]
      %v2942 = vld [vmem:[#allocation9 + $0x25c] sm:$0xf]
      %v2943 = vld [vmem:[#allocation9 + $0x260] sm:$0xf]
      %v2944 = vld [vmem:[#allocation9 + $0x264] sm:$0xf]
      %v2945 = vld [vmem:[#allocation9 + $0x268] sm:$0xf]
      %v2946 = vld [vmem:[#allocation9 + $0x26c] sm:$0xf]
      %v2947 = vld [vmem:[#allocation9 + $0x270] sm:$0xf]
      %v2948 = vld [vmem:[#allocation9 + $0x274] sm:$0xf]
      %v2949 = vld [vmem:[#allocation9 + $0x278] sm:$0xf]
      %v2950 = vld [vmem:[#allocation9 + $0x27c] sm:$0xf]
      %v2951 = vld [vmem:[#allocation9 + $0x280] sm:$0xf]
      %v2952 = vld [vmem:[#allocation9 + $0x284] sm:$0xf]
      %v2953 = vld [vmem:[#allocation9 + $0x288] sm:$0xf]
      %v2954 = vld [vmem:[#allocation9 + $0x28c] sm:$0xf]
      %v2955 = vld [vmem:[#allocation9 + $0x290] sm:$0xf]
      %v2956 = vld [vmem:[#allocation9 + $0x294] sm:$0xf]
      %v2957 = vld [vmem:[#allocation9 + $0x298] sm:$0xf]
      %v2958 = vld [vmem:[#allocation9 + $0x29c] sm:$0xf]
      %v2959 = vld [vmem:[#allocation9 + $0x2a0] sm:$0xf]
      %v2960 = vld [vmem:[#allocation9 + $0x2a4] sm:$0xf]
      %v2961 = vld [vmem:[#allocation9 + $0x2a8] sm:$0xf]
      %v2962 = vld [vmem:[#allocation9 + $0x2ac] sm:$0xf]
      %v2963 = vld [vmem:[#allocation9 + $0x2b0] sm:$0xf]
      %v2964 = vld [vmem:[#allocation9 + $0x2b4] sm:$0xf]
      %v2965 = vld [vmem:[#allocation9 + $0x2b8] sm:$0xf]
      %v2966 = vld [vmem:[#allocation9 + $0x2bc] sm:$0xf]
      %v2967 = vld [vmem:[%s4] sm:$0x1]
      %v2969 = vperm.slane %v2967, 0
      %v2993 = vunpack.c.l.b16 %v2769
      %v2994 = vunpack.c.l.b16 %v2770
      %v2995 = vunpack.c.l.b16 %v2771
      %v2996 = vunpack.c.l.b16 %v2772
      %v2997 = vunpack.c.l.b16 %v2773
      %v2998 = vunpack.c.l.b16 %v2774
      %v2999 = vunpack.c.l.b16 %v2775
      %v3000 = vunpack.c.l.b16 %v2776
      %v3001 = vunpack.c.l.b16 %v2777
      %v3002 = vunpack.c.l.b16 %v2778
      %v3003 = vunpack.c.l.b16 %v2779
      %v3004 = vunpack.c.l.b16 %v2780
      %v3005 = vunpack.c.l.b16 %v2781
      %v3006 = vunpack.c.l.b16 %v2782
      %v3007 = vunpack.c.l.b16 %v2783
      %v3008 = vunpack.c.l.b16 %v2784
      %v3009 = vunpack.c.l.b16 %v2785
      %v3010 = vunpack.c.l.b16 %v2786
      %v3011 = vunpack.c.l.b16 %v2787
      %v3012 = vunpack.c.l.b16 %v2788
      %v3013 = vunpack.c.l.b16 %v2789
      %v3014 = vunpack.c.l.b16 %v2790
      %vm3015 = vcmask 1041409
      %v3016 = vsel %vm3015, %v3004, %v2993
      %v3017 = vsel %vm3015, %v3005, %v2994
      %v3018 = vsel %vm3015, %v3006, %v2995
      %v3019 = vsel %vm3015, %v3007, %v2996
      %v3020 = vsel %vm3015, %v3008, %v2997
      %v3021 = vsel %vm3015, %v3009, %v2998
      %v3022 = vsel %vm3015, %v3010, %v2999
      %v3023 = vsel %vm3015, %v3011, %v3000
      %v3024 = vsel %vm3015, %v3012, %v3001
      %v3025 = vsel %vm3015, %v3013, %v3002
      %v3026 = vsel %vm3015, %v3014, %v3003
      %v3027 = vpack.c.b16 %v3016, %v3016
      %v3028 = vpack.c.b16 %v3017, %v3017
      %v3029 = vpack.c.b16 %v3018, %v3018
      %v3030 = vpack.c.b16 %v3019, %v3019
      %v3031 = vpack.c.b16 %v3020, %v3020
      %v3032 = vpack.c.b16 %v3021, %v3021
      %v3033 = vpack.c.b16 %v3022, %v3022
      %v3034 = vpack.c.b16 %v3023, %v3023
      %v3035 = vpack.c.b16 %v3024, %v3024
      %v3036 = vpack.c.b16 %v3025, %v3025
      %v3037 = vpack.c.b16 %v3026, %v3026
      %v3225 = vunpack.c.l.b16 %v2791
      %v3226 = vunpack.c.l.b16 %v2792
      %v3227 = vunpack.c.l.b16 %v2793
      %v3228 = vunpack.c.l.b16 %v2794
      %v3229 = vunpack.c.l.b16 %v2795
      %v3230 = vunpack.c.l.b16 %v2796
      %v3231 = vunpack.c.l.b16 %v2797
      %v3232 = vunpack.c.l.b16 %v2798
      %v3233 = vunpack.c.l.b16 %v2799
      %v3234 = vunpack.c.l.b16 %v2800
      %v3235 = vunpack.c.l.b16 %v2801
      %v3236 = vunpack.c.l.b16 %v2802
      %v3237 = vunpack.c.l.b16 %v2803
      %v3238 = vunpack.c.l.b16 %v2804
      %v3239 = vunpack.c.l.b16 %v2805
      %v3240 = vunpack.c.l.b16 %v2806
      %v3241 = vunpack.c.l.b16 %v2807
      %v3242 = vunpack.c.l.b16 %v2808
      %v3243 = vunpack.c.l.b16 %v2809
      %v3244 = vunpack.c.l.b16 %v2810
      %v3245 = vunpack.c.l.b16 %v2811
      %v3246 = vunpack.c.l.b16 %v2812
      %v3247 = vunpack.c.l.b16 %v2813
      %v3248 = vunpack.c.l.b16 %v2814
      %v3249 = vunpack.c.l.b16 %v2815
      %v3250 = vunpack.c.l.b16 %v2816
      %v3251 = vunpack.c.l.b16 %v2817
      %v3252 = vunpack.c.l.b16 %v2818
      %v3253 = vunpack.c.l.b16 %v2819
      %v3254 = vunpack.c.l.b16 %v2820
      %v3255 = vunpack.c.l.b16 %v2821
      %v3256 = vunpack.c.l.b16 %v2822
      %v3257 = vunpack.c.l.b16 %v2823
      %v3258 = vunpack.c.l.b16 %v2824
      %v3259 = vunpack.c.l.b16 %v2825
      %v3260 = vunpack.c.l.b16 %v2826
      %v3261 = vunpack.c.l.b16 %v2827
      %v3262 = vunpack.c.l.b16 %v2828
      %v3263 = vunpack.c.l.b16 %v2829
      %v3264 = vunpack.c.l.b16 %v2830
      %v3265 = vunpack.c.l.b16 %v2831
      %v3266 = vunpack.c.l.b16 %v2832
      %v3267 = vunpack.c.l.b16 %v2833
      %v3268 = vunpack.c.l.b16 %v2834
      %v3269 = vunpack.c.l.b16 %v2835
      %v3270 = vunpack.c.l.b16 %v2836
      %v3271 = vunpack.c.l.b16 %v2837
      %v3272 = vunpack.c.l.b16 %v2838
      %v3273 = vunpack.c.l.b16 %v2839
      %v3274 = vunpack.c.l.b16 %v2840
      %v3275 = vunpack.c.l.b16 %v2841
      %v3276 = vunpack.c.l.b16 %v2842
      %v3277 = vunpack.c.l.b16 %v2843
      %v3278 = vunpack.c.l.b16 %v2844
      %v3279 = vunpack.c.l.b16 %v2845
      %v3280 = vunpack.c.l.b16 %v2846
      %v3281 = vunpack.c.l.b16 %v2847
      %v3282 = vunpack.c.l.b16 %v2848
      %v3283 = vunpack.c.l.b16 %v2849
      %v3284 = vunpack.c.l.b16 %v2850
      %v3285 = vunpack.c.l.b16 %v2851
      %v3286 = vunpack.c.l.b16 %v2852
      %v3287 = vunpack.c.l.b16 %v2853
      %v3288 = vunpack.c.l.b16 %v2854
      %v3289 = vunpack.c.l.b16 %v2855
      %v3290 = vunpack.c.l.b16 %v2856
      %v3291 = vunpack.c.l.b16 %v2857
      %v3292 = vunpack.c.l.b16 %v2858
      %v3293 = vunpack.c.l.b16 %v2859
      %v3294 = vunpack.c.l.b16 %v2860
      %v3295 = vunpack.c.l.b16 %v2861
      %v3296 = vunpack.c.l.b16 %v2862
      %v3297 = vunpack.c.l.b16 %v2863
      %v3298 = vunpack.c.l.b16 %v2864
      %v3299 = vunpack.c.l.b16 %v2865
      %v3300 = vunpack.c.l.b16 %v2866
      %v3301 = vunpack.c.l.b16 %v2867
      %v3302 = vunpack.c.l.b16 %v2868
      %v3303 = vunpack.c.l.b16 %v2869
      %v3304 = vunpack.c.l.b16 %v2870
      %v3305 = vunpack.c.l.b16 %v2871
      %v3306 = vunpack.c.l.b16 %v2872
      %v3307 = vunpack.c.l.b16 %v2873
      %v3308 = vunpack.c.l.b16 %v2874
      %v3309 = vunpack.c.l.b16 %v2875
      %v3310 = vunpack.c.l.b16 %v2876
      %v3311 = vunpack.c.l.b16 %v2877
      %v3312 = vunpack.c.l.b16 %v2878
      %v3313 = vunpack.c.l.b16 %v2879
      %v3314 = vunpack.c.l.b16 %v2880
      %v3315 = vunpack.c.l.b16 %v2881
      %v3316 = vunpack.c.l.b16 %v2882
      %v3317 = vunpack.c.l.b16 %v2883
      %v3318 = vunpack.c.l.b16 %v2884
      %v3319 = vunpack.c.l.b16 %v2885
      %v3320 = vunpack.c.l.b16 %v2886
      %v3321 = vunpack.c.l.b16 %v2887
      %v3322 = vunpack.c.l.b16 %v2888
      %v3323 = vunpack.c.l.b16 %v2889
      %v3324 = vunpack.c.l.b16 %v2890
      %v3325 = vunpack.c.l.b16 %v2891
      %v3326 = vunpack.c.l.b16 %v2892
      %v3327 = vunpack.c.l.b16 %v2893
      %v3328 = vunpack.c.l.b16 %v2894
      %v3329 = vunpack.c.l.b16 %v2895
      %v3330 = vunpack.c.l.b16 %v2896
      %v3331 = vunpack.c.l.b16 %v2897
      %v3332 = vunpack.c.l.b16 %v2898
      %v3333 = vunpack.c.l.b16 %v2899
      %v3334 = vunpack.c.l.b16 %v2900
      %v3335 = vunpack.c.l.b16 %v2901
      %v3336 = vunpack.c.l.b16 %v2902
      %v3337 = vunpack.c.l.b16 %v2903
      %v3338 = vunpack.c.l.b16 %v2904
      %v3339 = vunpack.c.l.b16 %v2905
      %v3340 = vunpack.c.l.b16 %v2906
      %v3341 = vunpack.c.l.b16 %v2907
      %v3342 = vunpack.c.l.b16 %v2908
      %v3343 = vunpack.c.l.b16 %v2909
      %v3344 = vunpack.c.l.b16 %v2910
      %v3345 = vunpack.c.l.b16 %v2911
      %v3346 = vunpack.c.l.b16 %v2912
      %v3347 = vunpack.c.l.b16 %v2913
      %v3348 = vunpack.c.l.b16 %v2914
      %v3349 = vunpack.c.l.b16 %v2915
      %v3350 = vunpack.c.l.b16 %v2916
      %v3351 = vunpack.c.l.b16 %v2917
      %v3352 = vunpack.c.l.b16 %v2918
      %v3353 = vunpack.c.l.b16 %v2919
      %v3354 = vunpack.c.l.b16 %v2920
      %v3355 = vunpack.c.l.b16 %v2921
      %v3356 = vunpack.c.l.b16 %v2922
      %v3357 = vunpack.c.l.b16 %v2923
      %v3358 = vunpack.c.l.b16 %v2924
      %v3359 = vunpack.c.l.b16 %v2925
      %v3360 = vunpack.c.l.b16 %v2926
      %v3361 = vunpack.c.l.b16 %v2927
      %v3362 = vunpack.c.l.b16 %v2928
      %v3363 = vunpack.c.l.b16 %v2929
      %v3364 = vunpack.c.l.b16 %v2930
      %v3365 = vunpack.c.l.b16 %v2931
      %v3366 = vunpack.c.l.b16 %v2932
      %v3367 = vunpack.c.l.b16 %v2933
      %v3368 = vunpack.c.l.b16 %v2934
      %v3369 = vunpack.c.l.b16 %v2935
      %v3370 = vunpack.c.l.b16 %v2936
      %v3371 = vunpack.c.l.b16 %v2937
      %v3372 = vunpack.c.l.b16 %v2938
      %v3373 = vunpack.c.l.b16 %v2939
      %v3374 = vunpack.c.l.b16 %v2940
      %v3375 = vunpack.c.l.b16 %v2941
      %v3376 = vunpack.c.l.b16 %v2942
      %v3377 = vunpack.c.l.b16 %v2943
      %v3378 = vunpack.c.l.b16 %v2944
      %v3379 = vunpack.c.l.b16 %v2945
      %v3380 = vunpack.c.l.b16 %v2946
      %v3381 = vunpack.c.l.b16 %v2947
      %v3382 = vunpack.c.l.b16 %v2948
      %v3383 = vunpack.c.l.b16 %v2949
      %v3384 = vunpack.c.l.b16 %v2950
      %v3385 = vunpack.c.l.b16 %v2951
      %v3386 = vunpack.c.l.b16 %v2952
      %v3387 = vunpack.c.l.b16 %v2953
      %v3388 = vunpack.c.l.b16 %v2954
      %v3389 = vunpack.c.l.b16 %v2955
      %v3390 = vunpack.c.l.b16 %v2956
      %v3391 = vunpack.c.l.b16 %v2957
      %v3392 = vunpack.c.l.b16 %v2958
      %v3393 = vunpack.c.l.b16 %v2959
      %v3394 = vunpack.c.l.b16 %v2960
      %v3395 = vunpack.c.l.b16 %v2961
      %v3396 = vunpack.c.l.b16 %v2962
      %v3397 = vunpack.c.l.b16 %v2963
      %v3398 = vunpack.c.l.b16 %v2964
      %v3399 = vunpack.c.l.b16 %v2965
      %v3400 = vunpack.c.l.b16 %v2966
      %v3401 = vpack.c.b16 %v3226, %v3225
      %v3402 = vpack.c.b16 %v3228, %v3227
      %v3403 = vpack.c.b16 %v3230, %v3229
      %v3404 = vpack.c.b16 %v3232, %v3231
      %v3405 = vpack.c.b16 %v3234, %v3233
      %v3406 = vpack.c.b16 %v3236, %v3235
      %v3407 = vpack.c.b16 %v3238, %v3237
      %v3408 = vpack.c.b16 %v3240, %v3239
      %v3409 = vpack.c.b16 %v3242, %v3241
      %v3410 = vpack.c.b16 %v3244, %v3243
      %v3411 = vpack.c.b16 %v3246, %v3245
      %v3412 = vpack.c.b16 %v3248, %v3247
      %v3413 = vpack.c.b16 %v3250, %v3249
      %v3414 = vpack.c.b16 %v3252, %v3251
      %v3415 = vpack.c.b16 %v3254, %v3253
      %v3416 = vpack.c.b16 %v3256, %v3255
      %v3417 = vpack.c.b16 %v3258, %v3257
      %v3418 = vpack.c.b16 %v3260, %v3259
      %v3419 = vpack.c.b16 %v3262, %v3261
      %v3420 = vpack.c.b16 %v3264, %v3263
      %v3421 = vpack.c.b16 %v3266, %v3265
      %v3422 = vpack.c.b16 %v3268, %v3267
      %v3423 = vpack.c.b16 %v3270, %v3269
      %v3424 = vpack.c.b16 %v3272, %v3271
      %v3425 = vpack.c.b16 %v3274, %v3273
      %v3426 = vpack.c.b16 %v3276, %v3275
      %v3427 = vpack.c.b16 %v3278, %v3277
      %v3428 = vpack.c.b16 %v3280, %v3279
      %v3429 = vpack.c.b16 %v3282, %v3281
      %v3430 = vpack.c.b16 %v3284, %v3283
      %v3431 = vpack.c.b16 %v3286, %v3285
      %v3432 = vpack.c.b16 %v3288, %v3287
      %v3433 = vpack.c.b16 %v3290, %v3289
      %v3434 = vpack.c.b16 %v3292, %v3291
      %v3435 = vpack.c.b16 %v3294, %v3293
      %v3436 = vpack.c.b16 %v3296, %v3295
      %v3437 = vpack.c.b16 %v3298, %v3297
      %v3438 = vpack.c.b16 %v3300, %v3299
      %v3439 = vpack.c.b16 %v3302, %v3301
      %v3440 = vpack.c.b16 %v3304, %v3303
      %v3441 = vpack.c.b16 %v3306, %v3305
      %v3442 = vpack.c.b16 %v3308, %v3307
      %v3443 = vpack.c.b16 %v3310, %v3309
      %v3444 = vpack.c.b16 %v3312, %v3311
      %v3445 = vpack.c.b16 %v3314, %v3313
      %v3446 = vpack.c.b16 %v3316, %v3315
      %v3447 = vpack.c.b16 %v3318, %v3317
      %v3448 = vpack.c.b16 %v3320, %v3319
      %v3449 = vpack.c.b16 %v3322, %v3321
      %v3450 = vpack.c.b16 %v3324, %v3323
      %v3451 = vpack.c.b16 %v3326, %v3325
      %v3452 = vpack.c.b16 %v3328, %v3327
      %v3453 = vpack.c.b16 %v3330, %v3329
      %v3454 = vpack.c.b16 %v3332, %v3331
      %v3455 = vpack.c.b16 %v3334, %v3333
      %v3456 = vpack.c.b16 %v3336, %v3335
      %v3457 = vpack.c.b16 %v3338, %v3337
      %v3458 = vpack.c.b16 %v3340, %v3339
      %v3459 = vpack.c.b16 %v3342, %v3341
      %v3460 = vpack.c.b16 %v3344, %v3343
      %v3461 = vpack.c.b16 %v3346, %v3345
      %v3462 = vpack.c.b16 %v3348, %v3347
      %v3463 = vpack.c.b16 %v3350, %v3349
      %v3464 = vpack.c.b16 %v3352, %v3351
      %v3465 = vpack.c.b16 %v3354, %v3353
      %v3466 = vpack.c.b16 %v3356, %v3355
      %v3467 = vpack.c.b16 %v3358, %v3357
      %v3468 = vpack.c.b16 %v3360, %v3359
      %v3469 = vpack.c.b16 %v3362, %v3361
      %v3470 = vpack.c.b16 %v3364, %v3363
      %v3471 = vpack.c.b16 %v3366, %v3365
      %v3472 = vpack.c.b16 %v3368, %v3367
      %v3473 = vpack.c.b16 %v3370, %v3369
      %v3474 = vpack.c.b16 %v3372, %v3371
      %v3475 = vpack.c.b16 %v3374, %v3373
      %v3476 = vpack.c.b16 %v3376, %v3375
      %v3477 = vpack.c.b16 %v3378, %v3377
      %v3478 = vpack.c.b16 %v3380, %v3379
      %v3479 = vpack.c.b16 %v3382, %v3381
      %v3480 = vpack.c.b16 %v3384, %v3383
      %v3481 = vpack.c.b16 %v3386, %v3385
      %v3482 = vpack.c.b16 %v3388, %v3387
      %v3483 = vpack.c.b16 %v3390, %v3389
      %v3484 = vpack.c.b16 %v3392, %v3391
      %v3485 = vpack.c.b16 %v3394, %v3393
      %v3486 = vpack.c.b16 %v3396, %v3395
      %v3487 = vpack.c.b16 %v3398, %v3397
      %v3488 = vpack.c.b16 %v3400, %v3399
      %3577 = vmatpush.bf16.msra.mxu0 %v3408
      %3578 = vmatpush.bf16.msra.mxu0 %v3407
      %3579 = vmatpush.bf16.msra.mxu0 %v3406
      %3580 = vmatpush.bf16.msra.mxu0 %v3405
      %3581 = vmatpush.bf16.msra.mxu0 %v3404
      %3582 = vmatpush.bf16.msra.mxu0 %v3403
      %3583 = vmatpush.bf16.msra.mxu0 %v3402
      %3584 = vmatpush.bf16.msra.mxu0 %v3401
      %3585 = vmatmul.bf16.gmra.mxu0 %v3027
      %v3586 = vpop.f32.mrf.mxu0
      %v3587 = vadd.f32 %v2969, %v3586
      %v3588 = vpop.f32.mrf.mxu0
      %3589 = vdwg.mxu0
      %3590 = vmatpush.bf16.msra.mxu0 %v3416
      %3591 = vmatpush.bf16.msra.mxu0 %v3415
      %3592 = vmatpush.bf16.msra.mxu0 %v3414
      %3593 = vmatpush.bf16.msra.mxu0 %v3413
      %3594 = vmatpush.bf16.msra.mxu0 %v3412
      %3595 = vmatpush.bf16.msra.mxu0 %v3411
      %3596 = vmatpush.bf16.msra.mxu0 %v3410
      %3597 = vmatpush.bf16.msra.mxu0 %v3409
      %3598 = vmatmul.bf16.gmra.mxu0 %v3028
      %v3599 = vpop.f32.mrf.mxu0
      %v3600 = vadd.f32 %v3587, %v3599
      %v3601 = vpop.f32.mrf.mxu0
      %3602 = vdwg.mxu0
      %3603 = vmatpush.bf16.msra.mxu0 %v3424
      %3604 = vmatpush.bf16.msra.mxu0 %v3423
      %3605 = vmatpush.bf16.msra.mxu0 %v3422
      %3606 = vmatpush.bf16.msra.mxu0 %v3421
      %3607 = vmatpush.bf16.msra.mxu0 %v3420
      %3608 = vmatpush.bf16.msra.mxu0 %v3419
      %3609 = vmatpush.bf16.msra.mxu0 %v3418
      %3610 = vmatpush.bf16.msra.mxu0 %v3417
      %3611 = vmatmul.bf16.gmra.mxu0 %v3029
      %v3612 = vpop.f32.mrf.mxu0
      %v3613 = vadd.f32 %v3600, %v3612
      %v3614 = vpop.f32.mrf.mxu0
      %3615 = vdwg.mxu0
      %3616 = vmatpush.bf16.msra.mxu0 %v3432
      %3617 = vmatpush.bf16.msra.mxu0 %v3431
      %3618 = vmatpush.bf16.msra.mxu0 %v3430
      %3619 = vmatpush.bf16.msra.mxu0 %v3429
      %3620 = vmatpush.bf16.msra.mxu0 %v3428
      %3621 = vmatpush.bf16.msra.mxu0 %v3427
      %3622 = vmatpush.bf16.msra.mxu0 %v3426
      %3623 = vmatpush.bf16.msra.mxu0 %v3425
      %3624 = vmatmul.bf16.gmra.mxu0 %v3030
      %v3625 = vpop.f32.mrf.mxu0
      %v3626 = vadd.f32 %v3613, %v3625
      %v3627 = vpop.f32.mrf.mxu0
      %3628 = vdwg.mxu0
      %3629 = vmatpush.bf16.msra.mxu0 %v3440
      %3630 = vmatpush.bf16.msra.mxu0 %v3439
      %3631 = vmatpush.bf16.msra.mxu0 %v3438
      %3632 = vmatpush.bf16.msra.mxu0 %v3437
      %3633 = vmatpush.bf16.msra.mxu0 %v3436
      %3634 = vmatpush.bf16.msra.mxu0 %v3435
      %3635 = vmatpush.bf16.msra.mxu0 %v3434
      %3636 = vmatpush.bf16.msra.mxu0 %v3433
      %3637 = vmatmul.bf16.gmra.mxu0 %v3031
      %v3638 = vpop.f32.mrf.mxu0
      %v3639 = vadd.f32 %v3626, %v3638
      %v3640 = vpop.f32.mrf.mxu0
      %3641 = vdwg.mxu0
      %3642 = vmatpush.bf16.msra.mxu0 %v3448
      %3643 = vmatpush.bf16.msra.mxu0 %v3447
      %3644 = vmatpush.bf16.msra.mxu0 %v3446
      %3645 = vmatpush.bf16.msra.mxu0 %v3445
      %3646 = vmatpush.bf16.msra.mxu0 %v3444
      %3647 = vmatpush.bf16.msra.mxu0 %v3443
      %3648 = vmatpush.bf16.msra.mxu0 %v3442
      %3649 = vmatpush.bf16.msra.mxu0 %v3441
      %3650 = vmatmul.bf16.gmra.mxu0 %v3032
      %v3651 = vpop.f32.mrf.mxu0
      %v3652 = vadd.f32 %v3639, %v3651
      %v3653 = vpop.f32.mrf.mxu0
      %3654 = vdwg.mxu0
      %3655 = vmatpush.bf16.msra.mxu0 %v3456
      %3656 = vmatpush.bf16.msra.mxu0 %v3455
      %3657 = vmatpush.bf16.msra.mxu0 %v3454
      %3658 = vmatpush.bf16.msra.mxu0 %v3453
      %3659 = vmatpush.bf16.msra.mxu0 %v3452
      %3660 = vmatpush.bf16.msra.mxu0 %v3451
      %3661 = vmatpush.bf16.msra.mxu0 %v3450
      %3662 = vmatpush.bf16.msra.mxu0 %v3449
      %3663 = vmatmul.bf16.gmra.mxu0 %v3033
      %v3664 = vpop.f32.mrf.mxu0
      %v3665 = vadd.f32 %v3652, %v3664
      %v3666 = vpop.f32.mrf.mxu0
      %3667 = vdwg.mxu0
      %3668 = vmatpush.bf16.msra.mxu0 %v3464
      %3669 = vmatpush.bf16.msra.mxu0 %v3463
      %3670 = vmatpush.bf16.msra.mxu0 %v3462
      %3671 = vmatpush.bf16.msra.mxu0 %v3461
      %3672 = vmatpush.bf16.msra.mxu0 %v3460
      %3673 = vmatpush.bf16.msra.mxu0 %v3459
      %3674 = vmatpush.bf16.msra.mxu0 %v3458
      %3675 = vmatpush.bf16.msra.mxu0 %v3457
      %3676 = vmatmul.bf16.gmra.mxu0 %v3034
      %v3677 = vpop.f32.mrf.mxu0
      %v3678 = vadd.f32 %v3665, %v3677
      %v3679 = vpop.f32.mrf.mxu0
      %3680 = vdwg.mxu0
      %3681 = vmatpush.bf16.msra.mxu0 %v3472
      %3682 = vmatpush.bf16.msra.mxu0 %v3471
      %3683 = vmatpush.bf16.msra.mxu0 %v3470
      %3684 = vmatpush.bf16.msra.mxu0 %v3469
      %3685 = vmatpush.bf16.msra.mxu0 %v3468
      %3686 = vmatpush.bf16.msra.mxu0 %v3467
      %3687 = vmatpush.bf16.msra.mxu0 %v3466
      %3688 = vmatpush.bf16.msra.mxu0 %v3465
      %3689 = vmatmul.bf16.gmra.mxu0 %v3035
      %v3690 = vpop.f32.mrf.mxu0
      %v3691 = vadd.f32 %v3678, %v3690
      %v3692 = vpop.f32.mrf.mxu0
      %3693 = vdwg.mxu0
      %3694 = vmatpush.bf16.msra.mxu0 %v3480
      %3695 = vmatpush.bf16.msra.mxu0 %v3479
      %3696 = vmatpush.bf16.msra.mxu0 %v3478
      %3697 = vmatpush.bf16.msra.mxu0 %v3477
      %3698 = vmatpush.bf16.msra.mxu0 %v3476
      %3699 = vmatpush.bf16.msra.mxu0 %v3475
      %3700 = vmatpush.bf16.msra.mxu0 %v3474
      %3701 = vmatpush.bf16.msra.mxu0 %v3473
      %3702 = vmatmul.bf16.gmra.mxu0 %v3036
      %v3703 = vpop.f32.mrf.mxu0
      %v3704 = vadd.f32 %v3691, %v3703
      %v3705 = vpop.f32.mrf.mxu0
      %3706 = vdwg.mxu0
      %3707 = vmatpush.bf16.msra.mxu0 %v3488
      %3708 = vmatpush.bf16.msra.mxu0 %v3487
      %3709 = vmatpush.bf16.msra.mxu0 %v3486
      %3710 = vmatpush.bf16.msra.mxu0 %v3485
      %3711 = vmatpush.bf16.msra.mxu0 %v3484
      %3712 = vmatpush.bf16.msra.mxu0 %v3483
      %3713 = vmatpush.bf16.msra.mxu0 %v3482
      %3714 = vmatpush.bf16.msra.mxu0 %v3481
      %3715 = vmatmul.bf16.gmra.mxu0 %v3037
      %v3716 = vpop.f32.mrf.mxu0
      %v3717 = vadd.f32 %v3704, %v3716
      %v3718 = vpop.f32.mrf.mxu0
      %3719 = vdwg.mxu0
      %v3720 = vlaneseq
      %v3721 = vand.u32 %v3720, 127
      %vm3722 = vcmp.lt.s32.totalorder %v3721, 4
      %v3723 = vsel %vm3722, %v3717, -1e+30
      %vm3724 = vcmask 1041408
      %v3725 = vsel %vm3724, %v3723, -inf
      %3726 = vmax.xlane.f32.xlu0 %v3725
      %v3727 = vpop.xlane.xlu0 %3726
      %v3728 = vsub.f32 %v3723, %v3727
      %v3729 = vmul.f32 %v3728, 1.442695
      %v3730 = vpow.pop %v3729
      %v3731 = vsel %vm3724, %v3730, 0.0
      %3732 = vadd.xlane.f32.xlu0 %v3731
      %v3733 = vpop.xlane.xlu0 %3732
      %v3734 = vlog2.pop %v3733
      %v3735 = vmul.f32 %v3734, 0.6931472
      %v3736 = vsub.f32 %v3728, %v3735
      %3737 = vst [vmem:[#allocation11] sm:$0x3] %v3736
    $region45: #{tpu_custom_call.1} parent=1 // pred_fallthru
      _
    // Predicated region
    $region46: #{tpu_custom_call.1} parent=1 // pred_check
      _
    $region47: #{tpu_custom_call.1} parent=1 // pred_check_branch
      %3739 = sbr.rel (0) target = $region49
    $region48: #{tpu_custom_call.1} parent=1 // pred_region
      %3741 = vsyncadd [#allocation5], 0
      %s3743 = sshll.u32 [#allocation11], 4
      %s3744 = int_to_ptr.vmem [resolvable:$true] %s3743
      %s3745 = sshll.u32 %s5, 4
      %s3746 = int_to_ptr.hbm [resolvable:$true] %s3745
      %3748 = dma.vmem_to_hbm [thread:$0]  %s3744, 32, %s3746, [#allocation5]
    $region49: #{tpu_custom_call.1} parent=1 // pred_fallthru
      _
    // Predicated region
    $region50: #{tpu_custom_call.1} parent=1 // pred_check
      _
    $region51: #{tpu_custom_call.1} parent=1 // pred_check_branch
      %3750 = sbr.rel (0) target = $region53
    $region52: #{tpu_custom_call.1} parent=1 // pred_region
      %3752 = dma.done [#allocation5], 32
    $region53: #{tpu_custom_call.1} parent=1 // pred_fallthru
      _
    %3753 = vsyncpa [#allocation4], 1
    %3754 = vsyncpa [#allocation7], 1
    %3755 = vsyncpa [#allocation10], 1
    %3756 = vsyncpa [#allocation5], 1

</llo_original>
